<compile_context>
chip_gen: v6e
topology: v6e:2x2x1
jax: 0.10.0
libtpu: 0.0.40
codegen_flags: <defaults>
</compile_context>

<pallas_src>
import math

import jax
import jax.numpy as jnp
from jax.experimental import pallas as pl
from jax.experimental.pallas import tpu as pltpu


# Logical layer sizes (PyTorch module: 784 -> 1000 -> 100 -> 100 -> 10).
IN_F = 28 * 28                       # 784
H1, H2, H3, OUT_F = 1000, 100, 100, 10

# Lane-dense (multiple-of-128) padded sizes.
IN_P = 896                           # 7 * 128 (zero-padded K for layer 1)
H1_P, H2_P, H3_P, OUT_P = 1024, 128, 128, 128

# Max rows per grid step. 512 amortizes per-step overhead over more MXU work;
# VMEM stays ~10 MiB even with double-buffered f32 x tiles.
TILE_B_MAX = 512


def _cdiv(a, b):
    return -(-a // b)


def _round_up(n, m):
    return ((n + m - 1) // m) * m


def _choose_tile_b(B):
    """Pick the batch tile.

    Large batches: a big fixed tile (512) amortizes the ~0.35us/step grid
    overhead. Small/medium batches: aim for >=2 grid steps so both of v7x's
    TensorCores get work (no effect on single-TC v5e/v6e); once a half-batch
    tile reaches 128 rows, round it to a multiple of 128 for full MXU M-tiles
    instead of a ragged M dimension.
    """
    if B >= 2 * TILE_B_MAX:
        return TILE_B_MAX
    half = _cdiv(B, 2)
    if half >= 128:
        return min(TILE_B_MAX, _round_up(half, 128))
    return _round_up(max(half, 8), 8)


def _mlp_kernel(x_ref,
                w1_ref, b1_ref,
                w2_ref, b2_ref,
                w3_ref, b3_ref,
                w4_ref, b4_ref,
                out_ref):
    """Fused relu(relu(relu(x@W1+b1)@W2+b2)@W3+b3)@W4+b4 on one batch tile.

    Weights/activations feeding the MXU are bf16; accumulation, bias-add and
    ReLU stay f32 (VPU work co-issues under the MXU pushes, and v5e has no
    bf16 VALU anyway). Intermediates h1..h3 never touch HBM.
    """
    # x arrives in its original dtype (f32): casting here avoids a separate
    # XLA cast pass over x in HBM (read f32 once instead of read f32 + write
    # bf16 + re-read bf16). The larger x DMA hides under the 4 matmuls.
    x = x_ref[...].astype(jnp.bfloat16)                                # (TB, 896)

    h1 = jnp.dot(x, w1_ref[...], preferred_element_type=jnp.float32) + b1_ref[...]
    h1 = jnp.maximum(h1, 0.0).astype(jnp.bfloat16)                     # (TB, 1024)

    h2 = jnp.dot(h1, w2_ref[...], preferred_element_type=jnp.float32) + b2_ref[...]
    h2 = jnp.maximum(h2, 0.0).astype(jnp.bfloat16)                     # (TB, 128)

    h3 = jnp.dot(h2, w3_ref[...], preferred_element_type=jnp.float32) + b3_ref[...]
    h3 = jnp.maximum(h3, 0.0).astype(jnp.bfloat16)                     # (TB, 128)

    h4 = jnp.dot(h3, w4_ref[...], preferred_element_type=jnp.float32) + b4_ref[...]
    out_ref[...] = h4.astype(out_ref.dtype)                            # (TB, 128) f32


def prepare_params(params):
    """Zero-pad weights/biases to lane-dense sizes and cast weights to bf16.

    Inputs are (in, out) f32 weights (transpose of PyTorch's Linear.weight)
    and (1, out) f32 biases. Zero padding preserves the logits exactly:
    padded K columns of x hit zero W1 rows, padded hidden units evaluate to
    relu(0 + 0) = 0, and padded output columns are sliced off in the wrapper.
    """
    (w1, b1, w2, b2, w3, b3, w4, b4) = params

    def pad2(a, rows, cols):
        return jnp.pad(a, ((0, rows - a.shape[0]), (0, cols - a.shape[1])))

    return (
        pad2(w1, IN_P, H1_P).astype(jnp.bfloat16), pad2(b1, 1, H1_P).astype(jnp.float32),
        pad2(w2, H1_P, H2_P).astype(jnp.bfloat16), pad2(b2, 1, H2_P).astype(jnp.float32),
        pad2(w3, H2_P, H3_P).astype(jnp.bfloat16), pad2(b3, 1, H3_P).astype(jnp.float32),
        pad2(w4, H3_P, OUT_P).astype(jnp.bfloat16), pad2(b4, 1, OUT_P).astype(jnp.float32),
    )


def mnist_net_forward(x, prepared_params):
    """Mirrors `x.view(-1, 784)` followed by the four Linear layers."""
    x2d = x.reshape(-1, IN_F)                 # keep original dtype; cast in-kernel
    B = x2d.shape[0]

    tile_b = _choose_tile_b(B)
    b_pad = _round_up(B, tile_b)
    # Pad batch rows to an exact grid and lane-pad K 784 -> 896 with zeros.
    x2d = jnp.pad(x2d, ((0, b_pad - B), (0, IN_P - IN_F)))

    (w1, b1, w2, b2, w3, b3, w4, b4) = prepared_params

    grid = (b_pad // tile_b,)

    def resident(shape):
        # Constant index_map -> fetched from HBM once, VMEM-resident for the
        # whole batch loop. Single-buffered: the default double-buffer would
        # allocate a useless second copy of each weight.
        return pl.BlockSpec(shape, lambda i: (0, 0), pipeline_mode=pl.Buffered(1))

    in_specs = [
        pl.BlockSpec((tile_b, IN_P), lambda i: (i, 0)),   # x: streamed, double-buffered
        resident((IN_P, H1_P)), resident((1, H1_P)),
        resident((H1_P, H2_P)), resident((1, H2_P)),
        resident((H2_P, H3_P)), resident((1, H3_P)),
        resident((H3_P, OUT_P)), resident((1, OUT_P)),
    ]
    out_spec = pl.BlockSpec((tile_b, OUT_P), lambda i: (i, 0))

    # Advisory cost hint for XLA's scheduler around the custom call.
    flops = 2 * b_pad * (IN_P * H1_P + H1_P * H2_P + H2_P * H3_P + H3_P * OUT_P)
    weight_bytes = 2 * (IN_P * H1_P + H1_P * H2_P + H2_P * H3_P + H3_P * OUT_P) \
        + 4 * (H1_P + H2_P + H3_P + OUT_P)
    bytes_accessed = weight_bytes + b_pad * IN_P * x2d.dtype.itemsize + b_pad * OUT_P * 4
    cost = pl.CostEstimate(flops=flops, transcendentals=0, bytes_accessed=bytes_accessed)

    out_padded = pl.pallas_call(
        _mlp_kernel,
        out_shape=jax.ShapeDtypeStruct((b_pad, OUT_P), jnp.float32),
        grid=grid,
        in_specs=in_specs,
        out_specs=out_spec,
        compiler_params=pltpu.CompilerParams(
            dimension_semantics=("parallel",),   # batch tiles are independent
        ),
        cost_estimate=cost,
    )(x2d, w1, b1, w2, b2, w3, b3, w4, b4)

    # Consumers that can read the padded (b_pad, 128) buffer directly may skip
    # this slice and save a small HBM pass.
    return out_padded[:B, :OUT_F]


def init_params(key):
    """PyTorch nn.Linear default init: U(-1/sqrt(fan_in), 1/sqrt(fan_in)).
    Weights stored transposed as (in_features, out_features), biases (1, out)."""
    dims = [(IN_F, H1), (H1, H2), (H2, H3), (H3, OUT_F)]
    params = []
    for (fan_in, fan_out) in dims:
        key, kw, kb = jax.random.split(key, 3)
        bound = 1.0 / math.sqrt(fan_in)
        params.append(jax.random.uniform(kw, (fan_in, fan_out), jnp.float32, -bound, bound))
        params.append(jax.random.uniform(kb, (1, fan_out), jnp.float32, -bound, bound))
    return tuple(params)


def reference_forward(x, prepared_params):
    """Plain-JAX reference with the same mixed precision as the kernel."""
    (w1, b1, w2, b2, w3, b3, w4, b4) = prepared_params
    h = x.reshape(-1, IN_F)
    h = jnp.pad(h, ((0, 0), (0, IN_P - IN_F))).astype(jnp.bfloat16)
    h = jnp.maximum(jnp.dot(h, w1, preferred_element_type=jnp.float32) + b1, 0.0)
    h = jnp.maximum(jnp.dot(h.astype(jnp.bfloat16), w2,
                            preferred_element_type=jnp.float32) + b2, 0.0)
    h = jnp.maximum(jnp.dot(h.astype(jnp.bfloat16), w3,
                            preferred_element_type=jnp.float32) + b3, 0.0)
    out = jnp.dot(h.astype(jnp.bfloat16), w4, preferred_element_type=jnp.float32) + b4
    return out[:, :OUT_F]


if __name__ == "__main__":
    key = jax.random.PRNGKey(0)
    key, kx = jax.random.split(key)

    # Small MNIST-like batch: (batch=2, channels=1, 28, 28) in NCHW.
    x = jax.random.normal(kx, (2, 1, 28, 28), jnp.float32)

    params = init_params(key)
    prepared = prepare_params(params)

    out = mnist_net_forward(x, prepared)
    out = jax.block_until_ready(out)

    ref = reference_forward(x, prepared)
    assert out.shape == (2, 10), out.shape
    # Loose-ish tolerance: MXU vs XLA bf16 accumulation order differs slightly;
    # a real kernel bug would be orders of magnitude larger.
    assert jnp.allclose(out, ref, atol=1e-2, rtol=1e-2), "mismatch vs reference"

    print("KERNEL_OK")
</pallas_src>

<mosaic_0001>
module attributes {stable_mosaic.version = 11 : i64} {
  func.func @_mlp_kernel(%arg0: i32, %arg1: memref<8x896xf32, #tpu.memory_space<vmem>>, %arg2: memref<896x1024xbf16, #tpu.memory_space<vmem>>, %arg3: memref<1x1024xf32, #tpu.memory_space<vmem>>, %arg4: memref<1024x128xbf16, #tpu.memory_space<vmem>>, %arg5: memref<1x128xf32, #tpu.memory_space<vmem>>, %arg6: memref<128x128xbf16, #tpu.memory_space<vmem>>, %arg7: memref<1x128xf32, #tpu.memory_space<vmem>>, %arg8: memref<128x128xbf16, #tpu.memory_space<vmem>>, %arg9: memref<1x128xf32, #tpu.memory_space<vmem>>, %arg10: memref<8x128xf32, #tpu.memory_space<vmem>>) attributes {dimension_semantics = [#tpu.dimension_semantics<parallel>], iteration_bounds = array<i64: 1>, scalar_prefetch = 0 : i64, scratch_operands = 0 : i64, tpu.core_type = #tpu.core_type<tc>, window_params = [{transform_indices = @transform_0, window_bounds = array<i64: 8, 896>}, {pipeline_mode = #tpu.pipeline_mode<synchronous>, transform_indices = @transform_1, window_bounds = array<i64: 896, 1024>}, {pipeline_mode = #tpu.pipeline_mode<synchronous>, transform_indices = @transform_2, window_bounds = array<i64: 1, 1024>}, {pipeline_mode = #tpu.pipeline_mode<synchronous>, transform_indices = @transform_3, window_bounds = array<i64: 1024, 128>}, {pipeline_mode = #tpu.pipeline_mode<synchronous>, transform_indices = @transform_4, window_bounds = array<i64: 1, 128>}, {pipeline_mode = #tpu.pipeline_mode<synchronous>, transform_indices = @transform_5, window_bounds = array<i64: 128, 128>}, {pipeline_mode = #tpu.pipeline_mode<synchronous>, transform_indices = @transform_6, window_bounds = array<i64: 1, 128>}, {pipeline_mode = #tpu.pipeline_mode<synchronous>, transform_indices = @transform_7, window_bounds = array<i64: 128, 128>}, {pipeline_mode = #tpu.pipeline_mode<synchronous>, transform_indices = @transform_8, window_bounds = array<i64: 1, 128>}, {transform_indices = @transform_9, window_bounds = array<i64: 8, 128>}]} {
    %c0 = arith.constant 0 : index
    %c0_0 = arith.constant 0 : index
    %0 = vector.load %arg1[%c0, %c0_0] : memref<8x896xf32, #tpu.memory_space<vmem>>, vector<8x896xf32>
    %1 = arith.truncf %0 : vector<8x896xf32> to vector<8x896xbf16>
    %c0_1 = arith.constant 0 : index
    %c0_2 = arith.constant 0 : index
    %2 = vector.load %arg2[%c0_1, %c0_2] : memref<896x1024xbf16, #tpu.memory_space<vmem>>, vector<896x1024xbf16>
    %cst = arith.constant dense<0.000000e+00> : vector<8x1024xf32>
    %3 = tpu.matmul %1, %2, %cst {dimension_numbers = #tpu.dot_dimension_numbers<[1], [0], [0], [1], [0, 0, 1, 1], [], []>} : vector<8x896xbf16>, vector<896x1024xbf16>, vector<8x1024xf32> -> vector<8x1024xf32>
    %c0_3 = arith.constant 0 : index
    %c0_4 = arith.constant 0 : index
    %4 = vector.load %arg3[%c0_3, %c0_4] : memref<1x1024xf32, #tpu.memory_space<vmem>>, vector<1x1024xf32>
    %5 = vector.broadcast %4 : vector<1x1024xf32> to vector<8x1024xf32>
    %6 = arith.addf %3, %5 : vector<8x1024xf32>
    %cst_5 = arith.constant 0.000000e+00 : f32
    %7 = vector.broadcast %cst_5 : f32 to vector<8x1024xf32>
    %8 = arith.maximumf %6, %7 : vector<8x1024xf32>
    %9 = arith.truncf %8 : vector<8x1024xf32> to vector<8x1024xbf16>
    %c0_6 = arith.constant 0 : index
    %c0_7 = arith.constant 0 : index
    %10 = vector.load %arg4[%c0_6, %c0_7] : memref<1024x128xbf16, #tpu.memory_space<vmem>>, vector<1024x128xbf16>
    %cst_8 = arith.constant dense<0.000000e+00> : vector<8x128xf32>
    %11 = tpu.matmul %9, %10, %cst_8 {dimension_numbers = #tpu.dot_dimension_numbers<[1], [0], [0], [1], [0, 0, 1, 1], [], []>} : vector<8x1024xbf16>, vector<1024x128xbf16>, vector<8x128xf32> -> vector<8x128xf32>
    %c0_9 = arith.constant 0 : index
    %c0_10 = arith.constant 0 : index
    %12 = vector.load %arg5[%c0_9, %c0_10] : memref<1x128xf32, #tpu.memory_space<vmem>>, vector<1x128xf32>
    %13 = vector.broadcast %12 : vector<1x128xf32> to vector<8x128xf32>
    %14 = arith.addf %11, %13 : vector<8x128xf32>
    %cst_11 = arith.constant 0.000000e+00 : f32
    %15 = vector.broadcast %cst_11 : f32 to vector<8x128xf32>
    %16 = arith.maximumf %14, %15 : vector<8x128xf32>
    %17 = arith.truncf %16 : vector<8x128xf32> to vector<8x128xbf16>
    %c0_12 = arith.constant 0 : index
    %c0_13 = arith.constant 0 : index
    %18 = vector.load %arg6[%c0_12, %c0_13] : memref<128x128xbf16, #tpu.memory_space<vmem>>, vector<128x128xbf16>
    %cst_14 = arith.constant dense<0.000000e+00> : vector<8x128xf32>
    %19 = tpu.matmul %17, %18, %cst_14 {dimension_numbers = #tpu.dot_dimension_numbers<[1], [0], [0], [1], [0, 0, 1, 1], [], []>} : vector<8x128xbf16>, vector<128x128xbf16>, vector<8x128xf32> -> vector<8x128xf32>
    %c0_15 = arith.constant 0 : index
    %c0_16 = arith.constant 0 : index
    %20 = vector.load %arg7[%c0_15, %c0_16] : memref<1x128xf32, #tpu.memory_space<vmem>>, vector<1x128xf32>
    %21 = vector.broadcast %20 : vector<1x128xf32> to vector<8x128xf32>
    %22 = arith.addf %19, %21 : vector<8x128xf32>
    %cst_17 = arith.constant 0.000000e+00 : f32
    %23 = vector.broadcast %cst_17 : f32 to vector<8x128xf32>
    %24 = arith.maximumf %22, %23 : vector<8x128xf32>
    %25 = arith.truncf %24 : vector<8x128xf32> to vector<8x128xbf16>
    %c0_18 = arith.constant 0 : index
    %c0_19 = arith.constant 0 : index
    %26 = vector.load %arg8[%c0_18, %c0_19] : memref<128x128xbf16, #tpu.memory_space<vmem>>, vector<128x128xbf16>
    %cst_20 = arith.constant dense<0.000000e+00> : vector<8x128xf32>
    %27 = tpu.matmul %25, %26, %cst_20 {dimension_numbers = #tpu.dot_dimension_numbers<[1], [0], [0], [1], [0, 0, 1, 1], [], []>} : vector<8x128xbf16>, vector<128x128xbf16>, vector<8x128xf32> -> vector<8x128xf32>
    %c0_21 = arith.constant 0 : index
    %c0_22 = arith.constant 0 : index
    %28 = vector.load %arg9[%c0_21, %c0_22] : memref<1x128xf32, #tpu.memory_space<vmem>>, vector<1x128xf32>
    %29 = vector.broadcast %28 : vector<1x128xf32> to vector<8x128xf32>
    %30 = arith.addf %27, %29 : vector<8x128xf32>
    %c0_23 = arith.constant 0 : index
    %c0_24 = arith.constant 0 : index
    %31 = vector.load %arg10[%c0_23, %c0_24] : memref<8x128xf32, #tpu.memory_space<vmem>>, vector<8x128xf32>
    tpu.vector_store %arg10[%c0_23, %c0_24], %30 {strides = array<i32>} : memref<8x128xf32, #tpu.memory_space<vmem>>, vector<8x128xf32>,
    return
  }
  func.func @transform_0(%arg0: i32) -> (i32, i32) {
    %c0_i32 = arith.constant 0 : i32
    %c0_i32_0 = arith.constant 0 : i32
    return %arg0, %c0_i32 : i32, i32
  }
  func.func @transform_1(%arg0: i32) -> (i32, i32) {
    %c0_i32 = arith.constant 0 : i32
    %c0_i32_0 = arith.constant 0 : i32
    %c0_i32_1 = arith.constant 0 : i32
    return %c0_i32, %c0_i32_0 : i32, i32
  }
  func.func @transform_2(%arg0: i32) -> (i32, i32) {
    %c0_i32 = arith.constant 0 : i32
    %c0_i32_0 = arith.constant 0 : i32
    %c0_i32_1 = arith.constant 0 : i32
    return %c0_i32, %c0_i32_0 : i32, i32
  }
  func.func @transform_3(%arg0: i32) -> (i32, i32) {
    %c0_i32 = arith.constant 0 : i32
    %c0_i32_0 = arith.constant 0 : i32
    %c0_i32_1 = arith.constant 0 : i32
    return %c0_i32, %c0_i32_0 : i32, i32
  }
  func.func @transform_4(%arg0: i32) -> (i32, i32) {
    %c0_i32 = arith.constant 0 : i32
    %c0_i32_0 = arith.constant 0 : i32
    %c0_i32_1 = arith.constant 0 : i32
    return %c0_i32, %c0_i32_0 : i32, i32
  }
  func.func @transform_5(%arg0: i32) -> (i32, i32) {
    %c0_i32 = arith.constant 0 : i32
    %c0_i32_0 = arith.constant 0 : i32
    %c0_i32_1 = arith.constant 0 : i32
    return %c0_i32, %c0_i32_0 : i32, i32
  }
  func.func @transform_6(%arg0: i32) -> (i32, i32) {
    %c0_i32 = arith.constant 0 : i32
    %c0_i32_0 = arith.constant 0 : i32
    %c0_i32_1 = arith.constant 0 : i32
    return %c0_i32, %c0_i32_0 : i32, i32
  }
  func.func @transform_7(%arg0: i32) -> (i32, i32) {
    %c0_i32 = arith.constant 0 : i32
    %c0_i32_0 = arith.constant 0 : i32
    %c0_i32_1 = arith.constant 0 : i32
    return %c0_i32, %c0_i32_0 : i32, i32
  }
  func.func @transform_8(%arg0: i32) -> (i32, i32) {
    %c0_i32 = arith.constant 0 : i32
    %c0_i32_0 = arith.constant 0 : i32
    %c0_i32_1 = arith.constant 0 : i32
    return %c0_i32, %c0_i32_0 : i32, i32
  }
  func.func @transform_9(%arg0: i32) -> (i32, i32) {
    %c0_i32 = arith.constant 0 : i32
    %c0_i32_0 = arith.constant 0 : i32
    return %arg0, %c0_i32 : i32, i32
  }
}

</mosaic_0001>

<llo_original>
// kernel: tpu_custom_call.1
$region0: #{tpu_custom_call.1}
  #allocation0 [shape = 'u32[]', space=smem, size = 0x4, offset = 0x4, fixed_abs, tag = 'smem constant byte address 0x4 - core index']
  #allocation1 [shape = 'u32[144,128]{1,0:T(1,128)}', space=vmem, size = 0x12000, scoped, tag = 'internal scratch']
  %s0 = inlined_call_operand.hbm [shape: f32[8,896], index: 0, kind: input, shape index: {}]
  %s1 = inlined_call_operand.hbm [shape: bf16[896,1024], index: 1, kind: input, shape index: {}]
  %s2 = inlined_call_operand.hbm [shape: f32[1,1024], index: 2, kind: input, shape index: {}]
  %s3 = inlined_call_operand.hbm [shape: bf16[1024,128], index: 3, kind: input, shape index: {}]
  %s4 = inlined_call_operand.hbm [shape: f32[1,128], index: 4, kind: input, shape index: {}]
  %s5 = inlined_call_operand.hbm [shape: bf16[128,128], index: 5, kind: input, shape index: {}]
  %s6 = inlined_call_operand.hbm [shape: f32[1,128], index: 6, kind: input, shape index: {}]
  %s7 = inlined_call_operand.hbm [shape: bf16[128,128], index: 7, kind: input, shape index: {}]
  %s8 = inlined_call_operand.hbm [shape: f32[1,128], index: 8, kind: input, shape index: {}]
  %s9 = inlined_call_operand.hbm [shape: f32[8,128], index: 9, kind: output, shape index: {}]
  %s10 = sld [smem:[#allocation0]]
  $region82: #{tpu_custom_call.1} parent=0
    _
  %s12 = ssub.s32 1, %s10
  %s13 = scalar_select 0, %s12, %s10
  $region1: #{tpu_custom_call.1} parent=0
    #allocation2 [shape = 'u8[28672]{0}', space=vmem, size = 0x7000, scoped, tag = 'input window, operand 0, single buffered']
    #allocation3 [shape = 's32[1]{0}', space=sflag, size = 0x4, scoped, tag = 'scoped memory for tpu_custom_call.1']
    #allocation4 [shape = 's32[1]{0}', space=sflag, size = 0x4, scoped, tag = 'scoped memory for tpu_custom_call.1']
    #allocation5 [shape = 'u8[1835008]{0}', space=vmem, size = 0x1c0000, scoped, tag = 'input window, operand 1, single buffered']
    #allocation6 [shape = 's32[1]{0}', space=sflag, size = 0x4, scoped, tag = 'scoped memory for tpu_custom_call.1']
    #allocation7 [shape = 'u8[4096]{0}', space=vmem, size = 0x1000, scoped, tag = 'input window, operand 2, single buffered']
    #allocation8 [shape = 'u8[262144]{0}', space=vmem, size = 0x40000, scoped, tag = 'input window, operand 3, single buffered']
    #allocation9 [shape = 's32[1]{0}', space=sflag, size = 0x4, scoped, tag = 'scoped memory for tpu_custom_call.1']
    #allocation10 [shape = 'u8[512]{0}', space=vmem, size = 0x400, scoped, tag = 'input window, operand 4, single buffered']
    #allocation11 [shape = 'u8[32768]{0}', space=vmem, size = 0x8000, scoped, tag = 'input window, operand 5, single buffered']
    #allocation12 [shape = 's32[1]{0}', space=sflag, size = 0x4, scoped, tag = 'scoped memory for tpu_custom_call.1']
    #allocation13 [shape = 'u8[512]{0}', space=vmem, size = 0x400, scoped, tag = 'input window, operand 6, single buffered']
    #allocation14 [shape = 'u8[32768]{0}', space=vmem, size = 0x8000, scoped, tag = 'input window, operand 7, single buffered']
    #allocation15 [shape = 's32[1]{0}', space=sflag, size = 0x4, scoped, tag = 'scoped memory for tpu_custom_call.1']
    #allocation16 [shape = 'u8[512]{0}', space=vmem, size = 0x400, scoped, tag = 'input window, operand 8, single buffered']
    #allocation17 [shape = 'u8[4096]{0}', space=vmem, size = 0x1000, scoped, tag = 'output window, operand 0, single buffered']
    %14 = vsyncpa [#allocation3], 0
    %15 = vsyncpa [#allocation6], 0
    %16 = vsyncpa [#allocation9], 0
    %17 = vsyncpa [#allocation12], 0
    %18 = vsyncpa [#allocation15], 0
    %19 = vsyncpa [#allocation4], 0
    // Predicated region
    $region2: #{tpu_custom_call.1} parent=1 // pred_check
      _
    $region3: #{tpu_custom_call.1} parent=1 // pred_check_branch
      %21 = sbr.rel (0) target = $region5
    $region4: #{tpu_custom_call.1} parent=1 // pred_region
      %s23 = ssub.s32 896, 896
      %24 = vsyncadd [#allocation3], %s23
      %s26 = sshll.u32 [#allocation2], 4
      %s27 = int_to_ptr.vmem [resolvable:$true] %s26
      %29 = dma.hbm_to_vmem [thread:$0]  %s0, 896, %s27, [#allocation3]
    $region5: #{tpu_custom_call.1} parent=1 // pred_fallthru
      _
    // Predicated region
    $region6: #{tpu_custom_call.1} parent=1 // pred_check
      _
    $region7: #{tpu_custom_call.1} parent=1 // pred_check_branch
      %31 = sbr.rel (0) target = $region9
    $region8: #{tpu_custom_call.1} parent=1 // pred_region
      %s33 = ssub.s32 57344, 57344
      %34 = vsyncadd [#allocation6], %s33
      %s35 = sshll.u32 [#allocation5], 4
      %s36 = int_to_ptr.vmem [resolvable:$true] %s35
      %41 = dma.hbm_to_vmem [thread:$0]  %s1, 57344, %s36, [#allocation6], 512, 512, 32
    $region9: #{tpu_custom_call.1} parent=1 // pred_fallthru
      _
    // Predicated region
    $region10: #{tpu_custom_call.1} parent=1 // pred_check
      _
    $region11: #{tpu_custom_call.1} parent=1 // pred_check_branch
      %43 = sbr.rel (0) target = $region13
    $region12: #{tpu_custom_call.1} parent=1 // pred_region
      %s45 = ssub.s32 128, 128
      %46 = vsyncadd [#allocation6], %s45
      %s48 = sshll.u32 [#allocation7], 4
      %s49 = int_to_ptr.vmem [resolvable:$true] %s48
      %51 = dma.hbm_to_vmem [thread:$0]  %s2, 128, %s49, [#allocation6]
    $region13: #{tpu_custom_call.1} parent=1 // pred_fallthru
      _
    // Predicated region
    $region14: #{tpu_custom_call.1} parent=1 // pred_check
      _
    $region15: #{tpu_custom_call.1} parent=1 // pred_check_branch
      %53 = sbr.rel (0) target = $region17
    $region16: #{tpu_custom_call.1} parent=1 // pred_region
      %s55 = ssub.s32 8192, 8192
      %56 = vsyncadd [#allocation9], %s55
      %s57 = sshll.u32 [#allocation8], 4
      %s58 = int_to_ptr.vmem [resolvable:$true] %s57
      %63 = dma.hbm_to_vmem [thread:$0]  %s3, 8192, %s58, [#allocation9], 64, 64, 4
    $region17: #{tpu_custom_call.1} parent=1 // pred_fallthru
      _
    // Predicated region
    $region18: #{tpu_custom_call.1} parent=1 // pred_check
      _
    $region19: #{tpu_custom_call.1} parent=1 // pred_check_branch
      %65 = sbr.rel (0) target = $region21
    $region20: #{tpu_custom_call.1} parent=1 // pred_region
      %s67 = ssub.s32 16, 16
      %68 = vsyncadd [#allocation9], %s67
      %s70 = sshll.u32 [#allocation10], 4
      %s71 = int_to_ptr.vmem [resolvable:$true] %s70
      %73 = dma.hbm_to_vmem [thread:$0]  %s4, 16, %s71, [#allocation9]
    $region21: #{tpu_custom_call.1} parent=1 // pred_fallthru
      _
    // Predicated region
    $region22: #{tpu_custom_call.1} parent=1 // pred_check
      _
    $region23: #{tpu_custom_call.1} parent=1 // pred_check_branch
      %75 = sbr.rel (0) target = $region25
    $region24: #{tpu_custom_call.1} parent=1 // pred_region
      %s77 = ssub.s32 1024, 1024
      %78 = vsyncadd [#allocation12], %s77
      %s79 = sshll.u32 [#allocation11], 4
      %s80 = int_to_ptr.vmem [resolvable:$true] %s79
      %85 = dma.hbm_to_vmem [thread:$0]  %s5, 1024, %s80, [#allocation12], 64, 64, 4
    $region25: #{tpu_custom_call.1} parent=1 // pred_fallthru
      _
    // Predicated region
    $region26: #{tpu_custom_call.1} parent=1 // pred_check
      _
    $region27: #{tpu_custom_call.1} parent=1 // pred_check_branch
      %87 = sbr.rel (0) target = $region29
    $region28: #{tpu_custom_call.1} parent=1 // pred_region
      %s89 = ssub.s32 16, 16
      %90 = vsyncadd [#allocation12], %s89
      %s92 = sshll.u32 [#allocation13], 4
      %s93 = int_to_ptr.vmem [resolvable:$true] %s92
      %95 = dma.hbm_to_vmem [thread:$0]  %s6, 16, %s93, [#allocation12]
    $region29: #{tpu_custom_call.1} parent=1 // pred_fallthru
      _
    // Predicated region
    $region30: #{tpu_custom_call.1} parent=1 // pred_check
      _
    $region31: #{tpu_custom_call.1} parent=1 // pred_check_branch
      %97 = sbr.rel (0) target = $region33
    $region32: #{tpu_custom_call.1} parent=1 // pred_region
      %s99 = ssub.s32 1024, 1024
      %100 = vsyncadd [#allocation15], %s99
      %s101 = sshll.u32 [#allocation14], 4
      %s102 = int_to_ptr.vmem [resolvable:$true] %s101
      %107 = dma.hbm_to_vmem [thread:$0]  %s7, 1024, %s102, [#allocation15], 64, 64, 4
    $region33: #{tpu_custom_call.1} parent=1 // pred_fallthru
      _
    // Predicated region
    $region34: #{tpu_custom_call.1} parent=1 // pred_check
      _
    $region35: #{tpu_custom_call.1} parent=1 // pred_check_branch
      %109 = sbr.rel (0) target = $region37
    $region36: #{tpu_custom_call.1} parent=1 // pred_region
      %s111 = ssub.s32 16, 16
      %112 = vsyncadd [#allocation15], %s111
      %s114 = sshll.u32 [#allocation16], 4
      %s115 = int_to_ptr.vmem [resolvable:$true] %s114
      %117 = dma.hbm_to_vmem [thread:$0]  %s8, 16, %s115, [#allocation15]
    $region37: #{tpu_custom_call.1} parent=1 // pred_fallthru
      _
    // Predicated region
    $region38: #{tpu_custom_call.1} parent=1 // pred_check
      _
    $region39: #{tpu_custom_call.1} parent=1 // pred_check_branch
      %119 = sbr.rel (0) target = $region41
    $region40: #{tpu_custom_call.1} parent=1 // pred_region
      %120 = dma.done [#allocation3], 896
    $region41: #{tpu_custom_call.1} parent=1 // pred_fallthru
      _
    // Predicated region
    $region42: #{tpu_custom_call.1} parent=1 // pred_check
      _
    $region43: #{tpu_custom_call.1} parent=1 // pred_check_branch
      %122 = sbr.rel (0) target = $region45
    $region44: #{tpu_custom_call.1} parent=1 // pred_region
      %123 = dma.done [#allocation6], 57344
    $region45: #{tpu_custom_call.1} parent=1 // pred_fallthru
      _
    // Predicated region
    $region46: #{tpu_custom_call.1} parent=1 // pred_check
      _
    $region47: #{tpu_custom_call.1} parent=1 // pred_check_branch
      %125 = sbr.rel (0) target = $region49
    $region48: #{tpu_custom_call.1} parent=1 // pred_region
      %126 = dma.done [#allocation6], 128
    $region49: #{tpu_custom_call.1} parent=1 // pred_fallthru
      _
    // Predicated region
    $region50: #{tpu_custom_call.1} parent=1 // pred_check
      _
    $region51: #{tpu_custom_call.1} parent=1 // pred_check_branch
      %128 = sbr.rel (0) target = $region53
    $region52: #{tpu_custom_call.1} parent=1 // pred_region
      %129 = dma.done [#allocation9], 8192
    $region53: #{tpu_custom_call.1} parent=1 // pred_fallthru
      _
    // Predicated region
    $region54: #{tpu_custom_call.1} parent=1 // pred_check
      _
    $region55: #{tpu_custom_call.1} parent=1 // pred_check_branch
      %131 = sbr.rel (0) target = $region57
    $region56: #{tpu_custom_call.1} parent=1 // pred_region
      %132 = dma.done [#allocation9], 16
    $region57: #{tpu_custom_call.1} parent=1 // pred_fallthru
      _
    // Predicated region
    $region58: #{tpu_custom_call.1} parent=1 // pred_check
      _
    $region59: #{tpu_custom_call.1} parent=1 // pred_check_branch
      %134 = sbr.rel (0) target = $region61
    $region60: #{tpu_custom_call.1} parent=1 // pred_region
      %135 = dma.done [#allocation12], 1024
    $region61: #{tpu_custom_call.1} parent=1 // pred_fallthru
      _
    // Predicated region
    $region62: #{tpu_custom_call.1} parent=1 // pred_check
      _
    $region63: #{tpu_custom_call.1} parent=1 // pred_check_branch
      %137 = sbr.rel (0) target = $region65
    $region64: #{tpu_custom_call.1} parent=1 // pred_region
      %138 = dma.done [#allocation12], 16
    $region65: #{tpu_custom_call.1} parent=1 // pred_fallthru
      _
    // Predicated region
    $region66: #{tpu_custom_call.1} parent=1 // pred_check
      _
    $region67: #{tpu_custom_call.1} parent=1 // pred_check_branch
      %140 = sbr.rel (0) target = $region69
    $region68: #{tpu_custom_call.1} parent=1 // pred_region
      %141 = dma.done [#allocation15], 1024
    $region69: #{tpu_custom_call.1} parent=1 // pred_fallthru
      _
    // Predicated region
    $region70: #{tpu_custom_call.1} parent=1 // pred_check
      _
    $region71: #{tpu_custom_call.1} parent=1 // pred_check_branch
      %143 = sbr.rel (0) target = $region73
    $region72: #{tpu_custom_call.1} parent=1 // pred_region
      %144 = dma.done [#allocation15], 16
    $region73: #{tpu_custom_call.1} parent=1 // pred_fallthru
      _
    %v146 = vld [vmem:[#allocation2] sm:$0xff]
    %v147 = vld [vmem:[#allocation2 + $0x8] sm:$0xff]
    %v148 = vld [vmem:[#allocation2 + $0x10] sm:$0xff]
    %v149 = vld [vmem:[#allocation2 + $0x18] sm:$0xff]
    %v150 = vld [vmem:[#allocation2 + $0x20] sm:$0xff]
    %v151 = vld [vmem:[#allocation2 + $0x28] sm:$0xff]
    %v152 = vld [vmem:[#allocation2 + $0x30] sm:$0xff]
    %v153 = vpack.c.bf16 %v146, %v146
    %v154 = vpack.c.bf16 %v147, %v147
    %v155 = vpack.c.bf16 %v148, %v148
    %v156 = vpack.c.bf16 %v149, %v149
    %v157 = vpack.c.bf16 %v150, %v150
    %v158 = vpack.c.bf16 %v151, %v151
    %v159 = vpack.c.bf16 %v152, %v152
    %v160 = vld [vmem:[#allocation5] sm:$0xff]
    %v161 = vld [vmem:[#allocation5 + $0x8] sm:$0xff]
    %v162 = vld [vmem:[#allocation5 + $0x10] sm:$0xff]
    %v163 = vld [vmem:[#allocation5 + $0x18] sm:$0xff]
    %v164 = vld [vmem:[#allocation5 + $0x20] sm:$0xff]
    %v165 = vld [vmem:[#allocation5 + $0x28] sm:$0xff]
    %v166 = vld [vmem:[#allocation5 + $0x30] sm:$0xff]
    %v167 = vld [vmem:[#allocation5 + $0x38] sm:$0xff]
    %v168 = vld [vmem:[#allocation5 + $0x40] sm:$0xff]
    %v169 = vld [vmem:[#allocation5 + $0x48] sm:$0xff]
    %v170 = vld [vmem:[#allocation5 + $0x50] sm:$0xff]
    %v171 = vld [vmem:[#allocation5 + $0x58] sm:$0xff]
    %v172 = vld [vmem:[#allocation5 + $0x60] sm:$0xff]
    %v173 = vld [vmem:[#allocation5 + $0x68] sm:$0xff]
    %v174 = vld [vmem:[#allocation5 + $0x70] sm:$0xff]
    %v175 = vld [vmem:[#allocation5 + $0x78] sm:$0xff]
    %v176 = vld [vmem:[#allocation5 + $0x80] sm:$0xff]
    %v177 = vld [vmem:[#allocation5 + $0x88] sm:$0xff]
    %v178 = vld [vmem:[#allocation5 + $0x90] sm:$0xff]
    %v179 = vld [vmem:[#allocation5 + $0x98] sm:$0xff]
    %v180 = vld [vmem:[#allocation5 + $0xa0] sm:$0xff]
    %v181 = vld [vmem:[#allocation5 + $0xa8] sm:$0xff]
    %v182 = vld [vmem:[#allocation5 + $0xb0] sm:$0xff]
    %v183 = vld [vmem:[#allocation5 + $0xb8] sm:$0xff]
    %v184 = vld [vmem:[#allocation5 + $0xc0] sm:$0xff]
    %v185 = vld [vmem:[#allocation5 + $0xc8] sm:$0xff]
    %v186 = vld [vmem:[#allocation5 + $0xd0] sm:$0xff]
    %v187 = vld [vmem:[#allocation5 + $0xd8] sm:$0xff]
    %v188 = vld [vmem:[#allocation5 + $0xe0] sm:$0xff]
    %v189 = vld [vmem:[#allocation5 + $0xe8] sm:$0xff]
    %v190 = vld [vmem:[#allocation5 + $0xf0] sm:$0xff]
    %v191 = vld [vmem:[#allocation5 + $0xf8] sm:$0xff]
    %v192 = vld [vmem:[#allocation5 + $0x100] sm:$0xff]
    %v193 = vld [vmem:[#allocation5 + $0x108] sm:$0xff]
    %v194 = vld [vmem:[#allocation5 + $0x110] sm:$0xff]
    %v195 = vld [vmem:[#allocation5 + $0x118] sm:$0xff]
    %v196 = vld [vmem:[#allocation5 + $0x120] sm:$0xff]
    %v197 = vld [vmem:[#allocation5 + $0x128] sm:$0xff]
    %v198 = vld [vmem:[#allocation5 + $0x130] sm:$0xff]
    %v199 = vld [vmem:[#allocation5 + $0x138] sm:$0xff]
    %v200 = vld [vmem:[#allocation5 + $0x140] sm:$0xff]
    %v201 = vld [vmem:[#allocation5 + $0x148] sm:$0xff]
    %v202 = vld [vmem:[#allocation5 + $0x150] sm:$0xff]
    %v203 = vld [vmem:[#allocation5 + $0x158] sm:$0xff]
    %v204 = vld [vmem:[#allocation5 + $0x160] sm:$0xff]
    %v205 = vld [vmem:[#allocation5 + $0x168] sm:$0xff]
    %v206 = vld [vmem:[#allocation5 + $0x170] sm:$0xff]
    %v207 = vld [vmem:[#allocation5 + $0x178] sm:$0xff]
    %v208 = vld [vmem:[#allocation5 + $0x180] sm:$0xff]
    %v209 = vld [vmem:[#allocation5 + $0x188] sm:$0xff]
    %v210 = vld [vmem:[#allocation5 + $0x190] sm:$0xff]
    %v211 = vld [vmem:[#allocation5 + $0x198] sm:$0xff]
    %v212 = vld [vmem:[#allocation5 + $0x1a0] sm:$0xff]
    %v213 = vld [vmem:[#allocation5 + $0x1a8] sm:$0xff]
    %v214 = vld [vmem:[#allocation5 + $0x1b0] sm:$0xff]
    %v215 = vld [vmem:[#allocation5 + $0x1b8] sm:$0xff]
    %v216 = vld [vmem:[#allocation5 + $0x1c0] sm:$0xff]
    %v217 = vld [vmem:[#allocation5 + $0x1c8] sm:$0xff]
    %v218 = vld [vmem:[#allocation5 + $0x1d0] sm:$0xff]
    %v219 = vld [vmem:[#allocation5 + $0x1d8] sm:$0xff]
    %v220 = vld [vmem:[#allocation5 + $0x1e0] sm:$0xff]
    %v221 = vld [vmem:[#allocation5 + $0x1e8] sm:$0xff]
    %v222 = vld [vmem:[#allocation5 + $0x1f0] sm:$0xff]
    %v223 = vld [vmem:[#allocation5 + $0x1f8] sm:$0xff]
    %v224 = vld [vmem:[#allocation5 + $0x200] sm:$0xff]
    %v225 = vld [vmem:[#allocation5 + $0x208] sm:$0xff]
    %v226 = vld [vmem:[#allocation5 + $0x210] sm:$0xff]
    %v227 = vld [vmem:[#allocation5 + $0x218] sm:$0xff]
    %v228 = vld [vmem:[#allocation5 + $0x220] sm:$0xff]
    %v229 = vld [vmem:[#allocation5 + $0x228] sm:$0xff]
    %v230 = vld [vmem:[#allocation5 + $0x230] sm:$0xff]
    %v231 = vld [vmem:[#allocation5 + $0x238] sm:$0xff]
    %v232 = vld [vmem:[#allocation5 + $0x240] sm:$0xff]
    %v233 = vld [vmem:[#allocation5 + $0x248] sm:$0xff]
    %v234 = vld [vmem:[#allocation5 + $0x250] sm:$0xff]
    %v235 = vld [vmem:[#allocation5 + $0x258] sm:$0xff]
    %v236 = vld [vmem:[#allocation5 + $0x260] sm:$0xff]
    %v237 = vld [vmem:[#allocation5 + $0x268] sm:$0xff]
    %v238 = vld [vmem:[#allocation5 + $0x270] sm:$0xff]
    %v239 = vld [vmem:[#allocation5 + $0x278] sm:$0xff]
    %v240 = vld [vmem:[#allocation5 + $0x280] sm:$0xff]
    %v241 = vld [vmem:[#allocation5 + $0x288] sm:$0xff]
    %v242 = vld [vmem:[#allocation5 + $0x290] sm:$0xff]
    %v243 = vld [vmem:[#allocation5 + $0x298] sm:$0xff]
    %v244 = vld [vmem:[#allocation5 + $0x2a0] sm:$0xff]
    %v245 = vld [vmem:[#allocation5 + $0x2a8] sm:$0xff]
    %v246 = vld [vmem:[#allocation5 + $0x2b0] sm:$0xff]
    %v247 = vld [vmem:[#allocation5 + $0x2b8] sm:$0xff]
    %v248 = vld [vmem:[#allocation5 + $0x2c0] sm:$0xff]
    %v249 = vld [vmem:[#allocation5 + $0x2c8] sm:$0xff]
    %v250 = vld [vmem:[#allocation5 + $0x2d0] sm:$0xff]
    %v251 = vld [vmem:[#allocation5 + $0x2d8] sm:$0xff]
    %v252 = vld [vmem:[#allocation5 + $0x2e0] sm:$0xff]
    %v253 = vld [vmem:[#allocation5 + $0x2e8] sm:$0xff]
    %v254 = vld [vmem:[#allocation5 + $0x2f0] sm:$0xff]
    %v255 = vld [vmem:[#allocation5 + $0x2f8] sm:$0xff]
    %v256 = vld [vmem:[#allocation5 + $0x300] sm:$0xff]
    %v257 = vld [vmem:[#allocation5 + $0x308] sm:$0xff]
    %v258 = vld [vmem:[#allocation5 + $0x310] sm:$0xff]
    %v259 = vld [vmem:[#allocation5 + $0x318] sm:$0xff]
    %v260 = vld [vmem:[#allocation5 + $0x320] sm:$0xff]
    %v261 = vld [vmem:[#allocation5 + $0x328] sm:$0xff]
    %v262 = vld [vmem:[#allocation5 + $0x330] sm:$0xff]
    %v263 = vld [vmem:[#allocation5 + $0x338] sm:$0xff]
    %v264 = vld [vmem:[#allocation5 + $0x340] sm:$0xff]
    %v265 = vld [vmem:[#allocation5 + $0x348] sm:$0xff]
    %v266 = vld [vmem:[#allocation5 + $0x350] sm:$0xff]
    %v267 = vld [vmem:[#allocation5 + $0x358] sm:$0xff]
    %v268 = vld [vmem:[#allocation5 + $0x360] sm:$0xff]
    %v269 = vld [vmem:[#allocation5 + $0x368] sm:$0xff]
    %v270 = vld [vmem:[#allocation5 + $0x370] sm:$0xff]
    %v271 = vld [vmem:[#allocation5 + $0x378] sm:$0xff]
    %v272 = vld [vmem:[#allocation5 + $0x380] sm:$0xff]
    %v273 = vld [vmem:[#allocation5 + $0x388] sm:$0xff]
    %v274 = vld [vmem:[#allocation5 + $0x390] sm:$0xff]
    %v275 = vld [vmem:[#allocation5 + $0x398] sm:$0xff]
    %v276 = vld [vmem:[#allocation5 + $0x3a0] sm:$0xff]
    %v277 = vld [vmem:[#allocation5 + $0x3a8] sm:$0xff]
    %v278 = vld [vmem:[#allocation5 + $0x3b0] sm:$0xff]
    %v279 = vld [vmem:[#allocation5 + $0x3b8] sm:$0xff]
    %v280 = vld [vmem:[#allocation5 + $0x3c0] sm:$0xff]
    %v281 = vld [vmem:[#allocation5 + $0x3c8] sm:$0xff]
    %v282 = vld [vmem:[#allocation5 + $0x3d0] sm:$0xff]
    %v283 = vld [vmem:[#allocation5 + $0x3d8] sm:$0xff]
    %v284 = vld [vmem:[#allocation5 + $0x3e0] sm:$0xff]
    %v285 = vld [vmem:[#allocation5 + $0x3e8] sm:$0xff]
    %v286 = vld [vmem:[#allocation5 + $0x3f0] sm:$0xff]
    %v287 = vld [vmem:[#allocation5 + $0x3f8] sm:$0xff]
    %v288 = vld [vmem:[#allocation5 + $0x400] sm:$0xff]
    %v289 = vld [vmem:[#allocation5 + $0x408] sm:$0xff]
    %v290 = vld [vmem:[#allocation5 + $0x410] sm:$0xff]
    %v291 = vld [vmem:[#allocation5 + $0x418] sm:$0xff]
    %v292 = vld [vmem:[#allocation5 + $0x420] sm:$0xff]
    %v293 = vld [vmem:[#allocation5 + $0x428] sm:$0xff]
    %v294 = vld [vmem:[#allocation5 + $0x430] sm:$0xff]
    %v295 = vld [vmem:[#allocation5 + $0x438] sm:$0xff]
    %v296 = vld [vmem:[#allocation5 + $0x440] sm:$0xff]
    %v297 = vld [vmem:[#allocation5 + $0x448] sm:$0xff]
    %v298 = vld [vmem:[#allocation5 + $0x450] sm:$0xff]
    %v299 = vld [vmem:[#allocation5 + $0x458] sm:$0xff]
    %v300 = vld [vmem:[#allocation5 + $0x460] sm:$0xff]
    %v301 = vld [vmem:[#allocation5 + $0x468] sm:$0xff]
    %v302 = vld [vmem:[#allocation5 + $0x470] sm:$0xff]
    %v303 = vld [vmem:[#allocation5 + $0x478] sm:$0xff]
    %v304 = vld [vmem:[#allocation5 + $0x480] sm:$0xff]
    %v305 = vld [vmem:[#allocation5 + $0x488] sm:$0xff]
    %v306 = vld [vmem:[#allocation5 + $0x490] sm:$0xff]
    %v307 = vld [vmem:[#allocation5 + $0x498] sm:$0xff]
    %v308 = vld [vmem:[#allocation5 + $0x4a0] sm:$0xff]
    %v309 = vld [vmem:[#allocation5 + $0x4a8] sm:$0xff]
    %v310 = vld [vmem:[#allocation5 + $0x4b0] sm:$0xff]
    %v311 = vld [vmem:[#allocation5 + $0x4b8] sm:$0xff]
    %v312 = vld [vmem:[#allocation5 + $0x4c0] sm:$0xff]
    %v313 = vld [vmem:[#allocation5 + $0x4c8] sm:$0xff]
    %v314 = vld [vmem:[#allocation5 + $0x4d0] sm:$0xff]
    %v315 = vld [vmem:[#allocation5 + $0x4d8] sm:$0xff]
    %v316 = vld [vmem:[#allocation5 + $0x4e0] sm:$0xff]
    %v317 = vld [vmem:[#allocation5 + $0x4e8] sm:$0xff]
    %v318 = vld [vmem:[#allocation5 + $0x4f0] sm:$0xff]
    %v319 = vld [vmem:[#allocation5 + $0x4f8] sm:$0xff]
    %v320 = vld [vmem:[#allocation5 + $0x500] sm:$0xff]
    %v321 = vld [vmem:[#allocation5 + $0x508] sm:$0xff]
    %v322 = vld [vmem:[#allocation5 + $0x510] sm:$0xff]
    %v323 = vld [vmem:[#allocation5 + $0x518] sm:$0xff]
    %v324 = vld [vmem:[#allocation5 + $0x520] sm:$0xff]
    %v325 = vld [vmem:[#allocation5 + $0x528] sm:$0xff]
    %v326 = vld [vmem:[#allocation5 + $0x530] sm:$0xff]
    %v327 = vld [vmem:[#allocation5 + $0x538] sm:$0xff]
    %v328 = vld [vmem:[#allocation5 + $0x540] sm:$0xff]
    %v329 = vld [vmem:[#allocation5 + $0x548] sm:$0xff]
    %v330 = vld [vmem:[#allocation5 + $0x550] sm:$0xff]
    %v331 = vld [vmem:[#allocation5 + $0x558] sm:$0xff]
    %v332 = vld [vmem:[#allocation5 + $0x560] sm:$0xff]
    %v333 = vld [vmem:[#allocation5 + $0x568] sm:$0xff]
    %v334 = vld [vmem:[#allocation5 + $0x570] sm:$0xff]
    %v335 = vld [vmem:[#allocation5 + $0x578] sm:$0xff]
    %v336 = vld [vmem:[#allocation5 + $0x580] sm:$0xff]
    %v337 = vld [vmem:[#allocation5 + $0x588] sm:$0xff]
    %v338 = vld [vmem:[#allocation5 + $0x590] sm:$0xff]
    %v339 = vld [vmem:[#allocation5 + $0x598] sm:$0xff]
    %v340 = vld [vmem:[#allocation5 + $0x5a0] sm:$0xff]
    %v341 = vld [vmem:[#allocation5 + $0x5a8] sm:$0xff]
    %v342 = vld [vmem:[#allocation5 + $0x5b0] sm:$0xff]
    %v343 = vld [vmem:[#allocation5 + $0x5b8] sm:$0xff]
    %v344 = vld [vmem:[#allocation5 + $0x5c0] sm:$0xff]
    %v345 = vld [vmem:[#allocation5 + $0x5c8] sm:$0xff]
    %v346 = vld [vmem:[#allocation5 + $0x5d0] sm:$0xff]
    %v347 = vld [vmem:[#allocation5 + $0x5d8] sm:$0xff]
    %v348 = vld [vmem:[#allocation5 + $0x5e0] sm:$0xff]
    %v349 = vld [vmem:[#allocation5 + $0x5e8] sm:$0xff]
    %v350 = vld [vmem:[#allocation5 + $0x5f0] sm:$0xff]
    %v351 = vld [vmem:[#allocation5 + $0x5f8] sm:$0xff]
    %v352 = vld [vmem:[#allocation5 + $0x600] sm:$0xff]
    %v353 = vld [vmem:[#allocation5 + $0x608] sm:$0xff]
    %v354 = vld [vmem:[#allocation5 + $0x610] sm:$0xff]
    %v355 = vld [vmem:[#allocation5 + $0x618] sm:$0xff]
    %v356 = vld [vmem:[#allocation5 + $0x620] sm:$0xff]
    %v357 = vld [vmem:[#allocation5 + $0x628] sm:$0xff]
    %v358 = vld [vmem:[#allocation5 + $0x630] sm:$0xff]
    %v359 = vld [vmem:[#allocation5 + $0x638] sm:$0xff]
    %v360 = vld [vmem:[#allocation5 + $0x640] sm:$0xff]
    %v361 = vld [vmem:[#allocation5 + $0x648] sm:$0xff]
    %v362 = vld [vmem:[#allocation5 + $0x650] sm:$0xff]
    %v363 = vld [vmem:[#allocation5 + $0x658] sm:$0xff]
    %v364 = vld [vmem:[#allocation5 + $0x660] sm:$0xff]
    %v365 = vld [vmem:[#allocation5 + $0x668] sm:$0xff]
    %v366 = vld [vmem:[#allocation5 + $0x670] sm:$0xff]
    %v367 = vld [vmem:[#allocation5 + $0x678] sm:$0xff]
    %v368 = vld [vmem:[#allocation5 + $0x680] sm:$0xff]
    %v369 = vld [vmem:[#allocation5 + $0x688] sm:$0xff]
    %v370 = vld [vmem:[#allocation5 + $0x690] sm:$0xff]
    %v371 = vld [vmem:[#allocation5 + $0x698] sm:$0xff]
    %v372 = vld [vmem:[#allocation5 + $0x6a0] sm:$0xff]
    %v373 = vld [vmem:[#allocation5 + $0x6a8] sm:$0xff]
    %v374 = vld [vmem:[#allocation5 + $0x6b0] sm:$0xff]
    %v375 = vld [vmem:[#allocation5 + $0x6b8] sm:$0xff]
    %v376 = vld [vmem:[#allocation5 + $0x6c0] sm:$0xff]
    %v377 = vld [vmem:[#allocation5 + $0x6c8] sm:$0xff]
    %v378 = vld [vmem:[#allocation5 + $0x6d0] sm:$0xff]
    %v379 = vld [vmem:[#allocation5 + $0x6d8] sm:$0xff]
    %v380 = vld [vmem:[#allocation5 + $0x6e0] sm:$0xff]
    %v381 = vld [vmem:[#allocation5 + $0x6e8] sm:$0xff]
    %v382 = vld [vmem:[#allocation5 + $0x6f0] sm:$0xff]
    %v383 = vld [vmem:[#allocation5 + $0x6f8] sm:$0xff]
    %v384 = vld [vmem:[#allocation5 + $0x700] sm:$0xff]
    %v385 = vld [vmem:[#allocation5 + $0x708] sm:$0xff]
    %v386 = vld [vmem:[#allocation5 + $0x710] sm:$0xff]
    %v387 = vld [vmem:[#allocation5 + $0x718] sm:$0xff]
    %v388 = vld [vmem:[#allocation5 + $0x720] sm:$0xff]
    %v389 = vld [vmem:[#allocation5 + $0x728] sm:$0xff]
    %v390 = vld [vmem:[#allocation5 + $0x730] sm:$0xff]
    %v391 = vld [vmem:[#allocation5 + $0x738] sm:$0xff]
    %v392 = vld [vmem:[#allocation5 + $0x740] sm:$0xff]
    %v393 = vld [vmem:[#allocation5 + $0x748] sm:$0xff]
    %v394 = vld [vmem:[#allocation5 + $0x750] sm:$0xff]
    %v395 = vld [vmem:[#allocation5 + $0x758] sm:$0xff]
    %v396 = vld [vmem:[#allocation5 + $0x760] sm:$0xff]
    %v397 = vld [vmem:[#allocation5 + $0x768] sm:$0xff]
    %v398 = vld [vmem:[#allocation5 + $0x770] sm:$0xff]
    %v399 = vld [vmem:[#allocation5 + $0x778] sm:$0xff]
    %v400 = vld [vmem:[#allocation5 + $0x780] sm:$0xff]
    %v401 = vld [vmem:[#allocation5 + $0x788] sm:$0xff]
    %v402 = vld [vmem:[#allocation5 + $0x790] sm:$0xff]
    %v403 = vld [vmem:[#allocation5 + $0x798] sm:$0xff]
    %v404 = vld [vmem:[#allocation5 + $0x7a0] sm:$0xff]
    %v405 = vld [vmem:[#allocation5 + $0x7a8] sm:$0xff]
    %v406 = vld [vmem:[#allocation5 + $0x7b0] sm:$0xff]
    %v407 = vld [vmem:[#allocation5 + $0x7b8] sm:$0xff]
    %v408 = vld [vmem:[#allocation5 + $0x7c0] sm:$0xff]
    %v409 = vld [vmem:[#allocation5 + $0x7c8] sm:$0xff]
    %v410 = vld [vmem:[#allocation5 + $0x7d0] sm:$0xff]
    %v411 = vld [vmem:[#allocation5 + $0x7d8] sm:$0xff]
    %v412 = vld [vmem:[#allocation5 + $0x7e0] sm:$0xff]
    %v413 = vld [vmem:[#allocation5 + $0x7e8] sm:$0xff]
    %v414 = vld [vmem:[#allocation5 + $0x7f0] sm:$0xff]
    %v415 = vld [vmem:[#allocation5 + $0x7f8] sm:$0xff]
    %v416 = vld [vmem:[#allocation5 + $0x800] sm:$0xff]
    %v417 = vld [vmem:[#allocation5 + $0x808] sm:$0xff]
    %v418 = vld [vmem:[#allocation5 + $0x810] sm:$0xff]
    %v419 = vld [vmem:[#allocation5 + $0x818] sm:$0xff]
    %v420 = vld [vmem:[#allocation5 + $0x820] sm:$0xff]
    %v421 = vld [vmem:[#allocation5 + $0x828] sm:$0xff]
    %v422 = vld [vmem:[#allocation5 + $0x830] sm:$0xff]
    %v423 = vld [vmem:[#allocation5 + $0x838] sm:$0xff]
    %v424 = vld [vmem:[#allocation5 + $0x840] sm:$0xff]
    %v425 = vld [vmem:[#allocation5 + $0x848] sm:$0xff]
    %v426 = vld [vmem:[#allocation5 + $0x850] sm:$0xff]
    %v427 = vld [vmem:[#allocation5 + $0x858] sm:$0xff]
    %v428 = vld [vmem:[#allocation5 + $0x860] sm:$0xff]
    %v429 = vld [vmem:[#allocation5 + $0x868] sm:$0xff]
    %v430 = vld [vmem:[#allocation5 + $0x870] sm:$0xff]
    %v431 = vld [vmem:[#allocation5 + $0x878] sm:$0xff]
    %v432 = vld [vmem:[#allocation5 + $0x880] sm:$0xff]
    %v433 = vld [vmem:[#allocation5 + $0x888] sm:$0xff]
    %v434 = vld [vmem:[#allocation5 + $0x890] sm:$0xff]
    %v435 = vld [vmem:[#allocation5 + $0x898] sm:$0xff]
    %v436 = vld [vmem:[#allocation5 + $0x8a0] sm:$0xff]
    %v437 = vld [vmem:[#allocation5 + $0x8a8] sm:$0xff]
    %v438 = vld [vmem:[#allocation5 + $0x8b0] sm:$0xff]
    %v439 = vld [vmem:[#allocation5 + $0x8b8] sm:$0xff]
    %v440 = vld [vmem:[#allocation5 + $0x8c0] sm:$0xff]
    %v441 = vld [vmem:[#allocation5 + $0x8c8] sm:$0xff]
    %v442 = vld [vmem:[#allocation5 + $0x8d0] sm:$0xff]
    %v443 = vld [vmem:[#allocation5 + $0x8d8] sm:$0xff]
    %v444 = vld [vmem:[#allocation5 + $0x8e0] sm:$0xff]
    %v445 = vld [vmem:[#allocation5 + $0x8e8] sm:$0xff]
    %v446 = vld [vmem:[#allocation5 + $0x8f0] sm:$0xff]
    %v447 = vld [vmem:[#allocation5 + $0x8f8] sm:$0xff]
    %v448 = vld [vmem:[#allocation5 + $0x900] sm:$0xff]
    %v449 = vld [vmem:[#allocation5 + $0x908] sm:$0xff]
    %v450 = vld [vmem:[#allocation5 + $0x910] sm:$0xff]
    %v451 = vld [vmem:[#allocation5 + $0x918] sm:$0xff]
    %v452 = vld [vmem:[#allocation5 + $0x920] sm:$0xff]
    %v453 = vld [vmem:[#allocation5 + $0x928] sm:$0xff]
    %v454 = vld [vmem:[#allocation5 + $0x930] sm:$0xff]
    %v455 = vld [vmem:[#allocation5 + $0x938] sm:$0xff]
    %v456 = vld [vmem:[#allocation5 + $0x940] sm:$0xff]
    %v457 = vld [vmem:[#allocation5 + $0x948] sm:$0xff]
    %v458 = vld [vmem:[#allocation5 + $0x950] sm:$0xff]
    %v459 = vld [vmem:[#allocation5 + $0x958] sm:$0xff]
    %v460 = vld [vmem:[#allocation5 + $0x960] sm:$0xff]
    %v461 = vld [vmem:[#allocation5 + $0x968] sm:$0xff]
    %v462 = vld [vmem:[#allocation5 + $0x970] sm:$0xff]
    %v463 = vld [vmem:[#allocation5 + $0x978] sm:$0xff]
    %v464 = vld [vmem:[#allocation5 + $0x980] sm:$0xff]
    %v465 = vld [vmem:[#allocation5 + $0x988] sm:$0xff]
    %v466 = vld [vmem:[#allocation5 + $0x990] sm:$0xff]
    %v467 = vld [vmem:[#allocation5 + $0x998] sm:$0xff]
    %v468 = vld [vmem:[#allocation5 + $0x9a0] sm:$0xff]
    %v469 = vld [vmem:[#allocation5 + $0x9a8] sm:$0xff]
    %v470 = vld [vmem:[#allocation5 + $0x9b0] sm:$0xff]
    %v471 = vld [vmem:[#allocation5 + $0x9b8] sm:$0xff]
    %v472 = vld [vmem:[#allocation5 + $0x9c0] sm:$0xff]
    %v473 = vld [vmem:[#allocation5 + $0x9c8] sm:$0xff]
    %v474 = vld [vmem:[#allocation5 + $0x9d0] sm:$0xff]
    %v475 = vld [vmem:[#allocation5 + $0x9d8] sm:$0xff]
    %v476 = vld [vmem:[#allocation5 + $0x9e0] sm:$0xff]
    %v477 = vld [vmem:[#allocation5 + $0x9e8] sm:$0xff]
    %v478 = vld [vmem:[#allocation5 + $0x9f0] sm:$0xff]
    %v479 = vld [vmem:[#allocation5 + $0x9f8] sm:$0xff]
    %v480 = vld [vmem:[#allocation5 + $0xa00] sm:$0xff]
    %v481 = vld [vmem:[#allocation5 + $0xa08] sm:$0xff]
    %v482 = vld [vmem:[#allocation5 + $0xa10] sm:$0xff]
    %v483 = vld [vmem:[#allocation5 + $0xa18] sm:$0xff]
    %v484 = vld [vmem:[#allocation5 + $0xa20] sm:$0xff]
    %v485 = vld [vmem:[#allocation5 + $0xa28] sm:$0xff]
    %v486 = vld [vmem:[#allocation5 + $0xa30] sm:$0xff]
    %v487 = vld [vmem:[#allocation5 + $0xa38] sm:$0xff]
    %v488 = vld [vmem:[#allocation5 + $0xa40] sm:$0xff]
    %v489 = vld [vmem:[#allocation5 + $0xa48] sm:$0xff]
    %v490 = vld [vmem:[#allocation5 + $0xa50] sm:$0xff]
    %v491 = vld [vmem:[#allocation5 + $0xa58] sm:$0xff]
    %v492 = vld [vmem:[#allocation5 + $0xa60] sm:$0xff]
    %v493 = vld [vmem:[#allocation5 + $0xa68] sm:$0xff]
    %v494 = vld [vmem:[#allocation5 + $0xa70] sm:$0xff]
    %v495 = vld [vmem:[#allocation5 + $0xa78] sm:$0xff]
    %v496 = vld [vmem:[#allocation5 + $0xa80] sm:$0xff]
    %v497 = vld [vmem:[#allocation5 + $0xa88] sm:$0xff]
    %v498 = vld [vmem:[#allocation5 + $0xa90] sm:$0xff]
    %v499 = vld [vmem:[#allocation5 + $0xa98] sm:$0xff]
    %v500 = vld [vmem:[#allocation5 + $0xaa0] sm:$0xff]
    %v501 = vld [vmem:[#allocation5 + $0xaa8] sm:$0xff]
    %v502 = vld [vmem:[#allocation5 + $0xab0] sm:$0xff]
    %v503 = vld [vmem:[#allocation5 + $0xab8] sm:$0xff]
    %v504 = vld [vmem:[#allocation5 + $0xac0] sm:$0xff]
    %v505 = vld [vmem:[#allocation5 + $0xac8] sm:$0xff]
    %v506 = vld [vmem:[#allocation5 + $0xad0] sm:$0xff]
    %v507 = vld [vmem:[#allocation5 + $0xad8] sm:$0xff]
    %v508 = vld [vmem:[#allocation5 + $0xae0] sm:$0xff]
    %v509 = vld [vmem:[#allocation5 + $0xae8] sm:$0xff]
    %v510 = vld [vmem:[#allocation5 + $0xaf0] sm:$0xff]
    %v511 = vld [vmem:[#allocation5 + $0xaf8] sm:$0xff]
    %v512 = vld [vmem:[#allocation5 + $0xb00] sm:$0xff]
    %v513 = vld [vmem:[#allocation5 + $0xb08] sm:$0xff]
    %v514 = vld [vmem:[#allocation5 + $0xb10] sm:$0xff]
    %v515 = vld [vmem:[#allocation5 + $0xb18] sm:$0xff]
    %v516 = vld [vmem:[#allocation5 + $0xb20] sm:$0xff]
    %v517 = vld [vmem:[#allocation5 + $0xb28] sm:$0xff]
    %v518 = vld [vmem:[#allocation5 + $0xb30] sm:$0xff]
    %v519 = vld [vmem:[#allocation5 + $0xb38] sm:$0xff]
    %v520 = vld [vmem:[#allocation5 + $0xb40] sm:$0xff]
    %v521 = vld [vmem:[#allocation5 + $0xb48] sm:$0xff]
    %v522 = vld [vmem:[#allocation5 + $0xb50] sm:$0xff]
    %v523 = vld [vmem:[#allocation5 + $0xb58] sm:$0xff]
    %v524 = vld [vmem:[#allocation5 + $0xb60] sm:$0xff]
    %v525 = vld [vmem:[#allocation5 + $0xb68] sm:$0xff]
    %v526 = vld [vmem:[#allocation5 + $0xb70] sm:$0xff]
    %v527 = vld [vmem:[#allocation5 + $0xb78] sm:$0xff]
    %v528 = vld [vmem:[#allocation5 + $0xb80] sm:$0xff]
    %v529 = vld [vmem:[#allocation5 + $0xb88] sm:$0xff]
    %v530 = vld [vmem:[#allocation5 + $0xb90] sm:$0xff]
    %v531 = vld [vmem:[#allocation5 + $0xb98] sm:$0xff]
    %v532 = vld [vmem:[#allocation5 + $0xba0] sm:$0xff]
    %v533 = vld [vmem:[#allocation5 + $0xba8] sm:$0xff]
    %v534 = vld [vmem:[#allocation5 + $0xbb0] sm:$0xff]
    %v535 = vld [vmem:[#allocation5 + $0xbb8] sm:$0xff]
    %v536 = vld [vmem:[#allocation5 + $0xbc0] sm:$0xff]
    %v537 = vld [vmem:[#allocation5 + $0xbc8] sm:$0xff]
    %v538 = vld [vmem:[#allocation5 + $0xbd0] sm:$0xff]
    %v539 = vld [vmem:[#allocation5 + $0xbd8] sm:$0xff]
    %v540 = vld [vmem:[#allocation5 + $0xbe0] sm:$0xff]
    %v541 = vld [vmem:[#allocation5 + $0xbe8] sm:$0xff]
    %v542 = vld [vmem:[#allocation5 + $0xbf0] sm:$0xff]
    %v543 = vld [vmem:[#allocation5 + $0xbf8] sm:$0xff]
    %v544 = vld [vmem:[#allocation5 + $0xc00] sm:$0xff]
    %v545 = vld [vmem:[#allocation5 + $0xc08] sm:$0xff]
    %v546 = vld [vmem:[#allocation5 + $0xc10] sm:$0xff]
    %v547 = vld [vmem:[#allocation5 + $0xc18] sm:$0xff]
    %v548 = vld [vmem:[#allocation5 + $0xc20] sm:$0xff]
    %v549 = vld [vmem:[#allocation5 + $0xc28] sm:$0xff]
    %v550 = vld [vmem:[#allocation5 + $0xc30] sm:$0xff]
    %v551 = vld [vmem:[#allocation5 + $0xc38] sm:$0xff]
    %v552 = vld [vmem:[#allocation5 + $0xc40] sm:$0xff]
    %v553 = vld [vmem:[#allocation5 + $0xc48] sm:$0xff]
    %v554 = vld [vmem:[#allocation5 + $0xc50] sm:$0xff]
    %v555 = vld [vmem:[#allocation5 + $0xc58] sm:$0xff]
    %v556 = vld [vmem:[#allocation5 + $0xc60] sm:$0xff]
    %v557 = vld [vmem:[#allocation5 + $0xc68] sm:$0xff]
    %v558 = vld [vmem:[#allocation5 + $0xc70] sm:$0xff]
    %v559 = vld [vmem:[#allocation5 + $0xc78] sm:$0xff]
    %v560 = vld [vmem:[#allocation5 + $0xc80] sm:$0xff]
    %v561 = vld [vmem:[#allocation5 + $0xc88] sm:$0xff]
    %v562 = vld [vmem:[#allocation5 + $0xc90] sm:$0xff]
    %v563 = vld [vmem:[#allocation5 + $0xc98] sm:$0xff]
    %v564 = vld [vmem:[#allocation5 + $0xca0] sm:$0xff]
    %v565 = vld [vmem:[#allocation5 + $0xca8] sm:$0xff]
    %v566 = vld [vmem:[#allocation5 + $0xcb0] sm:$0xff]
    %v567 = vld [vmem:[#allocation5 + $0xcb8] sm:$0xff]
    %v568 = vld [vmem:[#allocation5 + $0xcc0] sm:$0xff]
    %v569 = vld [vmem:[#allocation5 + $0xcc8] sm:$0xff]
    %v570 = vld [vmem:[#allocation5 + $0xcd0] sm:$0xff]
    %v571 = vld [vmem:[#allocation5 + $0xcd8] sm:$0xff]
    %v572 = vld [vmem:[#allocation5 + $0xce0] sm:$0xff]
    %v573 = vld [vmem:[#allocation5 + $0xce8] sm:$0xff]
    %v574 = vld [vmem:[#allocation5 + $0xcf0] sm:$0xff]
    %v575 = vld [vmem:[#allocation5 + $0xcf8] sm:$0xff]
    %v576 = vld [vmem:[#allocation5 + $0xd00] sm:$0xff]
    %v577 = vld [vmem:[#allocation5 + $0xd08] sm:$0xff]
    %v578 = vld [vmem:[#allocation5 + $0xd10] sm:$0xff]
    %v579 = vld [vmem:[#allocation5 + $0xd18] sm:$0xff]
    %v580 = vld [vmem:[#allocation5 + $0xd20] sm:$0xff]
    %v581 = vld [vmem:[#allocation5 + $0xd28] sm:$0xff]
    %v582 = vld [vmem:[#allocation5 + $0xd30] sm:$0xff]
    %v583 = vld [vmem:[#allocation5 + $0xd38] sm:$0xff]
    %v584 = vld [vmem:[#allocation5 + $0xd40] sm:$0xff]
    %v585 = vld [vmem:[#allocation5 + $0xd48] sm:$0xff]
    %v586 = vld [vmem:[#allocation5 + $0xd50] sm:$0xff]
    %v587 = vld [vmem:[#allocation5 + $0xd58] sm:$0xff]
    %v588 = vld [vmem:[#allocation5 + $0xd60] sm:$0xff]
    %v589 = vld [vmem:[#allocation5 + $0xd68] sm:$0xff]
    %v590 = vld [vmem:[#allocation5 + $0xd70] sm:$0xff]
    %v591 = vld [vmem:[#allocation5 + $0xd78] sm:$0xff]
    %v592 = vld [vmem:[#allocation5 + $0xd80] sm:$0xff]
    %v593 = vld [vmem:[#allocation5 + $0xd88] sm:$0xff]
    %v594 = vld [vmem:[#allocation5 + $0xd90] sm:$0xff]
    %v595 = vld [vmem:[#allocation5 + $0xd98] sm:$0xff]
    %v596 = vld [vmem:[#allocation5 + $0xda0] sm:$0xff]
    %v597 = vld [vmem:[#allocation5 + $0xda8] sm:$0xff]
    %v598 = vld [vmem:[#allocation5 + $0xdb0] sm:$0xff]
    %v599 = vld [vmem:[#allocation5 + $0xdb8] sm:$0xff]
    %v600 = vld [vmem:[#allocation5 + $0xdc0] sm:$0xff]
    %v601 = vld [vmem:[#allocation5 + $0xdc8] sm:$0xff]
    %v602 = vld [vmem:[#allocation5 + $0xdd0] sm:$0xff]
    %v603 = vld [vmem:[#allocation5 + $0xdd8] sm:$0xff]
    %v604 = vld [vmem:[#allocation5 + $0xde0] sm:$0xff]
    %v605 = vld [vmem:[#allocation5 + $0xde8] sm:$0xff]
    %v606 = vld [vmem:[#allocation5 + $0xdf0] sm:$0xff]
    %v607 = vld [vmem:[#allocation5 + $0xdf8] sm:$0xff]
    %v608 = vld [vmem:[#allocation7] sm:$0xff]
    %v610 = vlaneseq
    %v611 = vshrl.u32 %v610, 7
    %v612 = vsub.s32 0, %v611
    %v613 = vrot.slane %v608, %v612
    %v614 = vlaneseq
    %v615 = vshrl.u32 %v614, 7
    %v616 = vsub.s32 1, %v615
    %v617 = vrot.slane %v608, %v616
    %v618 = vlaneseq
    %v619 = vshrl.u32 %v618, 7
    %v620 = vsub.s32 2, %v619
    %v621 = vrot.slane %v608, %v620
    %v622 = vlaneseq
    %v623 = vshrl.u32 %v622, 7
    %v624 = vsub.s32 3, %v623
    %v625 = vrot.slane %v608, %v624
    %v626 = vlaneseq
    %v627 = vshrl.u32 %v626, 7
    %v628 = vsub.s32 4, %v627
    %v629 = vrot.slane %v608, %v628
    %v630 = vlaneseq
    %v631 = vshrl.u32 %v630, 7
    %v632 = vsub.s32 5, %v631
    %v633 = vrot.slane %v608, %v632
    %v634 = vlaneseq
    %v635 = vshrl.u32 %v634, 7
    %v636 = vsub.s32 6, %v635
    %v637 = vrot.slane %v608, %v636
    %v638 = vlaneseq
    %v639 = vshrl.u32 %v638, 7
    %v640 = vsub.s32 7, %v639
    %v641 = vrot.slane %v608, %v640
    %v1098 = vunpack.c.l.b16 %v160
    %v1099 = vunpack.c.h.b16 %v160
    %v1100 = vunpack.c.l.b16 %v161
    %v1101 = vunpack.c.h.b16 %v161
    %v1102 = vunpack.c.l.b16 %v162
    %v1103 = vunpack.c.h.b16 %v162
    %v1104 = vunpack.c.l.b16 %v163
    %v1105 = vunpack.c.h.b16 %v163
    %v1106 = vunpack.c.l.b16 %v164
    %v1107 = vunpack.c.h.b16 %v164
    %v1108 = vunpack.c.l.b16 %v165
    %v1109 = vunpack.c.h.b16 %v165
    %v1110 = vunpack.c.l.b16 %v166
    %v1111 = vunpack.c.h.b16 %v166
    %v1112 = vunpack.c.l.b16 %v167
    %v1113 = vunpack.c.h.b16 %v167
    %v1114 = vunpack.c.l.b16 %v168
    %v1115 = vunpack.c.h.b16 %v168
    %v1116 = vunpack.c.l.b16 %v169
    %v1117 = vunpack.c.h.b16 %v169
    %v1118 = vunpack.c.l.b16 %v170
    %v1119 = vunpack.c.h.b16 %v170
    %v1120 = vunpack.c.l.b16 %v171
    %v1121 = vunpack.c.h.b16 %v171
    %v1122 = vunpack.c.l.b16 %v172
    %v1123 = vunpack.c.h.b16 %v172
    %v1124 = vunpack.c.l.b16 %v173
    %v1125 = vunpack.c.h.b16 %v173
    %v1126 = vunpack.c.l.b16 %v174
    %v1127 = vunpack.c.h.b16 %v174
    %v1128 = vunpack.c.l.b16 %v175
    %v1129 = vunpack.c.h.b16 %v175
    %v1130 = vunpack.c.l.b16 %v176
    %v1131 = vunpack.c.h.b16 %v176
    %v1132 = vunpack.c.l.b16 %v177
    %v1133 = vunpack.c.h.b16 %v177
    %v1134 = vunpack.c.l.b16 %v178
    %v1135 = vunpack.c.h.b16 %v178
    %v1136 = vunpack.c.l.b16 %v179
    %v1137 = vunpack.c.h.b16 %v179
    %v1138 = vunpack.c.l.b16 %v180
    %v1139 = vunpack.c.h.b16 %v180
    %v1140 = vunpack.c.l.b16 %v181
    %v1141 = vunpack.c.h.b16 %v181
    %v1142 = vunpack.c.l.b16 %v182
    %v1143 = vunpack.c.h.b16 %v182
    %v1144 = vunpack.c.l.b16 %v183
    %v1145 = vunpack.c.h.b16 %v183
    %v1146 = vunpack.c.l.b16 %v184
    %v1147 = vunpack.c.h.b16 %v184
    %v1148 = vunpack.c.l.b16 %v185
    %v1149 = vunpack.c.h.b16 %v185
    %v1150 = vunpack.c.l.b16 %v186
    %v1151 = vunpack.c.h.b16 %v186
    %v1152 = vunpack.c.l.b16 %v187
    %v1153 = vunpack.c.h.b16 %v187
    %v1154 = vunpack.c.l.b16 %v188
    %v1155 = vunpack.c.h.b16 %v188
    %v1156 = vunpack.c.l.b16 %v189
    %v1157 = vunpack.c.h.b16 %v189
    %v1158 = vunpack.c.l.b16 %v190
    %v1159 = vunpack.c.h.b16 %v190
    %v1160 = vunpack.c.l.b16 %v191
    %v1161 = vunpack.c.h.b16 %v191
    %v1162 = vunpack.c.l.b16 %v192
    %v1163 = vunpack.c.h.b16 %v192
    %v1164 = vunpack.c.l.b16 %v193
    %v1165 = vunpack.c.h.b16 %v193
    %v1166 = vunpack.c.l.b16 %v194
    %v1167 = vunpack.c.h.b16 %v194
    %v1168 = vunpack.c.l.b16 %v195
    %v1169 = vunpack.c.h.b16 %v195
    %v1170 = vunpack.c.l.b16 %v196
    %v1171 = vunpack.c.h.b16 %v196
    %v1172 = vunpack.c.l.b16 %v197
    %v1173 = vunpack.c.h.b16 %v197
    %v1174 = vunpack.c.l.b16 %v198
    %v1175 = vunpack.c.h.b16 %v198
    %v1176 = vunpack.c.l.b16 %v199
    %v1177 = vunpack.c.h.b16 %v199
    %v1178 = vunpack.c.l.b16 %v200
    %v1179 = vunpack.c.h.b16 %v200
    %v1180 = vunpack.c.l.b16 %v201
    %v1181 = vunpack.c.h.b16 %v201
    %v1182 = vunpack.c.l.b16 %v202
    %v1183 = vunpack.c.h.b16 %v202
    %v1184 = vunpack.c.l.b16 %v203
    %v1185 = vunpack.c.h.b16 %v203
    %v1186 = vunpack.c.l.b16 %v204
    %v1187 = vunpack.c.h.b16 %v204
    %v1188 = vunpack.c.l.b16 %v205
    %v1189 = vunpack.c.h.b16 %v205
    %v1190 = vunpack.c.l.b16 %v206
    %v1191 = vunpack.c.h.b16 %v206
    %v1192 = vunpack.c.l.b16 %v207
    %v1193 = vunpack.c.h.b16 %v207
    %v1194 = vunpack.c.l.b16 %v208
    %v1195 = vunpack.c.h.b16 %v208
    %v1196 = vunpack.c.l.b16 %v209
    %v1197 = vunpack.c.h.b16 %v209
    %v1198 = vunpack.c.l.b16 %v210
    %v1199 = vunpack.c.h.b16 %v210
    %v1200 = vunpack.c.l.b16 %v211
    %v1201 = vunpack.c.h.b16 %v211
    %v1202 = vunpack.c.l.b16 %v212
    %v1203 = vunpack.c.h.b16 %v212
    %v1204 = vunpack.c.l.b16 %v213
    %v1205 = vunpack.c.h.b16 %v213
    %v1206 = vunpack.c.l.b16 %v214
    %v1207 = vunpack.c.h.b16 %v214
    %v1208 = vunpack.c.l.b16 %v215
    %v1209 = vunpack.c.h.b16 %v215
    %v1210 = vunpack.c.l.b16 %v216
    %v1211 = vunpack.c.h.b16 %v216
    %v1212 = vunpack.c.l.b16 %v217
    %v1213 = vunpack.c.h.b16 %v217
    %v1214 = vunpack.c.l.b16 %v218
    %v1215 = vunpack.c.h.b16 %v218
    %v1216 = vunpack.c.l.b16 %v219
    %v1217 = vunpack.c.h.b16 %v219
    %v1218 = vunpack.c.l.b16 %v220
    %v1219 = vunpack.c.h.b16 %v220
    %v1220 = vunpack.c.l.b16 %v221
    %v1221 = vunpack.c.h.b16 %v221
    %v1222 = vunpack.c.l.b16 %v222
    %v1223 = vunpack.c.h.b16 %v222
    %v1224 = vunpack.c.l.b16 %v223
    %v1225 = vunpack.c.h.b16 %v223
    %v1226 = vunpack.c.l.b16 %v224
    %v1227 = vunpack.c.h.b16 %v224
    %v1228 = vunpack.c.l.b16 %v225
    %v1229 = vunpack.c.h.b16 %v225
    %v1230 = vunpack.c.l.b16 %v226
    %v1231 = vunpack.c.h.b16 %v226
    %v1232 = vunpack.c.l.b16 %v227
    %v1233 = vunpack.c.h.b16 %v227
    %v1234 = vunpack.c.l.b16 %v228
    %v1235 = vunpack.c.h.b16 %v228
    %v1236 = vunpack.c.l.b16 %v229
    %v1237 = vunpack.c.h.b16 %v229
    %v1238 = vunpack.c.l.b16 %v230
    %v1239 = vunpack.c.h.b16 %v230
    %v1240 = vunpack.c.l.b16 %v231
    %v1241 = vunpack.c.h.b16 %v231
    %v1242 = vunpack.c.l.b16 %v232
    %v1243 = vunpack.c.h.b16 %v232
    %v1244 = vunpack.c.l.b16 %v233
    %v1245 = vunpack.c.h.b16 %v233
    %v1246 = vunpack.c.l.b16 %v234
    %v1247 = vunpack.c.h.b16 %v234
    %v1248 = vunpack.c.l.b16 %v235
    %v1249 = vunpack.c.h.b16 %v235
    %v1250 = vunpack.c.l.b16 %v236
    %v1251 = vunpack.c.h.b16 %v236
    %v1252 = vunpack.c.l.b16 %v237
    %v1253 = vunpack.c.h.b16 %v237
    %v1254 = vunpack.c.l.b16 %v238
    %v1255 = vunpack.c.h.b16 %v238
    %v1256 = vunpack.c.l.b16 %v239
    %v1257 = vunpack.c.h.b16 %v239
    %v1258 = vunpack.c.l.b16 %v240
    %v1259 = vunpack.c.h.b16 %v240
    %v1260 = vunpack.c.l.b16 %v241
    %v1261 = vunpack.c.h.b16 %v241
    %v1262 = vunpack.c.l.b16 %v242
    %v1263 = vunpack.c.h.b16 %v242
    %v1264 = vunpack.c.l.b16 %v243
    %v1265 = vunpack.c.h.b16 %v243
    %v1266 = vunpack.c.l.b16 %v244
    %v1267 = vunpack.c.h.b16 %v244
    %v1268 = vunpack.c.l.b16 %v245
    %v1269 = vunpack.c.h.b16 %v245
    %v1270 = vunpack.c.l.b16 %v246
    %v1271 = vunpack.c.h.b16 %v246
    %v1272 = vunpack.c.l.b16 %v247
    %v1273 = vunpack.c.h.b16 %v247
    %v1274 = vunpack.c.l.b16 %v248
    %v1275 = vunpack.c.h.b16 %v248
    %v1276 = vunpack.c.l.b16 %v249
    %v1277 = vunpack.c.h.b16 %v249
    %v1278 = vunpack.c.l.b16 %v250
    %v1279 = vunpack.c.h.b16 %v250
    %v1280 = vunpack.c.l.b16 %v251
    %v1281 = vunpack.c.h.b16 %v251
    %v1282 = vunpack.c.l.b16 %v252
    %v1283 = vunpack.c.h.b16 %v252
    %v1284 = vunpack.c.l.b16 %v253
    %v1285 = vunpack.c.h.b16 %v253
    %v1286 = vunpack.c.l.b16 %v254
    %v1287 = vunpack.c.h.b16 %v254
    %v1288 = vunpack.c.l.b16 %v255
    %v1289 = vunpack.c.h.b16 %v255
    %v1290 = vunpack.c.l.b16 %v256
    %v1291 = vunpack.c.h.b16 %v256
    %v1292 = vunpack.c.l.b16 %v257
    %v1293 = vunpack.c.h.b16 %v257
    %v1294 = vunpack.c.l.b16 %v258
    %v1295 = vunpack.c.h.b16 %v258
    %v1296 = vunpack.c.l.b16 %v259
    %v1297 = vunpack.c.h.b16 %v259
    %v1298 = vunpack.c.l.b16 %v260
    %v1299 = vunpack.c.h.b16 %v260
    %v1300 = vunpack.c.l.b16 %v261
    %v1301 = vunpack.c.h.b16 %v261
    %v1302 = vunpack.c.l.b16 %v262
    %v1303 = vunpack.c.h.b16 %v262
    %v1304 = vunpack.c.l.b16 %v263
    %v1305 = vunpack.c.h.b16 %v263
    %v1306 = vunpack.c.l.b16 %v264
    %v1307 = vunpack.c.h.b16 %v264
    %v1308 = vunpack.c.l.b16 %v265
    %v1309 = vunpack.c.h.b16 %v265
    %v1310 = vunpack.c.l.b16 %v266
    %v1311 = vunpack.c.h.b16 %v266
    %v1312 = vunpack.c.l.b16 %v267
    %v1313 = vunpack.c.h.b16 %v267
    %v1314 = vunpack.c.l.b16 %v268
    %v1315 = vunpack.c.h.b16 %v268
    %v1316 = vunpack.c.l.b16 %v269
    %v1317 = vunpack.c.h.b16 %v269
    %v1318 = vunpack.c.l.b16 %v270
    %v1319 = vunpack.c.h.b16 %v270
    %v1320 = vunpack.c.l.b16 %v271
    %v1321 = vunpack.c.h.b16 %v271
    %v1322 = vunpack.c.l.b16 %v272
    %v1323 = vunpack.c.h.b16 %v272
    %v1324 = vunpack.c.l.b16 %v273
    %v1325 = vunpack.c.h.b16 %v273
    %v1326 = vunpack.c.l.b16 %v274
    %v1327 = vunpack.c.h.b16 %v274
    %v1328 = vunpack.c.l.b16 %v275
    %v1329 = vunpack.c.h.b16 %v275
    %v1330 = vunpack.c.l.b16 %v276
    %v1331 = vunpack.c.h.b16 %v276
    %v1332 = vunpack.c.l.b16 %v277
    %v1333 = vunpack.c.h.b16 %v277
    %v1334 = vunpack.c.l.b16 %v278
    %v1335 = vunpack.c.h.b16 %v278
    %v1336 = vunpack.c.l.b16 %v279
    %v1337 = vunpack.c.h.b16 %v279
    %v1338 = vunpack.c.l.b16 %v280
    %v1339 = vunpack.c.h.b16 %v280
    %v1340 = vunpack.c.l.b16 %v281
    %v1341 = vunpack.c.h.b16 %v281
    %v1342 = vunpack.c.l.b16 %v282
    %v1343 = vunpack.c.h.b16 %v282
    %v1344 = vunpack.c.l.b16 %v283
    %v1345 = vunpack.c.h.b16 %v283
    %v1346 = vunpack.c.l.b16 %v284
    %v1347 = vunpack.c.h.b16 %v284
    %v1348 = vunpack.c.l.b16 %v285
    %v1349 = vunpack.c.h.b16 %v285
    %v1350 = vunpack.c.l.b16 %v286
    %v1351 = vunpack.c.h.b16 %v286
    %v1352 = vunpack.c.l.b16 %v287
    %v1353 = vunpack.c.h.b16 %v287
    %v1354 = vunpack.c.l.b16 %v288
    %v1355 = vunpack.c.h.b16 %v288
    %v1356 = vunpack.c.l.b16 %v289
    %v1357 = vunpack.c.h.b16 %v289
    %v1358 = vunpack.c.l.b16 %v290
    %v1359 = vunpack.c.h.b16 %v290
    %v1360 = vunpack.c.l.b16 %v291
    %v1361 = vunpack.c.h.b16 %v291
    %v1362 = vunpack.c.l.b16 %v292
    %v1363 = vunpack.c.h.b16 %v292
    %v1364 = vunpack.c.l.b16 %v293
    %v1365 = vunpack.c.h.b16 %v293
    %v1366 = vunpack.c.l.b16 %v294
    %v1367 = vunpack.c.h.b16 %v294
    %v1368 = vunpack.c.l.b16 %v295
    %v1369 = vunpack.c.h.b16 %v295
    %v1370 = vunpack.c.l.b16 %v296
    %v1371 = vunpack.c.h.b16 %v296
    %v1372 = vunpack.c.l.b16 %v297
    %v1373 = vunpack.c.h.b16 %v297
    %v1374 = vunpack.c.l.b16 %v298
    %v1375 = vunpack.c.h.b16 %v298
    %v1376 = vunpack.c.l.b16 %v299
    %v1377 = vunpack.c.h.b16 %v299
    %v1378 = vunpack.c.l.b16 %v300
    %v1379 = vunpack.c.h.b16 %v300
    %v1380 = vunpack.c.l.b16 %v301
    %v1381 = vunpack.c.h.b16 %v301
    %v1382 = vunpack.c.l.b16 %v302
    %v1383 = vunpack.c.h.b16 %v302
    %v1384 = vunpack.c.l.b16 %v303
    %v1385 = vunpack.c.h.b16 %v303
    %v1386 = vunpack.c.l.b16 %v304
    %v1387 = vunpack.c.h.b16 %v304
    %v1388 = vunpack.c.l.b16 %v305
    %v1389 = vunpack.c.h.b16 %v305
    %v1390 = vunpack.c.l.b16 %v306
    %v1391 = vunpack.c.h.b16 %v306
    %v1392 = vunpack.c.l.b16 %v307
    %v1393 = vunpack.c.h.b16 %v307
    %v1394 = vunpack.c.l.b16 %v308
    %v1395 = vunpack.c.h.b16 %v308
    %v1396 = vunpack.c.l.b16 %v309
    %v1397 = vunpack.c.h.b16 %v309
    %v1398 = vunpack.c.l.b16 %v310
    %v1399 = vunpack.c.h.b16 %v310
    %v1400 = vunpack.c.l.b16 %v311
    %v1401 = vunpack.c.h.b16 %v311
    %v1402 = vunpack.c.l.b16 %v312
    %v1403 = vunpack.c.h.b16 %v312
    %v1404 = vunpack.c.l.b16 %v313
    %v1405 = vunpack.c.h.b16 %v313
    %v1406 = vunpack.c.l.b16 %v314
    %v1407 = vunpack.c.h.b16 %v314
    %v1408 = vunpack.c.l.b16 %v315
    %v1409 = vunpack.c.h.b16 %v315
    %v1410 = vunpack.c.l.b16 %v316
    %v1411 = vunpack.c.h.b16 %v316
    %v1412 = vunpack.c.l.b16 %v317
    %v1413 = vunpack.c.h.b16 %v317
    %v1414 = vunpack.c.l.b16 %v318
    %v1415 = vunpack.c.h.b16 %v318
    %v1416 = vunpack.c.l.b16 %v319
    %v1417 = vunpack.c.h.b16 %v319
    %v1418 = vunpack.c.l.b16 %v320
    %v1419 = vunpack.c.h.b16 %v320
    %v1420 = vunpack.c.l.b16 %v321
    %v1421 = vunpack.c.h.b16 %v321
    %v1422 = vunpack.c.l.b16 %v322
    %v1423 = vunpack.c.h.b16 %v322
    %v1424 = vunpack.c.l.b16 %v323
    %v1425 = vunpack.c.h.b16 %v323
    %v1426 = vunpack.c.l.b16 %v324
    %v1427 = vunpack.c.h.b16 %v324
    %v1428 = vunpack.c.l.b16 %v325
    %v1429 = vunpack.c.h.b16 %v325
    %v1430 = vunpack.c.l.b16 %v326
    %v1431 = vunpack.c.h.b16 %v326
    %v1432 = vunpack.c.l.b16 %v327
    %v1433 = vunpack.c.h.b16 %v327
    %v1434 = vunpack.c.l.b16 %v328
    %v1435 = vunpack.c.h.b16 %v328
    %v1436 = vunpack.c.l.b16 %v329
    %v1437 = vunpack.c.h.b16 %v329
    %v1438 = vunpack.c.l.b16 %v330
    %v1439 = vunpack.c.h.b16 %v330
    %v1440 = vunpack.c.l.b16 %v331
    %v1441 = vunpack.c.h.b16 %v331
    %v1442 = vunpack.c.l.b16 %v332
    %v1443 = vunpack.c.h.b16 %v332
    %v1444 = vunpack.c.l.b16 %v333
    %v1445 = vunpack.c.h.b16 %v333
    %v1446 = vunpack.c.l.b16 %v334
    %v1447 = vunpack.c.h.b16 %v334
    %v1448 = vunpack.c.l.b16 %v335
    %v1449 = vunpack.c.h.b16 %v335
    %v1450 = vunpack.c.l.b16 %v336
    %v1451 = vunpack.c.h.b16 %v336
    %v1452 = vunpack.c.l.b16 %v337
    %v1453 = vunpack.c.h.b16 %v337
    %v1454 = vunpack.c.l.b16 %v338
    %v1455 = vunpack.c.h.b16 %v338
    %v1456 = vunpack.c.l.b16 %v339
    %v1457 = vunpack.c.h.b16 %v339
    %v1458 = vunpack.c.l.b16 %v340
    %v1459 = vunpack.c.h.b16 %v340
    %v1460 = vunpack.c.l.b16 %v341
    %v1461 = vunpack.c.h.b16 %v341
    %v1462 = vunpack.c.l.b16 %v342
    %v1463 = vunpack.c.h.b16 %v342
    %v1464 = vunpack.c.l.b16 %v343
    %v1465 = vunpack.c.h.b16 %v343
    %v1466 = vunpack.c.l.b16 %v344
    %v1467 = vunpack.c.h.b16 %v344
    %v1468 = vunpack.c.l.b16 %v345
    %v1469 = vunpack.c.h.b16 %v345
    %v1470 = vunpack.c.l.b16 %v346
    %v1471 = vunpack.c.h.b16 %v346
    %v1472 = vunpack.c.l.b16 %v347
    %v1473 = vunpack.c.h.b16 %v347
    %v1474 = vunpack.c.l.b16 %v348
    %v1475 = vunpack.c.h.b16 %v348
    %v1476 = vunpack.c.l.b16 %v349
    %v1477 = vunpack.c.h.b16 %v349
    %v1478 = vunpack.c.l.b16 %v350
    %v1479 = vunpack.c.h.b16 %v350
    %v1480 = vunpack.c.l.b16 %v351
    %v1481 = vunpack.c.h.b16 %v351
    %v1482 = vunpack.c.l.b16 %v352
    %v1483 = vunpack.c.h.b16 %v352
    %v1484 = vunpack.c.l.b16 %v353
    %v1485 = vunpack.c.h.b16 %v353
    %v1486 = vunpack.c.l.b16 %v354
    %v1487 = vunpack.c.h.b16 %v354
    %v1488 = vunpack.c.l.b16 %v355
    %v1489 = vunpack.c.h.b16 %v355
    %v1490 = vunpack.c.l.b16 %v356
    %v1491 = vunpack.c.h.b16 %v356
    %v1492 = vunpack.c.l.b16 %v357
    %v1493 = vunpack.c.h.b16 %v357
    %v1494 = vunpack.c.l.b16 %v358
    %v1495 = vunpack.c.h.b16 %v358
    %v1496 = vunpack.c.l.b16 %v359
    %v1497 = vunpack.c.h.b16 %v359
    %v1498 = vunpack.c.l.b16 %v360
    %v1499 = vunpack.c.h.b16 %v360
    %v1500 = vunpack.c.l.b16 %v361
    %v1501 = vunpack.c.h.b16 %v361
    %v1502 = vunpack.c.l.b16 %v362
    %v1503 = vunpack.c.h.b16 %v362
    %v1504 = vunpack.c.l.b16 %v363
    %v1505 = vunpack.c.h.b16 %v363
    %v1506 = vunpack.c.l.b16 %v364
    %v1507 = vunpack.c.h.b16 %v364
    %v1508 = vunpack.c.l.b16 %v365
    %v1509 = vunpack.c.h.b16 %v365
    %v1510 = vunpack.c.l.b16 %v366
    %v1511 = vunpack.c.h.b16 %v366
    %v1512 = vunpack.c.l.b16 %v367
    %v1513 = vunpack.c.h.b16 %v367
    %v1514 = vunpack.c.l.b16 %v368
    %v1515 = vunpack.c.h.b16 %v368
    %v1516 = vunpack.c.l.b16 %v369
    %v1517 = vunpack.c.h.b16 %v369
    %v1518 = vunpack.c.l.b16 %v370
    %v1519 = vunpack.c.h.b16 %v370
    %v1520 = vunpack.c.l.b16 %v371
    %v1521 = vunpack.c.h.b16 %v371
    %v1522 = vunpack.c.l.b16 %v372
    %v1523 = vunpack.c.h.b16 %v372
    %v1524 = vunpack.c.l.b16 %v373
    %v1525 = vunpack.c.h.b16 %v373
    %v1526 = vunpack.c.l.b16 %v374
    %v1527 = vunpack.c.h.b16 %v374
    %v1528 = vunpack.c.l.b16 %v375
    %v1529 = vunpack.c.h.b16 %v375
    %v1530 = vunpack.c.l.b16 %v376
    %v1531 = vunpack.c.h.b16 %v376
    %v1532 = vunpack.c.l.b16 %v377
    %v1533 = vunpack.c.h.b16 %v377
    %v1534 = vunpack.c.l.b16 %v378
    %v1535 = vunpack.c.h.b16 %v378
    %v1536 = vunpack.c.l.b16 %v379
    %v1537 = vunpack.c.h.b16 %v379
    %v1538 = vunpack.c.l.b16 %v380
    %v1539 = vunpack.c.h.b16 %v380
    %v1540 = vunpack.c.l.b16 %v381
    %v1541 = vunpack.c.h.b16 %v381
    %v1542 = vunpack.c.l.b16 %v382
    %v1543 = vunpack.c.h.b16 %v382
    %v1544 = vunpack.c.l.b16 %v383
    %v1545 = vunpack.c.h.b16 %v383
    %v1546 = vunpack.c.l.b16 %v384
    %v1547 = vunpack.c.h.b16 %v384
    %v1548 = vunpack.c.l.b16 %v385
    %v1549 = vunpack.c.h.b16 %v385
    %v1550 = vunpack.c.l.b16 %v386
    %v1551 = vunpack.c.h.b16 %v386
    %v1552 = vunpack.c.l.b16 %v387
    %v1553 = vunpack.c.h.b16 %v387
    %v1554 = vunpack.c.l.b16 %v388
    %v1555 = vunpack.c.h.b16 %v388
    %v1556 = vunpack.c.l.b16 %v389
    %v1557 = vunpack.c.h.b16 %v389
    %v1558 = vunpack.c.l.b16 %v390
    %v1559 = vunpack.c.h.b16 %v390
    %v1560 = vunpack.c.l.b16 %v391
    %v1561 = vunpack.c.h.b16 %v391
    %v1562 = vunpack.c.l.b16 %v392
    %v1563 = vunpack.c.h.b16 %v392
    %v1564 = vunpack.c.l.b16 %v393
    %v1565 = vunpack.c.h.b16 %v393
    %v1566 = vunpack.c.l.b16 %v394
    %v1567 = vunpack.c.h.b16 %v394
    %v1568 = vunpack.c.l.b16 %v395
    %v1569 = vunpack.c.h.b16 %v395
    %v1570 = vunpack.c.l.b16 %v396
    %v1571 = vunpack.c.h.b16 %v396
    %v1572 = vunpack.c.l.b16 %v397
    %v1573 = vunpack.c.h.b16 %v397
    %v1574 = vunpack.c.l.b16 %v398
    %v1575 = vunpack.c.h.b16 %v398
    %v1576 = vunpack.c.l.b16 %v399
    %v1577 = vunpack.c.h.b16 %v399
    %v1578 = vunpack.c.l.b16 %v400
    %v1579 = vunpack.c.h.b16 %v400
    %v1580 = vunpack.c.l.b16 %v401
    %v1581 = vunpack.c.h.b16 %v401
    %v1582 = vunpack.c.l.b16 %v402
    %v1583 = vunpack.c.h.b16 %v402
    %v1584 = vunpack.c.l.b16 %v403
    %v1585 = vunpack.c.h.b16 %v403
    %v1586 = vunpack.c.l.b16 %v404
    %v1587 = vunpack.c.h.b16 %v404
    %v1588 = vunpack.c.l.b16 %v405
    %v1589 = vunpack.c.h.b16 %v405
    %v1590 = vunpack.c.l.b16 %v406
    %v1591 = vunpack.c.h.b16 %v406
    %v1592 = vunpack.c.l.b16 %v407
    %v1593 = vunpack.c.h.b16 %v407
    %v1594 = vunpack.c.l.b16 %v408
    %v1595 = vunpack.c.h.b16 %v408
    %v1596 = vunpack.c.l.b16 %v409
    %v1597 = vunpack.c.h.b16 %v409
    %v1598 = vunpack.c.l.b16 %v410
    %v1599 = vunpack.c.h.b16 %v410
    %v1600 = vunpack.c.l.b16 %v411
    %v1601 = vunpack.c.h.b16 %v411
    %v1602 = vunpack.c.l.b16 %v412
    %v1603 = vunpack.c.h.b16 %v412
    %v1604 = vunpack.c.l.b16 %v413
    %v1605 = vunpack.c.h.b16 %v413
    %v1606 = vunpack.c.l.b16 %v414
    %v1607 = vunpack.c.h.b16 %v414
    %v1608 = vunpack.c.l.b16 %v415
    %v1609 = vunpack.c.h.b16 %v415
    %v1610 = vunpack.c.l.b16 %v416
    %v1611 = vunpack.c.h.b16 %v416
    %v1612 = vunpack.c.l.b16 %v417
    %v1613 = vunpack.c.h.b16 %v417
    %v1614 = vunpack.c.l.b16 %v418
    %v1615 = vunpack.c.h.b16 %v418
    %v1616 = vunpack.c.l.b16 %v419
    %v1617 = vunpack.c.h.b16 %v419
    %v1618 = vunpack.c.l.b16 %v420
    %v1619 = vunpack.c.h.b16 %v420
    %v1620 = vunpack.c.l.b16 %v421
    %v1621 = vunpack.c.h.b16 %v421
    %v1622 = vunpack.c.l.b16 %v422
    %v1623 = vunpack.c.h.b16 %v422
    %v1624 = vunpack.c.l.b16 %v423
    %v1625 = vunpack.c.h.b16 %v423
    %v1626 = vunpack.c.l.b16 %v424
    %v1627 = vunpack.c.h.b16 %v424
    %v1628 = vunpack.c.l.b16 %v425
    %v1629 = vunpack.c.h.b16 %v425
    %v1630 = vunpack.c.l.b16 %v426
    %v1631 = vunpack.c.h.b16 %v426
    %v1632 = vunpack.c.l.b16 %v427
    %v1633 = vunpack.c.h.b16 %v427
    %v1634 = vunpack.c.l.b16 %v428
    %v1635 = vunpack.c.h.b16 %v428
    %v1636 = vunpack.c.l.b16 %v429
    %v1637 = vunpack.c.h.b16 %v429
    %v1638 = vunpack.c.l.b16 %v430
    %v1639 = vunpack.c.h.b16 %v430
    %v1640 = vunpack.c.l.b16 %v431
    %v1641 = vunpack.c.h.b16 %v431
    %v1642 = vunpack.c.l.b16 %v432
    %v1643 = vunpack.c.h.b16 %v432
    %v1644 = vunpack.c.l.b16 %v433
    %v1645 = vunpack.c.h.b16 %v433
    %v1646 = vunpack.c.l.b16 %v434
    %v1647 = vunpack.c.h.b16 %v434
    %v1648 = vunpack.c.l.b16 %v435
    %v1649 = vunpack.c.h.b16 %v435
    %v1650 = vunpack.c.l.b16 %v436
    %v1651 = vunpack.c.h.b16 %v436
    %v1652 = vunpack.c.l.b16 %v437
    %v1653 = vunpack.c.h.b16 %v437
    %v1654 = vunpack.c.l.b16 %v438
    %v1655 = vunpack.c.h.b16 %v438
    %v1656 = vunpack.c.l.b16 %v439
    %v1657 = vunpack.c.h.b16 %v439
    %v1658 = vunpack.c.l.b16 %v440
    %v1659 = vunpack.c.h.b16 %v440
    %v1660 = vunpack.c.l.b16 %v441
    %v1661 = vunpack.c.h.b16 %v441
    %v1662 = vunpack.c.l.b16 %v442
    %v1663 = vunpack.c.h.b16 %v442
    %v1664 = vunpack.c.l.b16 %v443
    %v1665 = vunpack.c.h.b16 %v443
    %v1666 = vunpack.c.l.b16 %v444
    %v1667 = vunpack.c.h.b16 %v444
    %v1668 = vunpack.c.l.b16 %v445
    %v1669 = vunpack.c.h.b16 %v445
    %v1670 = vunpack.c.l.b16 %v446
    %v1671 = vunpack.c.h.b16 %v446
    %v1672 = vunpack.c.l.b16 %v447
    %v1673 = vunpack.c.h.b16 %v447
    %v1674 = vunpack.c.l.b16 %v448
    %v1675 = vunpack.c.h.b16 %v448
    %v1676 = vunpack.c.l.b16 %v449
    %v1677 = vunpack.c.h.b16 %v449
    %v1678 = vunpack.c.l.b16 %v450
    %v1679 = vunpack.c.h.b16 %v450
    %v1680 = vunpack.c.l.b16 %v451
    %v1681 = vunpack.c.h.b16 %v451
    %v1682 = vunpack.c.l.b16 %v452
    %v1683 = vunpack.c.h.b16 %v452
    %v1684 = vunpack.c.l.b16 %v453
    %v1685 = vunpack.c.h.b16 %v453
    %v1686 = vunpack.c.l.b16 %v454
    %v1687 = vunpack.c.h.b16 %v454
    %v1688 = vunpack.c.l.b16 %v455
    %v1689 = vunpack.c.h.b16 %v455
    %v1690 = vunpack.c.l.b16 %v456
    %v1691 = vunpack.c.h.b16 %v456
    %v1692 = vunpack.c.l.b16 %v457
    %v1693 = vunpack.c.h.b16 %v457
    %v1694 = vunpack.c.l.b16 %v458
    %v1695 = vunpack.c.h.b16 %v458
    %v1696 = vunpack.c.l.b16 %v459
    %v1697 = vunpack.c.h.b16 %v459
    %v1698 = vunpack.c.l.b16 %v460
    %v1699 = vunpack.c.h.b16 %v460
    %v1700 = vunpack.c.l.b16 %v461
    %v1701 = vunpack.c.h.b16 %v461
    %v1702 = vunpack.c.l.b16 %v462
    %v1703 = vunpack.c.h.b16 %v462
    %v1704 = vunpack.c.l.b16 %v463
    %v1705 = vunpack.c.h.b16 %v463
    %v1706 = vunpack.c.l.b16 %v464
    %v1707 = vunpack.c.h.b16 %v464
    %v1708 = vunpack.c.l.b16 %v465
    %v1709 = vunpack.c.h.b16 %v465
    %v1710 = vunpack.c.l.b16 %v466
    %v1711 = vunpack.c.h.b16 %v466
    %v1712 = vunpack.c.l.b16 %v467
    %v1713 = vunpack.c.h.b16 %v467
    %v1714 = vunpack.c.l.b16 %v468
    %v1715 = vunpack.c.h.b16 %v468
    %v1716 = vunpack.c.l.b16 %v469
    %v1717 = vunpack.c.h.b16 %v469
    %v1718 = vunpack.c.l.b16 %v470
    %v1719 = vunpack.c.h.b16 %v470
    %v1720 = vunpack.c.l.b16 %v471
    %v1721 = vunpack.c.h.b16 %v471
    %v1722 = vunpack.c.l.b16 %v472
    %v1723 = vunpack.c.h.b16 %v472
    %v1724 = vunpack.c.l.b16 %v473
    %v1725 = vunpack.c.h.b16 %v473
    %v1726 = vunpack.c.l.b16 %v474
    %v1727 = vunpack.c.h.b16 %v474
    %v1728 = vunpack.c.l.b16 %v475
    %v1729 = vunpack.c.h.b16 %v475
    %v1730 = vunpack.c.l.b16 %v476
    %v1731 = vunpack.c.h.b16 %v476
    %v1732 = vunpack.c.l.b16 %v477
    %v1733 = vunpack.c.h.b16 %v477
    %v1734 = vunpack.c.l.b16 %v478
    %v1735 = vunpack.c.h.b16 %v478
    %v1736 = vunpack.c.l.b16 %v479
    %v1737 = vunpack.c.h.b16 %v479
    %v1738 = vunpack.c.l.b16 %v480
    %v1739 = vunpack.c.h.b16 %v480
    %v1740 = vunpack.c.l.b16 %v481
    %v1741 = vunpack.c.h.b16 %v481
    %v1742 = vunpack.c.l.b16 %v482
    %v1743 = vunpack.c.h.b16 %v482
    %v1744 = vunpack.c.l.b16 %v483
    %v1745 = vunpack.c.h.b16 %v483
    %v1746 = vunpack.c.l.b16 %v484
    %v1747 = vunpack.c.h.b16 %v484
    %v1748 = vunpack.c.l.b16 %v485
    %v1749 = vunpack.c.h.b16 %v485
    %v1750 = vunpack.c.l.b16 %v486
    %v1751 = vunpack.c.h.b16 %v486
    %v1752 = vunpack.c.l.b16 %v487
    %v1753 = vunpack.c.h.b16 %v487
    %v1754 = vunpack.c.l.b16 %v488
    %v1755 = vunpack.c.h.b16 %v488
    %v1756 = vunpack.c.l.b16 %v489
    %v1757 = vunpack.c.h.b16 %v489
    %v1758 = vunpack.c.l.b16 %v490
    %v1759 = vunpack.c.h.b16 %v490
    %v1760 = vunpack.c.l.b16 %v491
    %v1761 = vunpack.c.h.b16 %v491
    %v1762 = vunpack.c.l.b16 %v492
    %v1763 = vunpack.c.h.b16 %v492
    %v1764 = vunpack.c.l.b16 %v493
    %v1765 = vunpack.c.h.b16 %v493
    %v1766 = vunpack.c.l.b16 %v494
    %v1767 = vunpack.c.h.b16 %v494
    %v1768 = vunpack.c.l.b16 %v495
    %v1769 = vunpack.c.h.b16 %v495
    %v1770 = vunpack.c.l.b16 %v496
    %v1771 = vunpack.c.h.b16 %v496
    %v1772 = vunpack.c.l.b16 %v497
    %v1773 = vunpack.c.h.b16 %v497
    %v1774 = vunpack.c.l.b16 %v498
    %v1775 = vunpack.c.h.b16 %v498
    %v1776 = vunpack.c.l.b16 %v499
    %v1777 = vunpack.c.h.b16 %v499
    %v1778 = vunpack.c.l.b16 %v500
    %v1779 = vunpack.c.h.b16 %v500
    %v1780 = vunpack.c.l.b16 %v501
    %v1781 = vunpack.c.h.b16 %v501
    %v1782 = vunpack.c.l.b16 %v502
    %v1783 = vunpack.c.h.b16 %v502
    %v1784 = vunpack.c.l.b16 %v503
    %v1785 = vunpack.c.h.b16 %v503
    %v1786 = vunpack.c.l.b16 %v504
    %v1787 = vunpack.c.h.b16 %v504
    %v1788 = vunpack.c.l.b16 %v505
    %v1789 = vunpack.c.h.b16 %v505
    %v1790 = vunpack.c.l.b16 %v506
    %v1791 = vunpack.c.h.b16 %v506
    %v1792 = vunpack.c.l.b16 %v507
    %v1793 = vunpack.c.h.b16 %v507
    %v1794 = vunpack.c.l.b16 %v508
    %v1795 = vunpack.c.h.b16 %v508
    %v1796 = vunpack.c.l.b16 %v509
    %v1797 = vunpack.c.h.b16 %v509
    %v1798 = vunpack.c.l.b16 %v510
    %v1799 = vunpack.c.h.b16 %v510
    %v1800 = vunpack.c.l.b16 %v511
    %v1801 = vunpack.c.h.b16 %v511
    %v1802 = vunpack.c.l.b16 %v512
    %v1803 = vunpack.c.h.b16 %v512
    %v1804 = vunpack.c.l.b16 %v513
    %v1805 = vunpack.c.h.b16 %v513
    %v1806 = vunpack.c.l.b16 %v514
    %v1807 = vunpack.c.h.b16 %v514
    %v1808 = vunpack.c.l.b16 %v515
    %v1809 = vunpack.c.h.b16 %v515
    %v1810 = vunpack.c.l.b16 %v516
    %v1811 = vunpack.c.h.b16 %v516
    %v1812 = vunpack.c.l.b16 %v517
    %v1813 = vunpack.c.h.b16 %v517
    %v1814 = vunpack.c.l.b16 %v518
    %v1815 = vunpack.c.h.b16 %v518
    %v1816 = vunpack.c.l.b16 %v519
    %v1817 = vunpack.c.h.b16 %v519
    %v1818 = vunpack.c.l.b16 %v520
    %v1819 = vunpack.c.h.b16 %v520
    %v1820 = vunpack.c.l.b16 %v521
    %v1821 = vunpack.c.h.b16 %v521
    %v1822 = vunpack.c.l.b16 %v522
    %v1823 = vunpack.c.h.b16 %v522
    %v1824 = vunpack.c.l.b16 %v523
    %v1825 = vunpack.c.h.b16 %v523
    %v1826 = vunpack.c.l.b16 %v524
    %v1827 = vunpack.c.h.b16 %v524
    %v1828 = vunpack.c.l.b16 %v525
    %v1829 = vunpack.c.h.b16 %v525
    %v1830 = vunpack.c.l.b16 %v526
    %v1831 = vunpack.c.h.b16 %v526
    %v1832 = vunpack.c.l.b16 %v527
    %v1833 = vunpack.c.h.b16 %v527
    %v1834 = vunpack.c.l.b16 %v528
    %v1835 = vunpack.c.h.b16 %v528
    %v1836 = vunpack.c.l.b16 %v529
    %v1837 = vunpack.c.h.b16 %v529
    %v1838 = vunpack.c.l.b16 %v530
    %v1839 = vunpack.c.h.b16 %v530
    %v1840 = vunpack.c.l.b16 %v531
    %v1841 = vunpack.c.h.b16 %v531
    %v1842 = vunpack.c.l.b16 %v532
    %v1843 = vunpack.c.h.b16 %v532
    %v1844 = vunpack.c.l.b16 %v533
    %v1845 = vunpack.c.h.b16 %v533
    %v1846 = vunpack.c.l.b16 %v534
    %v1847 = vunpack.c.h.b16 %v534
    %v1848 = vunpack.c.l.b16 %v535
    %v1849 = vunpack.c.h.b16 %v535
    %v1850 = vunpack.c.l.b16 %v536
    %v1851 = vunpack.c.h.b16 %v536
    %v1852 = vunpack.c.l.b16 %v537
    %v1853 = vunpack.c.h.b16 %v537
    %v1854 = vunpack.c.l.b16 %v538
    %v1855 = vunpack.c.h.b16 %v538
    %v1856 = vunpack.c.l.b16 %v539
    %v1857 = vunpack.c.h.b16 %v539
    %v1858 = vunpack.c.l.b16 %v540
    %v1859 = vunpack.c.h.b16 %v540
    %v1860 = vunpack.c.l.b16 %v541
    %v1861 = vunpack.c.h.b16 %v541
    %v1862 = vunpack.c.l.b16 %v542
    %v1863 = vunpack.c.h.b16 %v542
    %v1864 = vunpack.c.l.b16 %v543
    %v1865 = vunpack.c.h.b16 %v543
    %v1866 = vunpack.c.l.b16 %v544
    %v1867 = vunpack.c.h.b16 %v544
    %v1868 = vunpack.c.l.b16 %v545
    %v1869 = vunpack.c.h.b16 %v545
    %v1870 = vunpack.c.l.b16 %v546
    %v1871 = vunpack.c.h.b16 %v546
    %v1872 = vunpack.c.l.b16 %v547
    %v1873 = vunpack.c.h.b16 %v547
    %v1874 = vunpack.c.l.b16 %v548
    %v1875 = vunpack.c.h.b16 %v548
    %v1876 = vunpack.c.l.b16 %v549
    %v1877 = vunpack.c.h.b16 %v549
    %v1878 = vunpack.c.l.b16 %v550
    %v1879 = vunpack.c.h.b16 %v550
    %v1880 = vunpack.c.l.b16 %v551
    %v1881 = vunpack.c.h.b16 %v551
    %v1882 = vunpack.c.l.b16 %v552
    %v1883 = vunpack.c.h.b16 %v552
    %v1884 = vunpack.c.l.b16 %v553
    %v1885 = vunpack.c.h.b16 %v553
    %v1886 = vunpack.c.l.b16 %v554
    %v1887 = vunpack.c.h.b16 %v554
    %v1888 = vunpack.c.l.b16 %v555
    %v1889 = vunpack.c.h.b16 %v555
    %v1890 = vunpack.c.l.b16 %v556
    %v1891 = vunpack.c.h.b16 %v556
    %v1892 = vunpack.c.l.b16 %v557
    %v1893 = vunpack.c.h.b16 %v557
    %v1894 = vunpack.c.l.b16 %v558
    %v1895 = vunpack.c.h.b16 %v558
    %v1896 = vunpack.c.l.b16 %v559
    %v1897 = vunpack.c.h.b16 %v559
    %v1898 = vunpack.c.l.b16 %v560
    %v1899 = vunpack.c.h.b16 %v560
    %v1900 = vunpack.c.l.b16 %v561
    %v1901 = vunpack.c.h.b16 %v561
    %v1902 = vunpack.c.l.b16 %v562
    %v1903 = vunpack.c.h.b16 %v562
    %v1904 = vunpack.c.l.b16 %v563
    %v1905 = vunpack.c.h.b16 %v563
    %v1906 = vunpack.c.l.b16 %v564
    %v1907 = vunpack.c.h.b16 %v564
    %v1908 = vunpack.c.l.b16 %v565
    %v1909 = vunpack.c.h.b16 %v565
    %v1910 = vunpack.c.l.b16 %v566
    %v1911 = vunpack.c.h.b16 %v566
    %v1912 = vunpack.c.l.b16 %v567
    %v1913 = vunpack.c.h.b16 %v567
    %v1914 = vunpack.c.l.b16 %v568
    %v1915 = vunpack.c.h.b16 %v568
    %v1916 = vunpack.c.l.b16 %v569
    %v1917 = vunpack.c.h.b16 %v569
    %v1918 = vunpack.c.l.b16 %v570
    %v1919 = vunpack.c.h.b16 %v570
    %v1920 = vunpack.c.l.b16 %v571
    %v1921 = vunpack.c.h.b16 %v571
    %v1922 = vunpack.c.l.b16 %v572
    %v1923 = vunpack.c.h.b16 %v572
    %v1924 = vunpack.c.l.b16 %v573
    %v1925 = vunpack.c.h.b16 %v573
    %v1926 = vunpack.c.l.b16 %v574
    %v1927 = vunpack.c.h.b16 %v574
    %v1928 = vunpack.c.l.b16 %v575
    %v1929 = vunpack.c.h.b16 %v575
    %v1930 = vunpack.c.l.b16 %v576
    %v1931 = vunpack.c.h.b16 %v576
    %v1932 = vunpack.c.l.b16 %v577
    %v1933 = vunpack.c.h.b16 %v577
    %v1934 = vunpack.c.l.b16 %v578
    %v1935 = vunpack.c.h.b16 %v578
    %v1936 = vunpack.c.l.b16 %v579
    %v1937 = vunpack.c.h.b16 %v579
    %v1938 = vunpack.c.l.b16 %v580
    %v1939 = vunpack.c.h.b16 %v580
    %v1940 = vunpack.c.l.b16 %v581
    %v1941 = vunpack.c.h.b16 %v581
    %v1942 = vunpack.c.l.b16 %v582
    %v1943 = vunpack.c.h.b16 %v582
    %v1944 = vunpack.c.l.b16 %v583
    %v1945 = vunpack.c.h.b16 %v583
    %v1946 = vunpack.c.l.b16 %v584
    %v1947 = vunpack.c.h.b16 %v584
    %v1948 = vunpack.c.l.b16 %v585
    %v1949 = vunpack.c.h.b16 %v585
    %v1950 = vunpack.c.l.b16 %v586
    %v1951 = vunpack.c.h.b16 %v586
    %v1952 = vunpack.c.l.b16 %v587
    %v1953 = vunpack.c.h.b16 %v587
    %v1954 = vunpack.c.l.b16 %v588
    %v1955 = vunpack.c.h.b16 %v588
    %v1956 = vunpack.c.l.b16 %v589
    %v1957 = vunpack.c.h.b16 %v589
    %v1958 = vunpack.c.l.b16 %v590
    %v1959 = vunpack.c.h.b16 %v590
    %v1960 = vunpack.c.l.b16 %v591
    %v1961 = vunpack.c.h.b16 %v591
    %v1962 = vunpack.c.l.b16 %v592
    %v1963 = vunpack.c.h.b16 %v592
    %v1964 = vunpack.c.l.b16 %v593
    %v1965 = vunpack.c.h.b16 %v593
    %v1966 = vunpack.c.l.b16 %v594
    %v1967 = vunpack.c.h.b16 %v594
    %v1968 = vunpack.c.l.b16 %v595
    %v1969 = vunpack.c.h.b16 %v595
    %v1970 = vunpack.c.l.b16 %v596
    %v1971 = vunpack.c.h.b16 %v596
    %v1972 = vunpack.c.l.b16 %v597
    %v1973 = vunpack.c.h.b16 %v597
    %v1974 = vunpack.c.l.b16 %v598
    %v1975 = vunpack.c.h.b16 %v598
    %v1976 = vunpack.c.l.b16 %v599
    %v1977 = vunpack.c.h.b16 %v599
    %v1978 = vunpack.c.l.b16 %v600
    %v1979 = vunpack.c.h.b16 %v600
    %v1980 = vunpack.c.l.b16 %v601
    %v1981 = vunpack.c.h.b16 %v601
    %v1982 = vunpack.c.l.b16 %v602
    %v1983 = vunpack.c.h.b16 %v602
    %v1984 = vunpack.c.l.b16 %v603
    %v1985 = vunpack.c.h.b16 %v603
    %v1986 = vunpack.c.l.b16 %v604
    %v1987 = vunpack.c.h.b16 %v604
    %v1988 = vunpack.c.l.b16 %v605
    %v1989 = vunpack.c.h.b16 %v605
    %v1990 = vunpack.c.l.b16 %v606
    %v1991 = vunpack.c.h.b16 %v606
    %v1992 = vunpack.c.l.b16 %v607
    %v1993 = vunpack.c.h.b16 %v607
    %v1994 = vpack.c.b16 %v1106, %v1098
    %v1995 = vpack.c.b16 %v1107, %v1099
    %v1996 = vpack.c.b16 %v1108, %v1100
    %v1997 = vpack.c.b16 %v1109, %v1101
    %v1998 = vpack.c.b16 %v1110, %v1102
    %v1999 = vpack.c.b16 %v1111, %v1103
    %v2000 = vpack.c.b16 %v1112, %v1104
    %v2001 = vpack.c.b16 %v1113, %v1105
    %v2002 = vpack.c.b16 %v1122, %v1114
    %v2003 = vpack.c.b16 %v1123, %v1115
    %v2004 = vpack.c.b16 %v1124, %v1116
    %v2005 = vpack.c.b16 %v1125, %v1117
    %v2006 = vpack.c.b16 %v1126, %v1118
    %v2007 = vpack.c.b16 %v1127, %v1119
    %v2008 = vpack.c.b16 %v1128, %v1120
    %v2009 = vpack.c.b16 %v1129, %v1121
    %v2010 = vpack.c.b16 %v1138, %v1130
    %v2011 = vpack.c.b16 %v1139, %v1131
    %v2012 = vpack.c.b16 %v1140, %v1132
    %v2013 = vpack.c.b16 %v1141, %v1133
    %v2014 = vpack.c.b16 %v1142, %v1134
    %v2015 = vpack.c.b16 %v1143, %v1135
    %v2016 = vpack.c.b16 %v1144, %v1136
    %v2017 = vpack.c.b16 %v1145, %v1137
    %v2018 = vpack.c.b16 %v1154, %v1146
    %v2019 = vpack.c.b16 %v1155, %v1147
    %v2020 = vpack.c.b16 %v1156, %v1148
    %v2021 = vpack.c.b16 %v1157, %v1149
    %v2022 = vpack.c.b16 %v1158, %v1150
    %v2023 = vpack.c.b16 %v1159, %v1151
    %v2024 = vpack.c.b16 %v1160, %v1152
    %v2025 = vpack.c.b16 %v1161, %v1153
    %v2026 = vpack.c.b16 %v1170, %v1162
    %v2027 = vpack.c.b16 %v1171, %v1163
    %v2028 = vpack.c.b16 %v1172, %v1164
    %v2029 = vpack.c.b16 %v1173, %v1165
    %v2030 = vpack.c.b16 %v1174, %v1166
    %v2031 = vpack.c.b16 %v1175, %v1167
    %v2032 = vpack.c.b16 %v1176, %v1168
    %v2033 = vpack.c.b16 %v1177, %v1169
    %v2034 = vpack.c.b16 %v1186, %v1178
    %v2035 = vpack.c.b16 %v1187, %v1179
    %v2036 = vpack.c.b16 %v1188, %v1180
    %v2037 = vpack.c.b16 %v1189, %v1181
    %v2038 = vpack.c.b16 %v1190, %v1182
    %v2039 = vpack.c.b16 %v1191, %v1183
    %v2040 = vpack.c.b16 %v1192, %v1184
    %v2041 = vpack.c.b16 %v1193, %v1185
    %v2042 = vpack.c.b16 %v1202, %v1194
    %v2043 = vpack.c.b16 %v1203, %v1195
    %v2044 = vpack.c.b16 %v1204, %v1196
    %v2045 = vpack.c.b16 %v1205, %v1197
    %v2046 = vpack.c.b16 %v1206, %v1198
    %v2047 = vpack.c.b16 %v1207, %v1199
    %v2048 = vpack.c.b16 %v1208, %v1200
    %v2049 = vpack.c.b16 %v1209, %v1201
    %v2050 = vpack.c.b16 %v1218, %v1210
    %v2051 = vpack.c.b16 %v1219, %v1211
    %v2052 = vpack.c.b16 %v1220, %v1212
    %v2053 = vpack.c.b16 %v1221, %v1213
    %v2054 = vpack.c.b16 %v1222, %v1214
    %v2055 = vpack.c.b16 %v1223, %v1215
    %v2056 = vpack.c.b16 %v1224, %v1216
    %v2057 = vpack.c.b16 %v1225, %v1217
    %v2058 = vpack.c.b16 %v1234, %v1226
    %v2059 = vpack.c.b16 %v1235, %v1227
    %v2060 = vpack.c.b16 %v1236, %v1228
    %v2061 = vpack.c.b16 %v1237, %v1229
    %v2062 = vpack.c.b16 %v1238, %v1230
    %v2063 = vpack.c.b16 %v1239, %v1231
    %v2064 = vpack.c.b16 %v1240, %v1232
    %v2065 = vpack.c.b16 %v1241, %v1233
    %v2066 = vpack.c.b16 %v1250, %v1242
    %v2067 = vpack.c.b16 %v1251, %v1243
    %v2068 = vpack.c.b16 %v1252, %v1244
    %v2069 = vpack.c.b16 %v1253, %v1245
    %v2070 = vpack.c.b16 %v1254, %v1246
    %v2071 = vpack.c.b16 %v1255, %v1247
    %v2072 = vpack.c.b16 %v1256, %v1248
    %v2073 = vpack.c.b16 %v1257, %v1249
    %v2074 = vpack.c.b16 %v1266, %v1258
    %v2075 = vpack.c.b16 %v1267, %v1259
    %v2076 = vpack.c.b16 %v1268, %v1260
    %v2077 = vpack.c.b16 %v1269, %v1261
    %v2078 = vpack.c.b16 %v1270, %v1262
    %v2079 = vpack.c.b16 %v1271, %v1263
    %v2080 = vpack.c.b16 %v1272, %v1264
    %v2081 = vpack.c.b16 %v1273, %v1265
    %v2082 = vpack.c.b16 %v1282, %v1274
    %v2083 = vpack.c.b16 %v1283, %v1275
    %v2084 = vpack.c.b16 %v1284, %v1276
    %v2085 = vpack.c.b16 %v1285, %v1277
    %v2086 = vpack.c.b16 %v1286, %v1278
    %v2087 = vpack.c.b16 %v1287, %v1279
    %v2088 = vpack.c.b16 %v1288, %v1280
    %v2089 = vpack.c.b16 %v1289, %v1281
    %v2090 = vpack.c.b16 %v1298, %v1290
    %v2091 = vpack.c.b16 %v1299, %v1291
    %v2092 = vpack.c.b16 %v1300, %v1292
    %v2093 = vpack.c.b16 %v1301, %v1293
    %v2094 = vpack.c.b16 %v1302, %v1294
    %v2095 = vpack.c.b16 %v1303, %v1295
    %v2096 = vpack.c.b16 %v1304, %v1296
    %v2097 = vpack.c.b16 %v1305, %v1297
    %v2098 = vpack.c.b16 %v1314, %v1306
    %v2099 = vpack.c.b16 %v1315, %v1307
    %v2100 = vpack.c.b16 %v1316, %v1308
    %v2101 = vpack.c.b16 %v1317, %v1309
    %v2102 = vpack.c.b16 %v1318, %v1310
    %v2103 = vpack.c.b16 %v1319, %v1311
    %v2104 = vpack.c.b16 %v1320, %v1312
    %v2105 = vpack.c.b16 %v1321, %v1313
    %v2106 = vpack.c.b16 %v1330, %v1322
    %v2107 = vpack.c.b16 %v1331, %v1323
    %v2108 = vpack.c.b16 %v1332, %v1324
    %v2109 = vpack.c.b16 %v1333, %v1325
    %v2110 = vpack.c.b16 %v1334, %v1326
    %v2111 = vpack.c.b16 %v1335, %v1327
    %v2112 = vpack.c.b16 %v1336, %v1328
    %v2113 = vpack.c.b16 %v1337, %v1329
    %v2114 = vpack.c.b16 %v1346, %v1338
    %v2115 = vpack.c.b16 %v1347, %v1339
    %v2116 = vpack.c.b16 %v1348, %v1340
    %v2117 = vpack.c.b16 %v1349, %v1341
    %v2118 = vpack.c.b16 %v1350, %v1342
    %v2119 = vpack.c.b16 %v1351, %v1343
    %v2120 = vpack.c.b16 %v1352, %v1344
    %v2121 = vpack.c.b16 %v1353, %v1345
    %v2122 = vpack.c.b16 %v1362, %v1354
    %v2123 = vpack.c.b16 %v1363, %v1355
    %v2124 = vpack.c.b16 %v1364, %v1356
    %v2125 = vpack.c.b16 %v1365, %v1357
    %v2126 = vpack.c.b16 %v1366, %v1358
    %v2127 = vpack.c.b16 %v1367, %v1359
    %v2128 = vpack.c.b16 %v1368, %v1360
    %v2129 = vpack.c.b16 %v1369, %v1361
    %v2130 = vpack.c.b16 %v1378, %v1370
    %v2131 = vpack.c.b16 %v1379, %v1371
    %v2132 = vpack.c.b16 %v1380, %v1372
    %v2133 = vpack.c.b16 %v1381, %v1373
    %v2134 = vpack.c.b16 %v1382, %v1374
    %v2135 = vpack.c.b16 %v1383, %v1375
    %v2136 = vpack.c.b16 %v1384, %v1376
    %v2137 = vpack.c.b16 %v1385, %v1377
    %v2138 = vpack.c.b16 %v1394, %v1386
    %v2139 = vpack.c.b16 %v1395, %v1387
    %v2140 = vpack.c.b16 %v1396, %v1388
    %v2141 = vpack.c.b16 %v1397, %v1389
    %v2142 = vpack.c.b16 %v1398, %v1390
    %v2143 = vpack.c.b16 %v1399, %v1391
    %v2144 = vpack.c.b16 %v1400, %v1392
    %v2145 = vpack.c.b16 %v1401, %v1393
    %v2146 = vpack.c.b16 %v1410, %v1402
    %v2147 = vpack.c.b16 %v1411, %v1403
    %v2148 = vpack.c.b16 %v1412, %v1404
    %v2149 = vpack.c.b16 %v1413, %v1405
    %v2150 = vpack.c.b16 %v1414, %v1406
    %v2151 = vpack.c.b16 %v1415, %v1407
    %v2152 = vpack.c.b16 %v1416, %v1408
    %v2153 = vpack.c.b16 %v1417, %v1409
    %v2154 = vpack.c.b16 %v1426, %v1418
    %v2155 = vpack.c.b16 %v1427, %v1419
    %v2156 = vpack.c.b16 %v1428, %v1420
    %v2157 = vpack.c.b16 %v1429, %v1421
    %v2158 = vpack.c.b16 %v1430, %v1422
    %v2159 = vpack.c.b16 %v1431, %v1423
    %v2160 = vpack.c.b16 %v1432, %v1424
    %v2161 = vpack.c.b16 %v1433, %v1425
    %v2162 = vpack.c.b16 %v1442, %v1434
    %v2163 = vpack.c.b16 %v1443, %v1435
    %v2164 = vpack.c.b16 %v1444, %v1436
    %v2165 = vpack.c.b16 %v1445, %v1437
    %v2166 = vpack.c.b16 %v1446, %v1438
    %v2167 = vpack.c.b16 %v1447, %v1439
    %v2168 = vpack.c.b16 %v1448, %v1440
    %v2169 = vpack.c.b16 %v1449, %v1441
    %v2170 = vpack.c.b16 %v1458, %v1450
    %v2171 = vpack.c.b16 %v1459, %v1451
    %v2172 = vpack.c.b16 %v1460, %v1452
    %v2173 = vpack.c.b16 %v1461, %v1453
    %v2174 = vpack.c.b16 %v1462, %v1454
    %v2175 = vpack.c.b16 %v1463, %v1455
    %v2176 = vpack.c.b16 %v1464, %v1456
    %v2177 = vpack.c.b16 %v1465, %v1457
    %v2178 = vpack.c.b16 %v1474, %v1466
    %v2179 = vpack.c.b16 %v1475, %v1467
    %v2180 = vpack.c.b16 %v1476, %v1468
    %v2181 = vpack.c.b16 %v1477, %v1469
    %v2182 = vpack.c.b16 %v1478, %v1470
    %v2183 = vpack.c.b16 %v1479, %v1471
    %v2184 = vpack.c.b16 %v1480, %v1472
    %v2185 = vpack.c.b16 %v1481, %v1473
    %v2186 = vpack.c.b16 %v1490, %v1482
    %v2187 = vpack.c.b16 %v1491, %v1483
    %v2188 = vpack.c.b16 %v1492, %v1484
    %v2189 = vpack.c.b16 %v1493, %v1485
    %v2190 = vpack.c.b16 %v1494, %v1486
    %v2191 = vpack.c.b16 %v1495, %v1487
    %v2192 = vpack.c.b16 %v1496, %v1488
    %v2193 = vpack.c.b16 %v1497, %v1489
    %v2194 = vpack.c.b16 %v1506, %v1498
    %v2195 = vpack.c.b16 %v1507, %v1499
    %v2196 = vpack.c.b16 %v1508, %v1500
    %v2197 = vpack.c.b16 %v1509, %v1501
    %v2198 = vpack.c.b16 %v1510, %v1502
    %v2199 = vpack.c.b16 %v1511, %v1503
    %v2200 = vpack.c.b16 %v1512, %v1504
    %v2201 = vpack.c.b16 %v1513, %v1505
    %v2202 = vpack.c.b16 %v1522, %v1514
    %v2203 = vpack.c.b16 %v1523, %v1515
    %v2204 = vpack.c.b16 %v1524, %v1516
    %v2205 = vpack.c.b16 %v1525, %v1517
    %v2206 = vpack.c.b16 %v1526, %v1518
    %v2207 = vpack.c.b16 %v1527, %v1519
    %v2208 = vpack.c.b16 %v1528, %v1520
    %v2209 = vpack.c.b16 %v1529, %v1521
    %v2210 = vpack.c.b16 %v1538, %v1530
    %v2211 = vpack.c.b16 %v1539, %v1531
    %v2212 = vpack.c.b16 %v1540, %v1532
    %v2213 = vpack.c.b16 %v1541, %v1533
    %v2214 = vpack.c.b16 %v1542, %v1534
    %v2215 = vpack.c.b16 %v1543, %v1535
    %v2216 = vpack.c.b16 %v1544, %v1536
    %v2217 = vpack.c.b16 %v1545, %v1537
    %v2218 = vpack.c.b16 %v1554, %v1546
    %v2219 = vpack.c.b16 %v1555, %v1547
    %v2220 = vpack.c.b16 %v1556, %v1548
    %v2221 = vpack.c.b16 %v1557, %v1549
    %v2222 = vpack.c.b16 %v1558, %v1550
    %v2223 = vpack.c.b16 %v1559, %v1551
    %v2224 = vpack.c.b16 %v1560, %v1552
    %v2225 = vpack.c.b16 %v1561, %v1553
    %v2226 = vpack.c.b16 %v1570, %v1562
    %v2227 = vpack.c.b16 %v1571, %v1563
    %v2228 = vpack.c.b16 %v1572, %v1564
    %v2229 = vpack.c.b16 %v1573, %v1565
    %v2230 = vpack.c.b16 %v1574, %v1566
    %v2231 = vpack.c.b16 %v1575, %v1567
    %v2232 = vpack.c.b16 %v1576, %v1568
    %v2233 = vpack.c.b16 %v1577, %v1569
    %v2234 = vpack.c.b16 %v1586, %v1578
    %v2235 = vpack.c.b16 %v1587, %v1579
    %v2236 = vpack.c.b16 %v1588, %v1580
    %v2237 = vpack.c.b16 %v1589, %v1581
    %v2238 = vpack.c.b16 %v1590, %v1582
    %v2239 = vpack.c.b16 %v1591, %v1583
    %v2240 = vpack.c.b16 %v1592, %v1584
    %v2241 = vpack.c.b16 %v1593, %v1585
    %v2242 = vpack.c.b16 %v1602, %v1594
    %v2243 = vpack.c.b16 %v1603, %v1595
    %v2244 = vpack.c.b16 %v1604, %v1596
    %v2245 = vpack.c.b16 %v1605, %v1597
    %v2246 = vpack.c.b16 %v1606, %v1598
    %v2247 = vpack.c.b16 %v1607, %v1599
    %v2248 = vpack.c.b16 %v1608, %v1600
    %v2249 = vpack.c.b16 %v1609, %v1601
    %v2250 = vpack.c.b16 %v1618, %v1610
    %v2251 = vpack.c.b16 %v1619, %v1611
    %v2252 = vpack.c.b16 %v1620, %v1612
    %v2253 = vpack.c.b16 %v1621, %v1613
    %v2254 = vpack.c.b16 %v1622, %v1614
    %v2255 = vpack.c.b16 %v1623, %v1615
    %v2256 = vpack.c.b16 %v1624, %v1616
    %v2257 = vpack.c.b16 %v1625, %v1617
    %v2258 = vpack.c.b16 %v1634, %v1626
    %v2259 = vpack.c.b16 %v1635, %v1627
    %v2260 = vpack.c.b16 %v1636, %v1628
    %v2261 = vpack.c.b16 %v1637, %v1629
    %v2262 = vpack.c.b16 %v1638, %v1630
    %v2263 = vpack.c.b16 %v1639, %v1631
    %v2264 = vpack.c.b16 %v1640, %v1632
    %v2265 = vpack.c.b16 %v1641, %v1633
    %v2266 = vpack.c.b16 %v1650, %v1642
    %v2267 = vpack.c.b16 %v1651, %v1643
    %v2268 = vpack.c.b16 %v1652, %v1644
    %v2269 = vpack.c.b16 %v1653, %v1645
    %v2270 = vpack.c.b16 %v1654, %v1646
    %v2271 = vpack.c.b16 %v1655, %v1647
    %v2272 = vpack.c.b16 %v1656, %v1648
    %v2273 = vpack.c.b16 %v1657, %v1649
    %v2274 = vpack.c.b16 %v1666, %v1658
    %v2275 = vpack.c.b16 %v1667, %v1659
    %v2276 = vpack.c.b16 %v1668, %v1660
    %v2277 = vpack.c.b16 %v1669, %v1661
    %v2278 = vpack.c.b16 %v1670, %v1662
    %v2279 = vpack.c.b16 %v1671, %v1663
    %v2280 = vpack.c.b16 %v1672, %v1664
    %v2281 = vpack.c.b16 %v1673, %v1665
    %v2282 = vpack.c.b16 %v1682, %v1674
    %v2283 = vpack.c.b16 %v1683, %v1675
    %v2284 = vpack.c.b16 %v1684, %v1676
    %v2285 = vpack.c.b16 %v1685, %v1677
    %v2286 = vpack.c.b16 %v1686, %v1678
    %v2287 = vpack.c.b16 %v1687, %v1679
    %v2288 = vpack.c.b16 %v1688, %v1680
    %v2289 = vpack.c.b16 %v1689, %v1681
    %v2290 = vpack.c.b16 %v1698, %v1690
    %v2291 = vpack.c.b16 %v1699, %v1691
    %v2292 = vpack.c.b16 %v1700, %v1692
    %v2293 = vpack.c.b16 %v1701, %v1693
    %v2294 = vpack.c.b16 %v1702, %v1694
    %v2295 = vpack.c.b16 %v1703, %v1695
    %v2296 = vpack.c.b16 %v1704, %v1696
    %v2297 = vpack.c.b16 %v1705, %v1697
    %v2298 = vpack.c.b16 %v1714, %v1706
    %v2299 = vpack.c.b16 %v1715, %v1707
    %v2300 = vpack.c.b16 %v1716, %v1708
    %v2301 = vpack.c.b16 %v1717, %v1709
    %v2302 = vpack.c.b16 %v1718, %v1710
    %v2303 = vpack.c.b16 %v1719, %v1711
    %v2304 = vpack.c.b16 %v1720, %v1712
    %v2305 = vpack.c.b16 %v1721, %v1713
    %v2306 = vpack.c.b16 %v1730, %v1722
    %v2307 = vpack.c.b16 %v1731, %v1723
    %v2308 = vpack.c.b16 %v1732, %v1724
    %v2309 = vpack.c.b16 %v1733, %v1725
    %v2310 = vpack.c.b16 %v1734, %v1726
    %v2311 = vpack.c.b16 %v1735, %v1727
    %v2312 = vpack.c.b16 %v1736, %v1728
    %v2313 = vpack.c.b16 %v1737, %v1729
    %v2314 = vpack.c.b16 %v1746, %v1738
    %v2315 = vpack.c.b16 %v1747, %v1739
    %v2316 = vpack.c.b16 %v1748, %v1740
    %v2317 = vpack.c.b16 %v1749, %v1741
    %v2318 = vpack.c.b16 %v1750, %v1742
    %v2319 = vpack.c.b16 %v1751, %v1743
    %v2320 = vpack.c.b16 %v1752, %v1744
    %v2321 = vpack.c.b16 %v1753, %v1745
    %v2322 = vpack.c.b16 %v1762, %v1754
    %v2323 = vpack.c.b16 %v1763, %v1755
    %v2324 = vpack.c.b16 %v1764, %v1756
    %v2325 = vpack.c.b16 %v1765, %v1757
    %v2326 = vpack.c.b16 %v1766, %v1758
    %v2327 = vpack.c.b16 %v1767, %v1759
    %v2328 = vpack.c.b16 %v1768, %v1760
    %v2329 = vpack.c.b16 %v1769, %v1761
    %v2330 = vpack.c.b16 %v1778, %v1770
    %v2331 = vpack.c.b16 %v1779, %v1771
    %v2332 = vpack.c.b16 %v1780, %v1772
    %v2333 = vpack.c.b16 %v1781, %v1773
    %v2334 = vpack.c.b16 %v1782, %v1774
    %v2335 = vpack.c.b16 %v1783, %v1775
    %v2336 = vpack.c.b16 %v1784, %v1776
    %v2337 = vpack.c.b16 %v1785, %v1777
    %v2338 = vpack.c.b16 %v1794, %v1786
    %v2339 = vpack.c.b16 %v1795, %v1787
    %v2340 = vpack.c.b16 %v1796, %v1788
    %v2341 = vpack.c.b16 %v1797, %v1789
    %v2342 = vpack.c.b16 %v1798, %v1790
    %v2343 = vpack.c.b16 %v1799, %v1791
    %v2344 = vpack.c.b16 %v1800, %v1792
    %v2345 = vpack.c.b16 %v1801, %v1793
    %v2346 = vpack.c.b16 %v1810, %v1802
    %v2347 = vpack.c.b16 %v1811, %v1803
    %v2348 = vpack.c.b16 %v1812, %v1804
    %v2349 = vpack.c.b16 %v1813, %v1805
    %v2350 = vpack.c.b16 %v1814, %v1806
    %v2351 = vpack.c.b16 %v1815, %v1807
    %v2352 = vpack.c.b16 %v1816, %v1808
    %v2353 = vpack.c.b16 %v1817, %v1809
    %v2354 = vpack.c.b16 %v1826, %v1818
    %v2355 = vpack.c.b16 %v1827, %v1819
    %v2356 = vpack.c.b16 %v1828, %v1820
    %v2357 = vpack.c.b16 %v1829, %v1821
    %v2358 = vpack.c.b16 %v1830, %v1822
    %v2359 = vpack.c.b16 %v1831, %v1823
    %v2360 = vpack.c.b16 %v1832, %v1824
    %v2361 = vpack.c.b16 %v1833, %v1825
    %v2362 = vpack.c.b16 %v1842, %v1834
    %v2363 = vpack.c.b16 %v1843, %v1835
    %v2364 = vpack.c.b16 %v1844, %v1836
    %v2365 = vpack.c.b16 %v1845, %v1837
    %v2366 = vpack.c.b16 %v1846, %v1838
    %v2367 = vpack.c.b16 %v1847, %v1839
    %v2368 = vpack.c.b16 %v1848, %v1840
    %v2369 = vpack.c.b16 %v1849, %v1841
    %v2370 = vpack.c.b16 %v1858, %v1850
    %v2371 = vpack.c.b16 %v1859, %v1851
    %v2372 = vpack.c.b16 %v1860, %v1852
    %v2373 = vpack.c.b16 %v1861, %v1853
    %v2374 = vpack.c.b16 %v1862, %v1854
    %v2375 = vpack.c.b16 %v1863, %v1855
    %v2376 = vpack.c.b16 %v1864, %v1856
    %v2377 = vpack.c.b16 %v1865, %v1857
    %v2378 = vpack.c.b16 %v1874, %v1866
    %v2379 = vpack.c.b16 %v1875, %v1867
    %v2380 = vpack.c.b16 %v1876, %v1868
    %v2381 = vpack.c.b16 %v1877, %v1869
    %v2382 = vpack.c.b16 %v1878, %v1870
    %v2383 = vpack.c.b16 %v1879, %v1871
    %v2384 = vpack.c.b16 %v1880, %v1872
    %v2385 = vpack.c.b16 %v1881, %v1873
    %v2386 = vpack.c.b16 %v1890, %v1882
    %v2387 = vpack.c.b16 %v1891, %v1883
    %v2388 = vpack.c.b16 %v1892, %v1884
    %v2389 = vpack.c.b16 %v1893, %v1885
    %v2390 = vpack.c.b16 %v1894, %v1886
    %v2391 = vpack.c.b16 %v1895, %v1887
    %v2392 = vpack.c.b16 %v1896, %v1888
    %v2393 = vpack.c.b16 %v1897, %v1889
    %v2394 = vpack.c.b16 %v1906, %v1898
    %v2395 = vpack.c.b16 %v1907, %v1899
    %v2396 = vpack.c.b16 %v1908, %v1900
    %v2397 = vpack.c.b16 %v1909, %v1901
    %v2398 = vpack.c.b16 %v1910, %v1902
    %v2399 = vpack.c.b16 %v1911, %v1903
    %v2400 = vpack.c.b16 %v1912, %v1904
    %v2401 = vpack.c.b16 %v1913, %v1905
    %v2402 = vpack.c.b16 %v1922, %v1914
    %v2403 = vpack.c.b16 %v1923, %v1915
    %v2404 = vpack.c.b16 %v1924, %v1916
    %v2405 = vpack.c.b16 %v1925, %v1917
    %v2406 = vpack.c.b16 %v1926, %v1918
    %v2407 = vpack.c.b16 %v1927, %v1919
    %v2408 = vpack.c.b16 %v1928, %v1920
    %v2409 = vpack.c.b16 %v1929, %v1921
    %v2410 = vpack.c.b16 %v1938, %v1930
    %v2411 = vpack.c.b16 %v1939, %v1931
    %v2412 = vpack.c.b16 %v1940, %v1932
    %v2413 = vpack.c.b16 %v1941, %v1933
    %v2414 = vpack.c.b16 %v1942, %v1934
    %v2415 = vpack.c.b16 %v1943, %v1935
    %v2416 = vpack.c.b16 %v1944, %v1936
    %v2417 = vpack.c.b16 %v1945, %v1937
    %v2418 = vpack.c.b16 %v1954, %v1946
    %v2419 = vpack.c.b16 %v1955, %v1947
    %v2420 = vpack.c.b16 %v1956, %v1948
    %v2421 = vpack.c.b16 %v1957, %v1949
    %v2422 = vpack.c.b16 %v1958, %v1950
    %v2423 = vpack.c.b16 %v1959, %v1951
    %v2424 = vpack.c.b16 %v1960, %v1952
    %v2425 = vpack.c.b16 %v1961, %v1953
    %v2426 = vpack.c.b16 %v1970, %v1962
    %v2427 = vpack.c.b16 %v1971, %v1963
    %v2428 = vpack.c.b16 %v1972, %v1964
    %v2429 = vpack.c.b16 %v1973, %v1965
    %v2430 = vpack.c.b16 %v1974, %v1966
    %v2431 = vpack.c.b16 %v1975, %v1967
    %v2432 = vpack.c.b16 %v1976, %v1968
    %v2433 = vpack.c.b16 %v1977, %v1969
    %v2434 = vpack.c.b16 %v1986, %v1978
    %v2435 = vpack.c.b16 %v1987, %v1979
    %v2436 = vpack.c.b16 %v1988, %v1980
    %v2437 = vpack.c.b16 %v1989, %v1981
    %v2438 = vpack.c.b16 %v1990, %v1982
    %v2439 = vpack.c.b16 %v1991, %v1983
    %v2440 = vpack.c.b16 %v1992, %v1984
    %v2441 = vpack.c.b16 %v1993, %v1985
    %2890 = vmatprep.subr.bf16.mxu0 %v2051
    %2891 = vmatpush1.bf16.msra.mxu0 %v2050
    %2892 = vmatprep.subr.bf16.mxu0 %v2043
    %2893 = vmatpush1.bf16.msra.mxu0 %v2042
    %2894 = vmatprep.subr.bf16.mxu0 %v2035
    %2895 = vmatpush1.bf16.msra.mxu0 %v2034
    %2896 = vmatprep.subr.bf16.mxu0 %v2027
    %2897 = vmatpush1.bf16.msra.mxu0 %v2026
    %2898 = vmatprep.subr.bf16.mxu0 %v2019
    %2899 = vmatpush1.bf16.msra.mxu0 %v2018
    %2900 = vmatprep.subr.bf16.mxu0 %v2011
    %2901 = vmatpush1.bf16.msra.mxu0 %v2010
    %2902 = vmatprep.subr.bf16.mxu0 %v2003
    %2903 = vmatpush1.bf16.msra.mxu0 %v2002
    %2904 = vmatprep.subr.bf16.mxu0 %v1995
    %2905 = vmatpush1.bf16.msra.mxu0 %v1994
    %2906 = vmatprep.subr.bf16.mxu0 %v2115
    %2907 = vmatpush2.bf16.msra.mxu0 %v2114
    %2908 = vmatprep.subr.bf16.mxu0 %v2107
    %2909 = vmatpush2.bf16.msra.mxu0 %v2106
    %2910 = vmatprep.subr.bf16.mxu0 %v2099
    %2911 = vmatpush2.bf16.msra.mxu0 %v2098
    %2912 = vmatprep.subr.bf16.mxu0 %v2091
    %2913 = vmatpush2.bf16.msra.mxu0 %v2090
    %2914 = vmatprep.subr.bf16.mxu0 %v2083
    %2915 = vmatpush2.bf16.msra.mxu0 %v2082
    %2916 = vmatprep.subr.bf16.mxu0 %v2075
    %2917 = vmatpush2.bf16.msra.mxu0 %v2074
    %2918 = vmatprep.subr.bf16.mxu0 %v2067
    %2919 = vmatpush2.bf16.msra.mxu0 %v2066
    %2920 = vmatprep.subr.bf16.mxu0 %v2059
    %2921 = vmatpush2.bf16.msra.mxu0 %v2058
    %2922 = vmatprep.mubr.bf16.mxu0 %v154
    %2923 = vmatmul.mubr.bf16.gmra.mxu0 %v153
    %v2924 = vpop.f32.mrf.mxu0
    %v2925 = vadd.f32 %v613, %v2924
    %v2926 = vpop.f32.mrf.mxu0
    %v2927 = vadd.f32 %v617, %v2926
    %v2928 = vpop.f32.mrf.mxu0
    %v2929 = vpop.f32.mrf.mxu0
    %2930 = vdwg.mxu0
    %2931 = vmatprep.subr.bf16.mxu0 %v2179
    %2932 = vmatpush1.bf16.msra.mxu0 %v2178
    %2933 = vmatprep.subr.bf16.mxu0 %v2171
    %2934 = vmatpush1.bf16.msra.mxu0 %v2170
    %2935 = vmatprep.subr.bf16.mxu0 %v2163
    %2936 = vmatpush1.bf16.msra.mxu0 %v2162
    %2937 = vmatprep.subr.bf16.mxu0 %v2155
    %2938 = vmatpush1.bf16.msra.mxu0 %v2154
    %2939 = vmatprep.subr.bf16.mxu0 %v2147
    %2940 = vmatpush1.bf16.msra.mxu0 %v2146
    %2941 = vmatprep.subr.bf16.mxu0 %v2139
    %2942 = vmatpush1.bf16.msra.mxu0 %v2138
    %2943 = vmatprep.subr.bf16.mxu0 %v2131
    %2944 = vmatpush1.bf16.msra.mxu0 %v2130
    %2945 = vmatprep.subr.bf16.mxu0 %v2123
    %2946 = vmatpush1.bf16.msra.mxu0 %v2122
    %2947 = vmatprep.subr.bf16.mxu0 %v2243
    %2948 = vmatpush2.bf16.msra.mxu0 %v2242
    %2949 = vmatprep.subr.bf16.mxu0 %v2235
    %2950 = vmatpush2.bf16.msra.mxu0 %v2234
    %2951 = vmatprep.subr.bf16.mxu0 %v2227
    %2952 = vmatpush2.bf16.msra.mxu0 %v2226
    %2953 = vmatprep.subr.bf16.mxu0 %v2219
    %2954 = vmatpush2.bf16.msra.mxu0 %v2218
    %2955 = vmatprep.subr.bf16.mxu0 %v2211
    %2956 = vmatpush2.bf16.msra.mxu0 %v2210
    %2957 = vmatprep.subr.bf16.mxu0 %v2203
    %2958 = vmatpush2.bf16.msra.mxu0 %v2202
    %2959 = vmatprep.subr.bf16.mxu0 %v2195
    %2960 = vmatpush2.bf16.msra.mxu0 %v2194
    %2961 = vmatprep.subr.bf16.mxu0 %v2187
    %2962 = vmatpush2.bf16.msra.mxu0 %v2186
    %2963 = vmatprep.mubr.bf16.mxu0 %v156
    %2964 = vmatmul.mubr.bf16.gmra.mxu0 %v155
    %v2965 = vpop.f32.mrf.mxu0
    %v2966 = vadd.f32 %v2925, %v2965
    %v2967 = vpop.f32.mrf.mxu0
    %v2968 = vadd.f32 %v2927, %v2967
    %v2969 = vpop.f32.mrf.mxu0
    %v2970 = vpop.f32.mrf.mxu0
    %2971 = vdwg.mxu0
    %2972 = vmatprep.subr.bf16.mxu0 %v2307
    %2973 = vmatpush1.bf16.msra.mxu0 %v2306
    %2974 = vmatprep.subr.bf16.mxu0 %v2299
    %2975 = vmatpush1.bf16.msra.mxu0 %v2298
    %2976 = vmatprep.subr.bf16.mxu0 %v2291
    %2977 = vmatpush1.bf16.msra.mxu0 %v2290
    %2978 = vmatprep.subr.bf16.mxu0 %v2283
    %2979 = vmatpush1.bf16.msra.mxu0 %v2282
    %2980 = vmatprep.subr.bf16.mxu0 %v2275
    %2981 = vmatpush1.bf16.msra.mxu0 %v2274
    %2982 = vmatprep.subr.bf16.mxu0 %v2267
    %2983 = vmatpush1.bf16.msra.mxu0 %v2266
    %2984 = vmatprep.subr.bf16.mxu0 %v2259
    %2985 = vmatpush1.bf16.msra.mxu0 %v2258
    %2986 = vmatprep.subr.bf16.mxu0 %v2251
    %2987 = vmatpush1.bf16.msra.mxu0 %v2250
    %2988 = vmatprep.subr.bf16.mxu0 %v2371
    %2989 = vmatpush2.bf16.msra.mxu0 %v2370
    %2990 = vmatprep.subr.bf16.mxu0 %v2363
    %2991 = vmatpush2.bf16.msra.mxu0 %v2362
    %2992 = vmatprep.subr.bf16.mxu0 %v2355
    %2993 = vmatpush2.bf16.msra.mxu0 %v2354
    %2994 = vmatprep.subr.bf16.mxu0 %v2347
    %2995 = vmatpush2.bf16.msra.mxu0 %v2346
    %2996 = vmatprep.subr.bf16.mxu0 %v2339
    %2997 = vmatpush2.bf16.msra.mxu0 %v2338
    %2998 = vmatprep.subr.bf16.mxu0 %v2331
    %2999 = vmatpush2.bf16.msra.mxu0 %v2330
    %3000 = vmatprep.subr.bf16.mxu0 %v2323
    %3001 = vmatpush2.bf16.msra.mxu0 %v2322
    %3002 = vmatprep.subr.bf16.mxu0 %v2315
    %3003 = vmatpush2.bf16.msra.mxu0 %v2314
    %3004 = vmatprep.mubr.bf16.mxu0 %v158
    %3005 = vmatmul.mubr.bf16.gmra.mxu0 %v157
    %v3006 = vpop.f32.mrf.mxu0
    %v3007 = vadd.f32 %v2966, %v3006
    %v3008 = vpop.f32.mrf.mxu0
    %v3009 = vadd.f32 %v2968, %v3008
    %v3010 = vpop.f32.mrf.mxu0
    %v3011 = vpop.f32.mrf.mxu0
    %3012 = vdwg.mxu0
    %3013 = vmatprep.subr.bf16.mxu0 %v2435
    %3014 = vmatpush1.bf16.msra.mxu0 %v2434
    %3015 = vmatprep.subr.bf16.mxu0 %v2427
    %3016 = vmatpush1.bf16.msra.mxu0 %v2426
    %3017 = vmatprep.subr.bf16.mxu0 %v2419
    %3018 = vmatpush1.bf16.msra.mxu0 %v2418
    %3019 = vmatprep.subr.bf16.mxu0 %v2411
    %3020 = vmatpush1.bf16.msra.mxu0 %v2410
    %3021 = vmatprep.subr.bf16.mxu0 %v2403
    %3022 = vmatpush1.bf16.msra.mxu0 %v2402
    %3023 = vmatprep.subr.bf16.mxu0 %v2395
    %3024 = vmatpush1.bf16.msra.mxu0 %v2394
    %3025 = vmatprep.subr.bf16.mxu0 %v2387
    %3026 = vmatpush1.bf16.msra.mxu0 %v2386
    %3027 = vmatprep.subr.bf16.mxu0 %v2379
    %3028 = vmatpush1.bf16.msra.mxu0 %v2378
    %3029 = vmatprep.subr.bf16.mxu0 0
    %3030 = vmatpush2.bf16.msra.mxu0 0
    %3031 = vmatprep.subr.bf16.mxu0 0
    %3032 = vmatpush2.bf16.msra.mxu0 0
    %3033 = vmatprep.subr.bf16.mxu0 0
    %3034 = vmatpush2.bf16.msra.mxu0 0
    %3035 = vmatprep.subr.bf16.mxu0 0
    %3036 = vmatpush2.bf16.msra.mxu0 0
    %3037 = vmatprep.subr.bf16.mxu0 0
    %3038 = vmatpush2.bf16.msra.mxu0 0
    %3039 = vmatprep.subr.bf16.mxu0 0
    %3040 = vmatpush2.bf16.msra.mxu0 0
    %3041 = vmatprep.subr.bf16.mxu0 0
    %3042 = vmatpush2.bf16.msra.mxu0 0
    %3043 = vmatprep.subr.bf16.mxu0 0
    %3044 = vmatpush2.bf16.msra.mxu0 0
    %3045 = vmatprep.mubr.bf16.mxu0 0
    %3046 = vmatmul.mubr.bf16.gmra.mxu0 %v159
    %v3047 = vpop.f32.mrf.mxu0
    %v3048 = vadd.f32 %v3007, %v3047
    %v3049 = vpop.f32.mrf.mxu0
    %v3050 = vadd.f32 %v3009, %v3049
    %v3051 = vpop.f32.mrf.mxu0
    %v3052 = vpop.f32.mrf.mxu0
    %3053 = vdwg.mxu0
    %3054 = vmatprep.subr.bf16.mxu0 %v2053
    %3055 = vmatpush1.bf16.msra.mxu0 %v2052
    %3056 = vmatprep.subr.bf16.mxu0 %v2045
    %3057 = vmatpush1.bf16.msra.mxu0 %v2044
    %3058 = vmatprep.subr.bf16.mxu0 %v2037
    %3059 = vmatpush1.bf16.msra.mxu0 %v2036
    %3060 = vmatprep.subr.bf16.mxu0 %v2029
    %3061 = vmatpush1.bf16.msra.mxu0 %v2028
    %3062 = vmatprep.subr.bf16.mxu0 %v2021
    %3063 = vmatpush1.bf16.msra.mxu0 %v2020
    %3064 = vmatprep.subr.bf16.mxu0 %v2013
    %3065 = vmatpush1.bf16.msra.mxu0 %v2012
    %3066 = vmatprep.subr.bf16.mxu0 %v2005
    %3067 = vmatpush1.bf16.msra.mxu0 %v2004
    %3068 = vmatprep.subr.bf16.mxu0 %v1997
    %3069 = vmatpush1.bf16.msra.mxu0 %v1996
    %3070 = vmatprep.subr.bf16.mxu0 %v2117
    %3071 = vmatpush2.bf16.msra.mxu0 %v2116
    %3072 = vmatprep.subr.bf16.mxu0 %v2109
    %3073 = vmatpush2.bf16.msra.mxu0 %v2108
    %3074 = vmatprep.subr.bf16.mxu0 %v2101
    %3075 = vmatpush2.bf16.msra.mxu0 %v2100
    %3076 = vmatprep.subr.bf16.mxu0 %v2093
    %3077 = vmatpush2.bf16.msra.mxu0 %v2092
    %3078 = vmatprep.subr.bf16.mxu0 %v2085
    %3079 = vmatpush2.bf16.msra.mxu0 %v2084
    %3080 = vmatprep.subr.bf16.mxu0 %v2077
    %3081 = vmatpush2.bf16.msra.mxu0 %v2076
    %3082 = vmatprep.subr.bf16.mxu0 %v2069
    %3083 = vmatpush2.bf16.msra.mxu0 %v2068
    %3084 = vmatprep.subr.bf16.mxu0 %v2061
    %3085 = vmatpush2.bf16.msra.mxu0 %v2060
    %3086 = vmatprep.mubr.bf16.mxu0 %v154
    %3087 = vmatmul.mubr.bf16.gmra.mxu0 %v153
    %v3088 = vpop.f32.mrf.mxu0
    %v3089 = vadd.f32 %v621, %v3088
    %v3090 = vpop.f32.mrf.mxu0
    %v3091 = vadd.f32 %v625, %v3090
    %v3092 = vpop.f32.mrf.mxu0
    %v3093 = vpop.f32.mrf.mxu0
    %3094 = vdwg.mxu0
    %3095 = vmatprep.subr.bf16.mxu0 %v2181
    %3096 = vmatpush1.bf16.msra.mxu0 %v2180
    %3097 = vmatprep.subr.bf16.mxu0 %v2173
    %3098 = vmatpush1.bf16.msra.mxu0 %v2172
    %3099 = vmatprep.subr.bf16.mxu0 %v2165
    %3100 = vmatpush1.bf16.msra.mxu0 %v2164
    %3101 = vmatprep.subr.bf16.mxu0 %v2157
    %3102 = vmatpush1.bf16.msra.mxu0 %v2156
    %3103 = vmatprep.subr.bf16.mxu0 %v2149
    %3104 = vmatpush1.bf16.msra.mxu0 %v2148
    %3105 = vmatprep.subr.bf16.mxu0 %v2141
    %3106 = vmatpush1.bf16.msra.mxu0 %v2140
    %3107 = vmatprep.subr.bf16.mxu0 %v2133
    %3108 = vmatpush1.bf16.msra.mxu0 %v2132
    %3109 = vmatprep.subr.bf16.mxu0 %v2125
    %3110 = vmatpush1.bf16.msra.mxu0 %v2124
    %3111 = vmatprep.subr.bf16.mxu0 %v2245
    %3112 = vmatpush2.bf16.msra.mxu0 %v2244
    %3113 = vmatprep.subr.bf16.mxu0 %v2237
    %3114 = vmatpush2.bf16.msra.mxu0 %v2236
    %3115 = vmatprep.subr.bf16.mxu0 %v2229
    %3116 = vmatpush2.bf16.msra.mxu0 %v2228
    %3117 = vmatprep.subr.bf16.mxu0 %v2221
    %3118 = vmatpush2.bf16.msra.mxu0 %v2220
    %3119 = vmatprep.subr.bf16.mxu0 %v2213
    %3120 = vmatpush2.bf16.msra.mxu0 %v2212
    %3121 = vmatprep.subr.bf16.mxu0 %v2205
    %3122 = vmatpush2.bf16.msra.mxu0 %v2204
    %3123 = vmatprep.subr.bf16.mxu0 %v2197
    %3124 = vmatpush2.bf16.msra.mxu0 %v2196
    %3125 = vmatprep.subr.bf16.mxu0 %v2189
    %3126 = vmatpush2.bf16.msra.mxu0 %v2188
    %3127 = vmatprep.mubr.bf16.mxu0 %v156
    %3128 = vmatmul.mubr.bf16.gmra.mxu0 %v155
    %v3129 = vpop.f32.mrf.mxu0
    %v3130 = vadd.f32 %v3089, %v3129
    %v3131 = vpop.f32.mrf.mxu0
    %v3132 = vadd.f32 %v3091, %v3131
    %v3133 = vpop.f32.mrf.mxu0
    %v3134 = vpop.f32.mrf.mxu0
    %3135 = vdwg.mxu0
    %3136 = vmatprep.subr.bf16.mxu0 %v2309
    %3137 = vmatpush1.bf16.msra.mxu0 %v2308
    %3138 = vmatprep.subr.bf16.mxu0 %v2301
    %3139 = vmatpush1.bf16.msra.mxu0 %v2300
    %3140 = vmatprep.subr.bf16.mxu0 %v2293
    %3141 = vmatpush1.bf16.msra.mxu0 %v2292
    %3142 = vmatprep.subr.bf16.mxu0 %v2285
    %3143 = vmatpush1.bf16.msra.mxu0 %v2284
    %3144 = vmatprep.subr.bf16.mxu0 %v2277
    %3145 = vmatpush1.bf16.msra.mxu0 %v2276
    %3146 = vmatprep.subr.bf16.mxu0 %v2269
    %3147 = vmatpush1.bf16.msra.mxu0 %v2268
    %3148 = vmatprep.subr.bf16.mxu0 %v2261
    %3149 = vmatpush1.bf16.msra.mxu0 %v2260
    %3150 = vmatprep.subr.bf16.mxu0 %v2253
    %3151 = vmatpush1.bf16.msra.mxu0 %v2252
    %3152 = vmatprep.subr.bf16.mxu0 %v2373
    %3153 = vmatpush2.bf16.msra.mxu0 %v2372
    %3154 = vmatprep.subr.bf16.mxu0 %v2365
    %3155 = vmatpush2.bf16.msra.mxu0 %v2364
    %3156 = vmatprep.subr.bf16.mxu0 %v2357
    %3157 = vmatpush2.bf16.msra.mxu0 %v2356
    %3158 = vmatprep.subr.bf16.mxu0 %v2349
    %3159 = vmatpush2.bf16.msra.mxu0 %v2348
    %3160 = vmatprep.subr.bf16.mxu0 %v2341
    %3161 = vmatpush2.bf16.msra.mxu0 %v2340
    %3162 = vmatprep.subr.bf16.mxu0 %v2333
    %3163 = vmatpush2.bf16.msra.mxu0 %v2332
    %3164 = vmatprep.subr.bf16.mxu0 %v2325
    %3165 = vmatpush2.bf16.msra.mxu0 %v2324
    %3166 = vmatprep.subr.bf16.mxu0 %v2317
    %3167 = vmatpush2.bf16.msra.mxu0 %v2316
    %3168 = vmatprep.mubr.bf16.mxu0 %v158
    %3169 = vmatmul.mubr.bf16.gmra.mxu0 %v157
    %v3170 = vpop.f32.mrf.mxu0
    %v3171 = vadd.f32 %v3130, %v3170
    %v3172 = vpop.f32.mrf.mxu0
    %v3173 = vadd.f32 %v3132, %v3172
    %v3174 = vpop.f32.mrf.mxu0
    %v3175 = vpop.f32.mrf.mxu0
    %3176 = vdwg.mxu0
    %3177 = vmatprep.subr.bf16.mxu0 %v2437
    %3178 = vmatpush1.bf16.msra.mxu0 %v2436
    %3179 = vmatprep.subr.bf16.mxu0 %v2429
    %3180 = vmatpush1.bf16.msra.mxu0 %v2428
    %3181 = vmatprep.subr.bf16.mxu0 %v2421
    %3182 = vmatpush1.bf16.msra.mxu0 %v2420
    %3183 = vmatprep.subr.bf16.mxu0 %v2413
    %3184 = vmatpush1.bf16.msra.mxu0 %v2412
    %3185 = vmatprep.subr.bf16.mxu0 %v2405
    %3186 = vmatpush1.bf16.msra.mxu0 %v2404
    %3187 = vmatprep.subr.bf16.mxu0 %v2397
    %3188 = vmatpush1.bf16.msra.mxu0 %v2396
    %3189 = vmatprep.subr.bf16.mxu0 %v2389
    %3190 = vmatpush1.bf16.msra.mxu0 %v2388
    %3191 = vmatprep.subr.bf16.mxu0 %v2381
    %3192 = vmatpush1.bf16.msra.mxu0 %v2380
    %3193 = vmatprep.subr.bf16.mxu0 0
    %3194 = vmatpush2.bf16.msra.mxu0 0
    %3195 = vmatprep.subr.bf16.mxu0 0
    %3196 = vmatpush2.bf16.msra.mxu0 0
    %3197 = vmatprep.subr.bf16.mxu0 0
    %3198 = vmatpush2.bf16.msra.mxu0 0
    %3199 = vmatprep.subr.bf16.mxu0 0
    %3200 = vmatpush2.bf16.msra.mxu0 0
    %3201 = vmatprep.subr.bf16.mxu0 0
    %3202 = vmatpush2.bf16.msra.mxu0 0
    %3203 = vmatprep.subr.bf16.mxu0 0
    %3204 = vmatpush2.bf16.msra.mxu0 0
    %3205 = vmatprep.subr.bf16.mxu0 0
    %3206 = vmatpush2.bf16.msra.mxu0 0
    %3207 = vmatprep.subr.bf16.mxu0 0
    %3208 = vmatpush2.bf16.msra.mxu0 0
    %3209 = vmatprep.mubr.bf16.mxu0 0
    %3210 = vmatmul.mubr.bf16.gmra.mxu0 %v159
    %v3211 = vpop.f32.mrf.mxu0
    %v3212 = vadd.f32 %v3171, %v3211
    %v3213 = vpop.f32.mrf.mxu0
    %v3214 = vadd.f32 %v3173, %v3213
    %v3215 = vpop.f32.mrf.mxu0
    %v3216 = vpop.f32.mrf.mxu0
    %3217 = vdwg.mxu0
    %3218 = vmatprep.subr.bf16.mxu0 %v2055
    %3219 = vmatpush1.bf16.msra.mxu0 %v2054
    %3220 = vmatprep.subr.bf16.mxu0 %v2047
    %3221 = vmatpush1.bf16.msra.mxu0 %v2046
    %3222 = vmatprep.subr.bf16.mxu0 %v2039
    %3223 = vmatpush1.bf16.msra.mxu0 %v2038
    %3224 = vmatprep.subr.bf16.mxu0 %v2031
    %3225 = vmatpush1.bf16.msra.mxu0 %v2030
    %3226 = vmatprep.subr.bf16.mxu0 %v2023
    %3227 = vmatpush1.bf16.msra.mxu0 %v2022
    %3228 = vmatprep.subr.bf16.mxu0 %v2015
    %3229 = vmatpush1.bf16.msra.mxu0 %v2014
    %3230 = vmatprep.subr.bf16.mxu0 %v2007
    %3231 = vmatpush1.bf16.msra.mxu0 %v2006
    %3232 = vmatprep.subr.bf16.mxu0 %v1999
    %3233 = vmatpush1.bf16.msra.mxu0 %v1998
    %3234 = vmatprep.subr.bf16.mxu0 %v2119
    %3235 = vmatpush2.bf16.msra.mxu0 %v2118
    %3236 = vmatprep.subr.bf16.mxu0 %v2111
    %3237 = vmatpush2.bf16.msra.mxu0 %v2110
    %3238 = vmatprep.subr.bf16.mxu0 %v2103
    %3239 = vmatpush2.bf16.msra.mxu0 %v2102
    %3240 = vmatprep.subr.bf16.mxu0 %v2095
    %3241 = vmatpush2.bf16.msra.mxu0 %v2094
    %3242 = vmatprep.subr.bf16.mxu0 %v2087
    %3243 = vmatpush2.bf16.msra.mxu0 %v2086
    %3244 = vmatprep.subr.bf16.mxu0 %v2079
    %3245 = vmatpush2.bf16.msra.mxu0 %v2078
    %3246 = vmatprep.subr.bf16.mxu0 %v2071
    %3247 = vmatpush2.bf16.msra.mxu0 %v2070
    %3248 = vmatprep.subr.bf16.mxu0 %v2063
    %3249 = vmatpush2.bf16.msra.mxu0 %v2062
    %3250 = vmatprep.mubr.bf16.mxu0 %v154
    %3251 = vmatmul.mubr.bf16.gmra.mxu0 %v153
    %v3252 = vpop.f32.mrf.mxu0
    %v3253 = vadd.f32 %v629, %v3252
    %v3254 = vpop.f32.mrf.mxu0
    %v3255 = vadd.f32 %v633, %v3254
    %v3256 = vpop.f32.mrf.mxu0
    %v3257 = vpop.f32.mrf.mxu0
    %3258 = vdwg.mxu0
    %3259 = vmatprep.subr.bf16.mxu0 %v2183
    %3260 = vmatpush1.bf16.msra.mxu0 %v2182
    %3261 = vmatprep.subr.bf16.mxu0 %v2175
    %3262 = vmatpush1.bf16.msra.mxu0 %v2174
    %3263 = vmatprep.subr.bf16.mxu0 %v2167
    %3264 = vmatpush1.bf16.msra.mxu0 %v2166
    %3265 = vmatprep.subr.bf16.mxu0 %v2159
    %3266 = vmatpush1.bf16.msra.mxu0 %v2158
    %3267 = vmatprep.subr.bf16.mxu0 %v2151
    %3268 = vmatpush1.bf16.msra.mxu0 %v2150
    %3269 = vmatprep.subr.bf16.mxu0 %v2143
    %3270 = vmatpush1.bf16.msra.mxu0 %v2142
    %3271 = vmatprep.subr.bf16.mxu0 %v2135
    %3272 = vmatpush1.bf16.msra.mxu0 %v2134
    %3273 = vmatprep.subr.bf16.mxu0 %v2127
    %3274 = vmatpush1.bf16.msra.mxu0 %v2126
    %3275 = vmatprep.subr.bf16.mxu0 %v2247
    %3276 = vmatpush2.bf16.msra.mxu0 %v2246
    %3277 = vmatprep.subr.bf16.mxu0 %v2239
    %3278 = vmatpush2.bf16.msra.mxu0 %v2238
    %3279 = vmatprep.subr.bf16.mxu0 %v2231
    %3280 = vmatpush2.bf16.msra.mxu0 %v2230
    %3281 = vmatprep.subr.bf16.mxu0 %v2223
    %3282 = vmatpush2.bf16.msra.mxu0 %v2222
    %3283 = vmatprep.subr.bf16.mxu0 %v2215
    %3284 = vmatpush2.bf16.msra.mxu0 %v2214
    %3285 = vmatprep.subr.bf16.mxu0 %v2207
    %3286 = vmatpush2.bf16.msra.mxu0 %v2206
    %3287 = vmatprep.subr.bf16.mxu0 %v2199
    %3288 = vmatpush2.bf16.msra.mxu0 %v2198
    %3289 = vmatprep.subr.bf16.mxu0 %v2191
    %3290 = vmatpush2.bf16.msra.mxu0 %v2190
    %3291 = vmatprep.mubr.bf16.mxu0 %v156
    %3292 = vmatmul.mubr.bf16.gmra.mxu0 %v155
    %v3293 = vpop.f32.mrf.mxu0
    %v3294 = vadd.f32 %v3253, %v3293
    %v3295 = vpop.f32.mrf.mxu0
    %v3296 = vadd.f32 %v3255, %v3295
    %v3297 = vpop.f32.mrf.mxu0
    %v3298 = vpop.f32.mrf.mxu0
    %3299 = vdwg.mxu0
    %3300 = vmatprep.subr.bf16.mxu0 %v2311
    %3301 = vmatpush1.bf16.msra.mxu0 %v2310
    %3302 = vmatprep.subr.bf16.mxu0 %v2303
    %3303 = vmatpush1.bf16.msra.mxu0 %v2302
    %3304 = vmatprep.subr.bf16.mxu0 %v2295
    %3305 = vmatpush1.bf16.msra.mxu0 %v2294
    %3306 = vmatprep.subr.bf16.mxu0 %v2287
    %3307 = vmatpush1.bf16.msra.mxu0 %v2286
    %3308 = vmatprep.subr.bf16.mxu0 %v2279
    %3309 = vmatpush1.bf16.msra.mxu0 %v2278
    %3310 = vmatprep.subr.bf16.mxu0 %v2271
    %3311 = vmatpush1.bf16.msra.mxu0 %v2270
    %3312 = vmatprep.subr.bf16.mxu0 %v2263
    %3313 = vmatpush1.bf16.msra.mxu0 %v2262
    %3314 = vmatprep.subr.bf16.mxu0 %v2255
    %3315 = vmatpush1.bf16.msra.mxu0 %v2254
    %3316 = vmatprep.subr.bf16.mxu0 %v2375
    %3317 = vmatpush2.bf16.msra.mxu0 %v2374
    %3318 = vmatprep.subr.bf16.mxu0 %v2367
    %3319 = vmatpush2.bf16.msra.mxu0 %v2366
    %3320 = vmatprep.subr.bf16.mxu0 %v2359
    %3321 = vmatpush2.bf16.msra.mxu0 %v2358
    %3322 = vmatprep.subr.bf16.mxu0 %v2351
    %3323 = vmatpush2.bf16.msra.mxu0 %v2350
    %3324 = vmatprep.subr.bf16.mxu0 %v2343
    %3325 = vmatpush2.bf16.msra.mxu0 %v2342
    %3326 = vmatprep.subr.bf16.mxu0 %v2335
    %3327 = vmatpush2.bf16.msra.mxu0 %v2334
    %3328 = vmatprep.subr.bf16.mxu0 %v2327
    %3329 = vmatpush2.bf16.msra.mxu0 %v2326
    %3330 = vmatprep.subr.bf16.mxu0 %v2319
    %3331 = vmatpush2.bf16.msra.mxu0 %v2318
    %3332 = vmatprep.mubr.bf16.mxu0 %v158
    %3333 = vmatmul.mubr.bf16.gmra.mxu0 %v157
    %v3334 = vpop.f32.mrf.mxu0
    %v3335 = vadd.f32 %v3294, %v3334
    %v3336 = vpop.f32.mrf.mxu0
    %v3337 = vadd.f32 %v3296, %v3336
    %v3338 = vpop.f32.mrf.mxu0
    %v3339 = vpop.f32.mrf.mxu0
    %3340 = vdwg.mxu0
    %3341 = vmatprep.subr.bf16.mxu0 %v2439
    %3342 = vmatpush1.bf16.msra.mxu0 %v2438
    %3343 = vmatprep.subr.bf16.mxu0 %v2431
    %3344 = vmatpush1.bf16.msra.mxu0 %v2430
    %3345 = vmatprep.subr.bf16.mxu0 %v2423
    %3346 = vmatpush1.bf16.msra.mxu0 %v2422
    %3347 = vmatprep.subr.bf16.mxu0 %v2415
    %3348 = vmatpush1.bf16.msra.mxu0 %v2414
    %3349 = vmatprep.subr.bf16.mxu0 %v2407
    %3350 = vmatpush1.bf16.msra.mxu0 %v2406
    %3351 = vmatprep.subr.bf16.mxu0 %v2399
    %3352 = vmatpush1.bf16.msra.mxu0 %v2398
    %3353 = vmatprep.subr.bf16.mxu0 %v2391
    %3354 = vmatpush1.bf16.msra.mxu0 %v2390
    %3355 = vmatprep.subr.bf16.mxu0 %v2383
    %3356 = vmatpush1.bf16.msra.mxu0 %v2382
    %3357 = vmatprep.subr.bf16.mxu0 0
    %3358 = vmatpush2.bf16.msra.mxu0 0
    %3359 = vmatprep.subr.bf16.mxu0 0
    %3360 = vmatpush2.bf16.msra.mxu0 0
    %3361 = vmatprep.subr.bf16.mxu0 0
    %3362 = vmatpush2.bf16.msra.mxu0 0
    %3363 = vmatprep.subr.bf16.mxu0 0
    %3364 = vmatpush2.bf16.msra.mxu0 0
    %3365 = vmatprep.subr.bf16.mxu0 0
    %3366 = vmatpush2.bf16.msra.mxu0 0
    %3367 = vmatprep.subr.bf16.mxu0 0
    %3368 = vmatpush2.bf16.msra.mxu0 0
    %3369 = vmatprep.subr.bf16.mxu0 0
    %3370 = vmatpush2.bf16.msra.mxu0 0
    %3371 = vmatprep.subr.bf16.mxu0 0
    %3372 = vmatpush2.bf16.msra.mxu0 0
    %3373 = vmatprep.mubr.bf16.mxu0 0
    %3374 = vmatmul.mubr.bf16.gmra.mxu0 %v159
    %v3375 = vpop.f32.mrf.mxu0
    %v3376 = vadd.f32 %v3335, %v3375
    %v3377 = vpop.f32.mrf.mxu0
    %v3378 = vadd.f32 %v3337, %v3377
    %v3379 = vpop.f32.mrf.mxu0
    %v3380 = vpop.f32.mrf.mxu0
    %3381 = vdwg.mxu0
    %3382 = vmatprep.subr.bf16.mxu0 %v2057
    %3383 = vmatpush1.bf16.msra.mxu0 %v2056
    %3384 = vmatprep.subr.bf16.mxu0 %v2049
    %3385 = vmatpush1.bf16.msra.mxu0 %v2048
    %3386 = vmatprep.subr.bf16.mxu0 %v2041
    %3387 = vmatpush1.bf16.msra.mxu0 %v2040
    %3388 = vmatprep.subr.bf16.mxu0 %v2033
    %3389 = vmatpush1.bf16.msra.mxu0 %v2032
    %3390 = vmatprep.subr.bf16.mxu0 %v2025
    %3391 = vmatpush1.bf16.msra.mxu0 %v2024
    %3392 = vmatprep.subr.bf16.mxu0 %v2017
    %3393 = vmatpush1.bf16.msra.mxu0 %v2016
    %3394 = vmatprep.subr.bf16.mxu0 %v2009
    %3395 = vmatpush1.bf16.msra.mxu0 %v2008
    %3396 = vmatprep.subr.bf16.mxu0 %v2001
    %3397 = vmatpush1.bf16.msra.mxu0 %v2000
    %3398 = vmatprep.subr.bf16.mxu0 %v2121
    %3399 = vmatpush2.bf16.msra.mxu0 %v2120
    %3400 = vmatprep.subr.bf16.mxu0 %v2113
    %3401 = vmatpush2.bf16.msra.mxu0 %v2112
    %3402 = vmatprep.subr.bf16.mxu0 %v2105
    %3403 = vmatpush2.bf16.msra.mxu0 %v2104
    %3404 = vmatprep.subr.bf16.mxu0 %v2097
    %3405 = vmatpush2.bf16.msra.mxu0 %v2096
    %3406 = vmatprep.subr.bf16.mxu0 %v2089
    %3407 = vmatpush2.bf16.msra.mxu0 %v2088
    %3408 = vmatprep.subr.bf16.mxu0 %v2081
    %3409 = vmatpush2.bf16.msra.mxu0 %v2080
    %3410 = vmatprep.subr.bf16.mxu0 %v2073
    %3411 = vmatpush2.bf16.msra.mxu0 %v2072
    %3412 = vmatprep.subr.bf16.mxu0 %v2065
    %3413 = vmatpush2.bf16.msra.mxu0 %v2064
    %3414 = vmatprep.mubr.bf16.mxu0 %v154
    %3415 = vmatmul.mubr.bf16.gmra.mxu0 %v153
    %v3416 = vpop.f32.mrf.mxu0
    %v3417 = vadd.f32 %v637, %v3416
    %v3418 = vpop.f32.mrf.mxu0
    %v3419 = vadd.f32 %v641, %v3418
    %v3420 = vpop.f32.mrf.mxu0
    %v3421 = vpop.f32.mrf.mxu0
    %3422 = vdwg.mxu0
    %3423 = vmatprep.subr.bf16.mxu0 %v2185
    %3424 = vmatpush1.bf16.msra.mxu0 %v2184
    %3425 = vmatprep.subr.bf16.mxu0 %v2177
    %3426 = vmatpush1.bf16.msra.mxu0 %v2176
    %3427 = vmatprep.subr.bf16.mxu0 %v2169
    %3428 = vmatpush1.bf16.msra.mxu0 %v2168
    %3429 = vmatprep.subr.bf16.mxu0 %v2161
    %3430 = vmatpush1.bf16.msra.mxu0 %v2160
    %3431 = vmatprep.subr.bf16.mxu0 %v2153
    %3432 = vmatpush1.bf16.msra.mxu0 %v2152
    %3433 = vmatprep.subr.bf16.mxu0 %v2145
    %3434 = vmatpush1.bf16.msra.mxu0 %v2144
    %3435 = vmatprep.subr.bf16.mxu0 %v2137
    %3436 = vmatpush1.bf16.msra.mxu0 %v2136
    %3437 = vmatprep.subr.bf16.mxu0 %v2129
    %3438 = vmatpush1.bf16.msra.mxu0 %v2128
    %3439 = vmatprep.subr.bf16.mxu0 %v2249
    %3440 = vmatpush2.bf16.msra.mxu0 %v2248
    %3441 = vmatprep.subr.bf16.mxu0 %v2241
    %3442 = vmatpush2.bf16.msra.mxu0 %v2240
    %3443 = vmatprep.subr.bf16.mxu0 %v2233
    %3444 = vmatpush2.bf16.msra.mxu0 %v2232
    %3445 = vmatprep.subr.bf16.mxu0 %v2225
    %3446 = vmatpush2.bf16.msra.mxu0 %v2224
    %3447 = vmatprep.subr.bf16.mxu0 %v2217
    %3448 = vmatpush2.bf16.msra.mxu0 %v2216
    %3449 = vmatprep.subr.bf16.mxu0 %v2209
    %3450 = vmatpush2.bf16.msra.mxu0 %v2208
    %3451 = vmatprep.subr.bf16.mxu0 %v2201
    %3452 = vmatpush2.bf16.msra.mxu0 %v2200
    %3453 = vmatprep.subr.bf16.mxu0 %v2193
    %3454 = vmatpush2.bf16.msra.mxu0 %v2192
    %3455 = vmatprep.mubr.bf16.mxu0 %v156
    %3456 = vmatmul.mubr.bf16.gmra.mxu0 %v155
    %v3457 = vpop.f32.mrf.mxu0
    %v3458 = vadd.f32 %v3417, %v3457
    %v3459 = vpop.f32.mrf.mxu0
    %v3460 = vadd.f32 %v3419, %v3459
    %v3461 = vpop.f32.mrf.mxu0
    %v3462 = vpop.f32.mrf.mxu0
    %3463 = vdwg.mxu0
    %3464 = vmatprep.subr.bf16.mxu0 %v2313
    %3465 = vmatpush1.bf16.msra.mxu0 %v2312
    %3466 = vmatprep.subr.bf16.mxu0 %v2305
    %3467 = vmatpush1.bf16.msra.mxu0 %v2304
    %3468 = vmatprep.subr.bf16.mxu0 %v2297
    %3469 = vmatpush1.bf16.msra.mxu0 %v2296
    %3470 = vmatprep.subr.bf16.mxu0 %v2289
    %3471 = vmatpush1.bf16.msra.mxu0 %v2288
    %3472 = vmatprep.subr.bf16.mxu0 %v2281
    %3473 = vmatpush1.bf16.msra.mxu0 %v2280
    %3474 = vmatprep.subr.bf16.mxu0 %v2273
    %3475 = vmatpush1.bf16.msra.mxu0 %v2272
    %3476 = vmatprep.subr.bf16.mxu0 %v2265
    %3477 = vmatpush1.bf16.msra.mxu0 %v2264
    %3478 = vmatprep.subr.bf16.mxu0 %v2257
    %3479 = vmatpush1.bf16.msra.mxu0 %v2256
    %3480 = vmatprep.subr.bf16.mxu0 %v2377
    %3481 = vmatpush2.bf16.msra.mxu0 %v2376
    %3482 = vmatprep.subr.bf16.mxu0 %v2369
    %3483 = vmatpush2.bf16.msra.mxu0 %v2368
    %3484 = vmatprep.subr.bf16.mxu0 %v2361
    %3485 = vmatpush2.bf16.msra.mxu0 %v2360
    %3486 = vmatprep.subr.bf16.mxu0 %v2353
    %3487 = vmatpush2.bf16.msra.mxu0 %v2352
    %3488 = vmatprep.subr.bf16.mxu0 %v2345
    %3489 = vmatpush2.bf16.msra.mxu0 %v2344
    %3490 = vmatprep.subr.bf16.mxu0 %v2337
    %3491 = vmatpush2.bf16.msra.mxu0 %v2336
    %3492 = vmatprep.subr.bf16.mxu0 %v2329
    %3493 = vmatpush2.bf16.msra.mxu0 %v2328
    %3494 = vmatprep.subr.bf16.mxu0 %v2321
    %3495 = vmatpush2.bf16.msra.mxu0 %v2320
    %3496 = vmatprep.mubr.bf16.mxu0 %v158
    %3497 = vmatmul.mubr.bf16.gmra.mxu0 %v157
    %v3498 = vpop.f32.mrf.mxu0
    %v3499 = vadd.f32 %v3458, %v3498
    %v3500 = vpop.f32.mrf.mxu0
    %v3501 = vadd.f32 %v3460, %v3500
    %v3502 = vpop.f32.mrf.mxu0
    %v3503 = vpop.f32.mrf.mxu0
    %3504 = vdwg.mxu0
    %3505 = vmatprep.subr.bf16.mxu0 %v2441
    %3506 = vmatpush1.bf16.msra.mxu0 %v2440
    %3507 = vmatprep.subr.bf16.mxu0 %v2433
    %3508 = vmatpush1.bf16.msra.mxu0 %v2432
    %3509 = vmatprep.subr.bf16.mxu0 %v2425
    %3510 = vmatpush1.bf16.msra.mxu0 %v2424
    %3511 = vmatprep.subr.bf16.mxu0 %v2417
    %3512 = vmatpush1.bf16.msra.mxu0 %v2416
    %3513 = vmatprep.subr.bf16.mxu0 %v2409
    %3514 = vmatpush1.bf16.msra.mxu0 %v2408
    %3515 = vmatprep.subr.bf16.mxu0 %v2401
    %3516 = vmatpush1.bf16.msra.mxu0 %v2400
    %3517 = vmatprep.subr.bf16.mxu0 %v2393
    %3518 = vmatpush1.bf16.msra.mxu0 %v2392
    %3519 = vmatprep.subr.bf16.mxu0 %v2385
    %3520 = vmatpush1.bf16.msra.mxu0 %v2384
    %3521 = vmatprep.subr.bf16.mxu0 0
    %3522 = vmatpush2.bf16.msra.mxu0 0
    %3523 = vmatprep.subr.bf16.mxu0 0
    %3524 = vmatpush2.bf16.msra.mxu0 0
    %3525 = vmatprep.subr.bf16.mxu0 0
    %3526 = vmatpush2.bf16.msra.mxu0 0
    %3527 = vmatprep.subr.bf16.mxu0 0
    %3528 = vmatpush2.bf16.msra.mxu0 0
    %3529 = vmatprep.subr.bf16.mxu0 0
    %3530 = vmatpush2.bf16.msra.mxu0 0
    %3531 = vmatprep.subr.bf16.mxu0 0
    %3532 = vmatpush2.bf16.msra.mxu0 0
    %3533 = vmatprep.subr.bf16.mxu0 0
    %3534 = vmatpush2.bf16.msra.mxu0 0
    %3535 = vmatprep.subr.bf16.mxu0 0
    %3536 = vmatpush2.bf16.msra.mxu0 0
    %3537 = vmatprep.mubr.bf16.mxu0 0
    %3538 = vmatmul.mubr.bf16.gmra.mxu0 %v159
    %v3539 = vpop.f32.mrf.mxu0
    %v3540 = vadd.f32 %v3499, %v3539
    %v3541 = vpop.f32.mrf.mxu0
    %v3542 = vadd.f32 %v3501, %v3541
    %v3543 = vpop.f32.mrf.mxu0
    %v3544 = vpop.f32.mrf.mxu0
    %3545 = vdwg.mxu0
    %v3546 = vmax.f32 %v3048, 0.0
    %v3547 = vmax.f32 %v3050, 0.0
    %v3548 = vmax.f32 %v3212, 0.0
    %v3549 = vmax.f32 %v3214, 0.0
    %v3550 = vmax.f32 %v3376, 0.0
    %v3551 = vmax.f32 %v3378, 0.0
    %v3552 = vmax.f32 %v3540, 0.0
    %v3553 = vmax.f32 %v3542, 0.0
    %v3554 = vpack.c.bf16 %v3546, %v3546
    %v3555 = vpack.c.bf16 %v3547, %v3547
    %v3556 = vpack.c.bf16 %v3548, %v3548
    %v3557 = vpack.c.bf16 %v3549, %v3549
    %v3558 = vpack.c.bf16 %v3550, %v3550
    %v3559 = vpack.c.bf16 %v3551, %v3551
    %v3560 = vpack.c.bf16 %v3552, %v3552
    %v3561 = vpack.c.bf16 %v3553, %v3553
    %v3562 = vld [vmem:[#allocation8] sm:$0xf]
    %v3563 = vld [vmem:[#allocation8 + $0x4] sm:$0xf]
    %v3564 = vld [vmem:[#allocation8 + $0x8] sm:$0xf]
    %v3565 = vld [vmem:[#allocation8 + $0xc] sm:$0xf]
    %v3566 = vld [vmem:[#allocation8 + $0x10] sm:$0xf]
    %v3567 = vld [vmem:[#allocation8 + $0x14] sm:$0xf]
    %v3568 = vld [vmem:[#allocation8 + $0x18] sm:$0xf]
    %v3569 = vld [vmem:[#allocation8 + $0x1c] sm:$0xf]
    %v3570 = vld [vmem:[#allocation8 + $0x20] sm:$0xf]
    %v3571 = vld [vmem:[#allocation8 + $0x24] sm:$0xf]
    %v3572 = vld [vmem:[#allocation8 + $0x28] sm:$0xf]
    %v3573 = vld [vmem:[#allocation8 + $0x2c] sm:$0xf]
    %v3574 = vld [vmem:[#allocation8 + $0x30] sm:$0xf]
    %v3575 = vld [vmem:[#allocation8 + $0x34] sm:$0xf]
    %v3576 = vld [vmem:[#allocation8 + $0x38] sm:$0xf]
    %v3577 = vld [vmem:[#allocation8 + $0x3c] sm:$0xf]
    %v3578 = vld [vmem:[#allocation8 + $0x40] sm:$0xf]
    %v3579 = vld [vmem:[#allocation8 + $0x44] sm:$0xf]
    %v3580 = vld [vmem:[#allocation8 + $0x48] sm:$0xf]
    %v3581 = vld [vmem:[#allocation8 + $0x4c] sm:$0xf]
    %v3582 = vld [vmem:[#allocation8 + $0x50] sm:$0xf]
    %v3583 = vld [vmem:[#allocation8 + $0x54] sm:$0xf]
    %v3584 = vld [vmem:[#allocation8 + $0x58] sm:$0xf]
    %v3585 = vld [vmem:[#allocation8 + $0x5c] sm:$0xf]
    %v3586 = vld [vmem:[#allocation8 + $0x60] sm:$0xf]
    %v3587 = vld [vmem:[#allocation8 + $0x64] sm:$0xf]
    %v3588 = vld [vmem:[#allocation8 + $0x68] sm:$0xf]
    %v3589 = vld [vmem:[#allocation8 + $0x6c] sm:$0xf]
    %v3590 = vld [vmem:[#allocation8 + $0x70] sm:$0xf]
    %v3591 = vld [vmem:[#allocation8 + $0x74] sm:$0xf]
    %v3592 = vld [vmem:[#allocation8 + $0x78] sm:$0xf]
    %v3593 = vld [vmem:[#allocation8 + $0x7c] sm:$0xf]
    %v3594 = vld [vmem:[#allocation8 + $0x80] sm:$0xf]
    %v3595 = vld [vmem:[#allocation8 + $0x84] sm:$0xf]
    %v3596 = vld [vmem:[#allocation8 + $0x88] sm:$0xf]
    %v3597 = vld [vmem:[#allocation8 + $0x8c] sm:$0xf]
    %v3598 = vld [vmem:[#allocation8 + $0x90] sm:$0xf]
    %v3599 = vld [vmem:[#allocation8 + $0x94] sm:$0xf]
    %v3600 = vld [vmem:[#allocation8 + $0x98] sm:$0xf]
    %v3601 = vld [vmem:[#allocation8 + $0x9c] sm:$0xf]
    %v3602 = vld [vmem:[#allocation8 + $0xa0] sm:$0xf]
    %v3603 = vld [vmem:[#allocation8 + $0xa4] sm:$0xf]
    %v3604 = vld [vmem:[#allocation8 + $0xa8] sm:$0xf]
    %v3605 = vld [vmem:[#allocation8 + $0xac] sm:$0xf]
    %v3606 = vld [vmem:[#allocation8 + $0xb0] sm:$0xf]
    %v3607 = vld [vmem:[#allocation8 + $0xb4] sm:$0xf]
    %v3608 = vld [vmem:[#allocation8 + $0xb8] sm:$0xf]
    %v3609 = vld [vmem:[#allocation8 + $0xbc] sm:$0xf]
    %v3610 = vld [vmem:[#allocation8 + $0xc0] sm:$0xf]
    %v3611 = vld [vmem:[#allocation8 + $0xc4] sm:$0xf]
    %v3612 = vld [vmem:[#allocation8 + $0xc8] sm:$0xf]
    %v3613 = vld [vmem:[#allocation8 + $0xcc] sm:$0xf]
    %v3614 = vld [vmem:[#allocation8 + $0xd0] sm:$0xf]
    %v3615 = vld [vmem:[#allocation8 + $0xd4] sm:$0xf]
    %v3616 = vld [vmem:[#allocation8 + $0xd8] sm:$0xf]
    %v3617 = vld [vmem:[#allocation8 + $0xdc] sm:$0xf]
    %v3618 = vld [vmem:[#allocation8 + $0xe0] sm:$0xf]
    %v3619 = vld [vmem:[#allocation8 + $0xe4] sm:$0xf]
    %v3620 = vld [vmem:[#allocation8 + $0xe8] sm:$0xf]
    %v3621 = vld [vmem:[#allocation8 + $0xec] sm:$0xf]
    %v3622 = vld [vmem:[#allocation8 + $0xf0] sm:$0xf]
    %v3623 = vld [vmem:[#allocation8 + $0xf4] sm:$0xf]
    %v3624 = vld [vmem:[#allocation8 + $0xf8] sm:$0xf]
    %v3625 = vld [vmem:[#allocation8 + $0xfc] sm:$0xf]
    %v3626 = vld [vmem:[#allocation8 + $0x100] sm:$0xf]
    %v3627 = vld [vmem:[#allocation8 + $0x104] sm:$0xf]
    %v3628 = vld [vmem:[#allocation8 + $0x108] sm:$0xf]
    %v3629 = vld [vmem:[#allocation8 + $0x10c] sm:$0xf]
    %v3630 = vld [vmem:[#allocation8 + $0x110] sm:$0xf]
    %v3631 = vld [vmem:[#allocation8 + $0x114] sm:$0xf]
    %v3632 = vld [vmem:[#allocation8 + $0x118] sm:$0xf]
    %v3633 = vld [vmem:[#allocation8 + $0x11c] sm:$0xf]
    %v3634 = vld [vmem:[#allocation8 + $0x120] sm:$0xf]
    %v3635 = vld [vmem:[#allocation8 + $0x124] sm:$0xf]
    %v3636 = vld [vmem:[#allocation8 + $0x128] sm:$0xf]
    %v3637 = vld [vmem:[#allocation8 + $0x12c] sm:$0xf]
    %v3638 = vld [vmem:[#allocation8 + $0x130] sm:$0xf]
    %v3639 = vld [vmem:[#allocation8 + $0x134] sm:$0xf]
    %v3640 = vld [vmem:[#allocation8 + $0x138] sm:$0xf]
    %v3641 = vld [vmem:[#allocation8 + $0x13c] sm:$0xf]
    %v3642 = vld [vmem:[#allocation8 + $0x140] sm:$0xf]
    %v3643 = vld [vmem:[#allocation8 + $0x144] sm:$0xf]
    %v3644 = vld [vmem:[#allocation8 + $0x148] sm:$0xf]
    %v3645 = vld [vmem:[#allocation8 + $0x14c] sm:$0xf]
    %v3646 = vld [vmem:[#allocation8 + $0x150] sm:$0xf]
    %v3647 = vld [vmem:[#allocation8 + $0x154] sm:$0xf]
    %v3648 = vld [vmem:[#allocation8 + $0x158] sm:$0xf]
    %v3649 = vld [vmem:[#allocation8 + $0x15c] sm:$0xf]
    %v3650 = vld [vmem:[#allocation8 + $0x160] sm:$0xf]
    %v3651 = vld [vmem:[#allocation8 + $0x164] sm:$0xf]
    %v3652 = vld [vmem:[#allocation8 + $0x168] sm:$0xf]
    %v3653 = vld [vmem:[#allocation8 + $0x16c] sm:$0xf]
    %v3654 = vld [vmem:[#allocation8 + $0x170] sm:$0xf]
    %v3655 = vld [vmem:[#allocation8 + $0x174] sm:$0xf]
    %v3656 = vld [vmem:[#allocation8 + $0x178] sm:$0xf]
    %v3657 = vld [vmem:[#allocation8 + $0x17c] sm:$0xf]
    %v3658 = vld [vmem:[#allocation8 + $0x180] sm:$0xf]
    %v3659 = vld [vmem:[#allocation8 + $0x184] sm:$0xf]
    %v3660 = vld [vmem:[#allocation8 + $0x188] sm:$0xf]
    %v3661 = vld [vmem:[#allocation8 + $0x18c] sm:$0xf]
    %v3662 = vld [vmem:[#allocation8 + $0x190] sm:$0xf]
    %v3663 = vld [vmem:[#allocation8 + $0x194] sm:$0xf]
    %v3664 = vld [vmem:[#allocation8 + $0x198] sm:$0xf]
    %v3665 = vld [vmem:[#allocation8 + $0x19c] sm:$0xf]
    %v3666 = vld [vmem:[#allocation8 + $0x1a0] sm:$0xf]
    %v3667 = vld [vmem:[#allocation8 + $0x1a4] sm:$0xf]
    %v3668 = vld [vmem:[#allocation8 + $0x1a8] sm:$0xf]
    %v3669 = vld [vmem:[#allocation8 + $0x1ac] sm:$0xf]
    %v3670 = vld [vmem:[#allocation8 + $0x1b0] sm:$0xf]
    %v3671 = vld [vmem:[#allocation8 + $0x1b4] sm:$0xf]
    %v3672 = vld [vmem:[#allocation8 + $0x1b8] sm:$0xf]
    %v3673 = vld [vmem:[#allocation8 + $0x1bc] sm:$0xf]
    %v3674 = vld [vmem:[#allocation8 + $0x1c0] sm:$0xf]
    %v3675 = vld [vmem:[#allocation8 + $0x1c4] sm:$0xf]
    %v3676 = vld [vmem:[#allocation8 + $0x1c8] sm:$0xf]
    %v3677 = vld [vmem:[#allocation8 + $0x1cc] sm:$0xf]
    %v3678 = vld [vmem:[#allocation8 + $0x1d0] sm:$0xf]
    %v3679 = vld [vmem:[#allocation8 + $0x1d4] sm:$0xf]
    %v3680 = vld [vmem:[#allocation8 + $0x1d8] sm:$0xf]
    %v3681 = vld [vmem:[#allocation8 + $0x1dc] sm:$0xf]
    %v3682 = vld [vmem:[#allocation8 + $0x1e0] sm:$0xf]
    %v3683 = vld [vmem:[#allocation8 + $0x1e4] sm:$0xf]
    %v3684 = vld [vmem:[#allocation8 + $0x1e8] sm:$0xf]
    %v3685 = vld [vmem:[#allocation8 + $0x1ec] sm:$0xf]
    %v3686 = vld [vmem:[#allocation8 + $0x1f0] sm:$0xf]
    %v3687 = vld [vmem:[#allocation8 + $0x1f4] sm:$0xf]
    %v3688 = vld [vmem:[#allocation8 + $0x1f8] sm:$0xf]
    %v3689 = vld [vmem:[#allocation8 + $0x1fc] sm:$0xf]
    %v3690 = vld [vmem:[#allocation10] sm:$0x1]
    %v3692 = vlaneseq
    %v3693 = vshrl.u32 %v3692, 7
    %v3694 = vsub.s32 0, %v3693
    %v3695 = vrot.slane %v3690, %v3694
    %v3825 = vunpack.c.l.b16 %v3562
    %v3826 = vunpack.c.l.b16 %v3563
    %v3827 = vunpack.c.l.b16 %v3564
    %v3828 = vunpack.c.l.b16 %v3565
    %v3829 = vunpack.c.l.b16 %v3566
    %v3830 = vunpack.c.l.b16 %v3567
    %v3831 = vunpack.c.l.b16 %v3568
    %v3832 = vunpack.c.l.b16 %v3569
    %v3833 = vunpack.c.l.b16 %v3570
    %v3834 = vunpack.c.l.b16 %v3571
    %v3835 = vunpack.c.l.b16 %v3572
    %v3836 = vunpack.c.l.b16 %v3573
    %v3837 = vunpack.c.l.b16 %v3574
    %v3838 = vunpack.c.l.b16 %v3575
    %v3839 = vunpack.c.l.b16 %v3576
    %v3840 = vunpack.c.l.b16 %v3577
    %v3841 = vunpack.c.l.b16 %v3578
    %v3842 = vunpack.c.l.b16 %v3579
    %v3843 = vunpack.c.l.b16 %v3580
    %v3844 = vunpack.c.l.b16 %v3581
    %v3845 = vunpack.c.l.b16 %v3582
    %v3846 = vunpack.c.l.b16 %v3583
    %v3847 = vunpack.c.l.b16 %v3584
    %v3848 = vunpack.c.l.b16 %v3585
    %v3849 = vunpack.c.l.b16 %v3586
    %v3850 = vunpack.c.l.b16 %v3587
    %v3851 = vunpack.c.l.b16 %v3588
    %v3852 = vunpack.c.l.b16 %v3589
    %v3853 = vunpack.c.l.b16 %v3590
    %v3854 = vunpack.c.l.b16 %v3591
    %v3855 = vunpack.c.l.b16 %v3592
    %v3856 = vunpack.c.l.b16 %v3593
    %v3857 = vunpack.c.l.b16 %v3594
    %v3858 = vunpack.c.l.b16 %v3595
    %v3859 = vunpack.c.l.b16 %v3596
    %v3860 = vunpack.c.l.b16 %v3597
    %v3861 = vunpack.c.l.b16 %v3598
    %v3862 = vunpack.c.l.b16 %v3599
    %v3863 = vunpack.c.l.b16 %v3600
    %v3864 = vunpack.c.l.b16 %v3601
    %v3865 = vunpack.c.l.b16 %v3602
    %v3866 = vunpack.c.l.b16 %v3603
    %v3867 = vunpack.c.l.b16 %v3604
    %v3868 = vunpack.c.l.b16 %v3605
    %v3869 = vunpack.c.l.b16 %v3606
    %v3870 = vunpack.c.l.b16 %v3607
    %v3871 = vunpack.c.l.b16 %v3608
    %v3872 = vunpack.c.l.b16 %v3609
    %v3873 = vunpack.c.l.b16 %v3610
    %v3874 = vunpack.c.l.b16 %v3611
    %v3875 = vunpack.c.l.b16 %v3612
    %v3876 = vunpack.c.l.b16 %v3613
    %v3877 = vunpack.c.l.b16 %v3614
    %v3878 = vunpack.c.l.b16 %v3615
    %v3879 = vunpack.c.l.b16 %v3616
    %v3880 = vunpack.c.l.b16 %v3617
    %v3881 = vunpack.c.l.b16 %v3618
    %v3882 = vunpack.c.l.b16 %v3619
    %v3883 = vunpack.c.l.b16 %v3620
    %v3884 = vunpack.c.l.b16 %v3621
    %v3885 = vunpack.c.l.b16 %v3622
    %v3886 = vunpack.c.l.b16 %v3623
    %v3887 = vunpack.c.l.b16 %v3624
    %v3888 = vunpack.c.l.b16 %v3625
    %v3889 = vunpack.c.l.b16 %v3626
    %v3890 = vunpack.c.l.b16 %v3627
    %v3891 = vunpack.c.l.b16 %v3628
    %v3892 = vunpack.c.l.b16 %v3629
    %v3893 = vunpack.c.l.b16 %v3630
    %v3894 = vunpack.c.l.b16 %v3631
    %v3895 = vunpack.c.l.b16 %v3632
    %v3896 = vunpack.c.l.b16 %v3633
    %v3897 = vunpack.c.l.b16 %v3634
    %v3898 = vunpack.c.l.b16 %v3635
    %v3899 = vunpack.c.l.b16 %v3636
    %v3900 = vunpack.c.l.b16 %v3637
    %v3901 = vunpack.c.l.b16 %v3638
    %v3902 = vunpack.c.l.b16 %v3639
    %v3903 = vunpack.c.l.b16 %v3640
    %v3904 = vunpack.c.l.b16 %v3641
    %v3905 = vunpack.c.l.b16 %v3642
    %v3906 = vunpack.c.l.b16 %v3643
    %v3907 = vunpack.c.l.b16 %v3644
    %v3908 = vunpack.c.l.b16 %v3645
    %v3909 = vunpack.c.l.b16 %v3646
    %v3910 = vunpack.c.l.b16 %v3647
    %v3911 = vunpack.c.l.b16 %v3648
    %v3912 = vunpack.c.l.b16 %v3649
    %v3913 = vunpack.c.l.b16 %v3650
    %v3914 = vunpack.c.l.b16 %v3651
    %v3915 = vunpack.c.l.b16 %v3652
    %v3916 = vunpack.c.l.b16 %v3653
    %v3917 = vunpack.c.l.b16 %v3654
    %v3918 = vunpack.c.l.b16 %v3655
    %v3919 = vunpack.c.l.b16 %v3656
    %v3920 = vunpack.c.l.b16 %v3657
    %v3921 = vunpack.c.l.b16 %v3658
    %v3922 = vunpack.c.l.b16 %v3659
    %v3923 = vunpack.c.l.b16 %v3660
    %v3924 = vunpack.c.l.b16 %v3661
    %v3925 = vunpack.c.l.b16 %v3662
    %v3926 = vunpack.c.l.b16 %v3663
    %v3927 = vunpack.c.l.b16 %v3664
    %v3928 = vunpack.c.l.b16 %v3665
    %v3929 = vunpack.c.l.b16 %v3666
    %v3930 = vunpack.c.l.b16 %v3667
    %v3931 = vunpack.c.l.b16 %v3668
    %v3932 = vunpack.c.l.b16 %v3669
    %v3933 = vunpack.c.l.b16 %v3670
    %v3934 = vunpack.c.l.b16 %v3671
    %v3935 = vunpack.c.l.b16 %v3672
    %v3936 = vunpack.c.l.b16 %v3673
    %v3937 = vunpack.c.l.b16 %v3674
    %v3938 = vunpack.c.l.b16 %v3675
    %v3939 = vunpack.c.l.b16 %v3676
    %v3940 = vunpack.c.l.b16 %v3677
    %v3941 = vunpack.c.l.b16 %v3678
    %v3942 = vunpack.c.l.b16 %v3679
    %v3943 = vunpack.c.l.b16 %v3680
    %v3944 = vunpack.c.l.b16 %v3681
    %v3945 = vunpack.c.l.b16 %v3682
    %v3946 = vunpack.c.l.b16 %v3683
    %v3947 = vunpack.c.l.b16 %v3684
    %v3948 = vunpack.c.l.b16 %v3685
    %v3949 = vunpack.c.l.b16 %v3686
    %v3950 = vunpack.c.l.b16 %v3687
    %v3951 = vunpack.c.l.b16 %v3688
    %v3952 = vunpack.c.l.b16 %v3689
    %v3953 = vpack.c.b16 %v3826, %v3825
    %v3954 = vpack.c.b16 %v3828, %v3827
    %v3955 = vpack.c.b16 %v3830, %v3829
    %v3956 = vpack.c.b16 %v3832, %v3831
    %v3957 = vpack.c.b16 %v3834, %v3833
    %v3958 = vpack.c.b16 %v3836, %v3835
    %v3959 = vpack.c.b16 %v3838, %v3837
    %v3960 = vpack.c.b16 %v3840, %v3839
    %v3961 = vpack.c.b16 %v3842, %v3841
    %v3962 = vpack.c.b16 %v3844, %v3843
    %v3963 = vpack.c.b16 %v3846, %v3845
    %v3964 = vpack.c.b16 %v3848, %v3847
    %v3965 = vpack.c.b16 %v3850, %v3849
    %v3966 = vpack.c.b16 %v3852, %v3851
    %v3967 = vpack.c.b16 %v3854, %v3853
    %v3968 = vpack.c.b16 %v3856, %v3855
    %v3969 = vpack.c.b16 %v3858, %v3857
    %v3970 = vpack.c.b16 %v3860, %v3859
    %v3971 = vpack.c.b16 %v3862, %v3861
    %v3972 = vpack.c.b16 %v3864, %v3863
    %v3973 = vpack.c.b16 %v3866, %v3865
    %v3974 = vpack.c.b16 %v3868, %v3867
    %v3975 = vpack.c.b16 %v3870, %v3869
    %v3976 = vpack.c.b16 %v3872, %v3871
    %v3977 = vpack.c.b16 %v3874, %v3873
    %v3978 = vpack.c.b16 %v3876, %v3875
    %v3979 = vpack.c.b16 %v3878, %v3877
    %v3980 = vpack.c.b16 %v3880, %v3879
    %v3981 = vpack.c.b16 %v3882, %v3881
    %v3982 = vpack.c.b16 %v3884, %v3883
    %v3983 = vpack.c.b16 %v3886, %v3885
    %v3984 = vpack.c.b16 %v3888, %v3887
    %v3985 = vpack.c.b16 %v3890, %v3889
    %v3986 = vpack.c.b16 %v3892, %v3891
    %v3987 = vpack.c.b16 %v3894, %v3893
    %v3988 = vpack.c.b16 %v3896, %v3895
    %v3989 = vpack.c.b16 %v3898, %v3897
    %v3990 = vpack.c.b16 %v3900, %v3899
    %v3991 = vpack.c.b16 %v3902, %v3901
    %v3992 = vpack.c.b16 %v3904, %v3903
    %v3993 = vpack.c.b16 %v3906, %v3905
    %v3994 = vpack.c.b16 %v3908, %v3907
    %v3995 = vpack.c.b16 %v3910, %v3909
    %v3996 = vpack.c.b16 %v3912, %v3911
    %v3997 = vpack.c.b16 %v3914, %v3913
    %v3998 = vpack.c.b16 %v3916, %v3915
    %v3999 = vpack.c.b16 %v3918, %v3917
    %v4000 = vpack.c.b16 %v3920, %v3919
    %v4001 = vpack.c.b16 %v3922, %v3921
    %v4002 = vpack.c.b16 %v3924, %v3923
    %v4003 = vpack.c.b16 %v3926, %v3925
    %v4004 = vpack.c.b16 %v3928, %v3927
    %v4005 = vpack.c.b16 %v3930, %v3929
    %v4006 = vpack.c.b16 %v3932, %v3931
    %v4007 = vpack.c.b16 %v3934, %v3933
    %v4008 = vpack.c.b16 %v3936, %v3935
    %v4009 = vpack.c.b16 %v3938, %v3937
    %v4010 = vpack.c.b16 %v3940, %v3939
    %v4011 = vpack.c.b16 %v3942, %v3941
    %v4012 = vpack.c.b16 %v3944, %v3943
    %v4013 = vpack.c.b16 %v3946, %v3945
    %v4014 = vpack.c.b16 %v3948, %v3947
    %v4015 = vpack.c.b16 %v3950, %v3949
    %v4016 = vpack.c.b16 %v3952, %v3951
    %4081 = vmatprep.subr.bf16.mxu0 0
    %4082 = vmatpush1.bf16.msra.mxu0 %v3960
    %4083 = vmatprep.subr.bf16.mxu0 0
    %4084 = vmatpush1.bf16.msra.mxu0 %v3959
    %4085 = vmatprep.subr.bf16.mxu0 0
    %4086 = vmatpush1.bf16.msra.mxu0 %v3958
    %4087 = vmatprep.subr.bf16.mxu0 0
    %4088 = vmatpush1.bf16.msra.mxu0 %v3957
    %4089 = vmatprep.subr.bf16.mxu0 0
    %4090 = vmatpush1.bf16.msra.mxu0 %v3956
    %4091 = vmatprep.subr.bf16.mxu0 0
    %4092 = vmatpush1.bf16.msra.mxu0 %v3955
    %4093 = vmatprep.subr.bf16.mxu0 0
    %4094 = vmatpush1.bf16.msra.mxu0 %v3954
    %4095 = vmatprep.subr.bf16.mxu0 0
    %4096 = vmatpush1.bf16.msra.mxu0 %v3953
    %4097 = vmatprep.subr.bf16.mxu0 0
    %4098 = vmatpush2.bf16.msra.mxu0 %v3968
    %4099 = vmatprep.subr.bf16.mxu0 0
    %4100 = vmatpush2.bf16.msra.mxu0 %v3967
    %4101 = vmatprep.subr.bf16.mxu0 0
    %4102 = vmatpush2.bf16.msra.mxu0 %v3966
    %4103 = vmatprep.subr.bf16.mxu0 0
    %4104 = vmatpush2.bf16.msra.mxu0 %v3965
    %4105 = vmatprep.subr.bf16.mxu0 0
    %4106 = vmatpush2.bf16.msra.mxu0 %v3964
    %4107 = vmatprep.subr.bf16.mxu0 0
    %4108 = vmatpush2.bf16.msra.mxu0 %v3963
    %4109 = vmatprep.subr.bf16.mxu0 0
    %4110 = vmatpush2.bf16.msra.mxu0 %v3962
    %4111 = vmatprep.subr.bf16.mxu0 0
    %4112 = vmatpush2.bf16.msra.mxu0 %v3961
    %4113 = vmatprep.mubr.bf16.mxu0 %v3555
    %4114 = vmatmul.mubr.bf16.gmra.mxu0 %v3554
    %v4115 = vpop.f32.mrf.mxu0
    %v4116 = vadd.f32 %v3695, %v4115
    %v4117 = vpop.f32.mrf.mxu0
    %v4118 = vpop.f32.mrf.mxu0
    %v4119 = vpop.f32.mrf.mxu0
    %4120 = vdwg.mxu0
    %4121 = vmatprep.subr.bf16.mxu0 0
    %4122 = vmatpush1.bf16.msra.mxu0 %v3976
    %4123 = vmatprep.subr.bf16.mxu0 0
    %4124 = vmatpush1.bf16.msra.mxu0 %v3975
    %4125 = vmatprep.subr.bf16.mxu0 0
    %4126 = vmatpush1.bf16.msra.mxu0 %v3974
    %4127 = vmatprep.subr.bf16.mxu0 0
    %4128 = vmatpush1.bf16.msra.mxu0 %v3973
    %4129 = vmatprep.subr.bf16.mxu0 0
    %4130 = vmatpush1.bf16.msra.mxu0 %v3972
    %4131 = vmatprep.subr.bf16.mxu0 0
    %4132 = vmatpush1.bf16.msra.mxu0 %v3971
    %4133 = vmatprep.subr.bf16.mxu0 0
    %4134 = vmatpush1.bf16.msra.mxu0 %v3970
    %4135 = vmatprep.subr.bf16.mxu0 0
    %4136 = vmatpush1.bf16.msra.mxu0 %v3969
    %4137 = vmatprep.subr.bf16.mxu0 0
    %4138 = vmatpush2.bf16.msra.mxu0 %v3984
    %4139 = vmatprep.subr.bf16.mxu0 0
    %4140 = vmatpush2.bf16.msra.mxu0 %v3983
    %4141 = vmatprep.subr.bf16.mxu0 0
    %4142 = vmatpush2.bf16.msra.mxu0 %v3982
    %4143 = vmatprep.subr.bf16.mxu0 0
    %4144 = vmatpush2.bf16.msra.mxu0 %v3981
    %4145 = vmatprep.subr.bf16.mxu0 0
    %4146 = vmatpush2.bf16.msra.mxu0 %v3980
    %4147 = vmatprep.subr.bf16.mxu0 0
    %4148 = vmatpush2.bf16.msra.mxu0 %v3979
    %4149 = vmatprep.subr.bf16.mxu0 0
    %4150 = vmatpush2.bf16.msra.mxu0 %v3978
    %4151 = vmatprep.subr.bf16.mxu0 0
    %4152 = vmatpush2.bf16.msra.mxu0 %v3977
    %4153 = vmatprep.mubr.bf16.mxu0 %v3557
    %4154 = vmatmul.mubr.bf16.gmra.mxu0 %v3556
    %v4155 = vpop.f32.mrf.mxu0
    %v4156 = vadd.f32 %v4116, %v4155
    %v4157 = vpop.f32.mrf.mxu0
    %v4158 = vpop.f32.mrf.mxu0
    %v4159 = vpop.f32.mrf.mxu0
    %4160 = vdwg.mxu0
    %4161 = vmatprep.subr.bf16.mxu0 0
    %4162 = vmatpush1.bf16.msra.mxu0 %v3992
    %4163 = vmatprep.subr.bf16.mxu0 0
    %4164 = vmatpush1.bf16.msra.mxu0 %v3991
    %4165 = vmatprep.subr.bf16.mxu0 0
    %4166 = vmatpush1.bf16.msra.mxu0 %v3990
    %4167 = vmatprep.subr.bf16.mxu0 0
    %4168 = vmatpush1.bf16.msra.mxu0 %v3989
    %4169 = vmatprep.subr.bf16.mxu0 0
    %4170 = vmatpush1.bf16.msra.mxu0 %v3988
    %4171 = vmatprep.subr.bf16.mxu0 0
    %4172 = vmatpush1.bf16.msra.mxu0 %v3987
    %4173 = vmatprep.subr.bf16.mxu0 0
    %4174 = vmatpush1.bf16.msra.mxu0 %v3986
    %4175 = vmatprep.subr.bf16.mxu0 0
    %4176 = vmatpush1.bf16.msra.mxu0 %v3985
    %4177 = vmatprep.subr.bf16.mxu0 0
    %4178 = vmatpush2.bf16.msra.mxu0 %v4000
    %4179 = vmatprep.subr.bf16.mxu0 0
    %4180 = vmatpush2.bf16.msra.mxu0 %v3999
    %4181 = vmatprep.subr.bf16.mxu0 0
    %4182 = vmatpush2.bf16.msra.mxu0 %v3998
    %4183 = vmatprep.subr.bf16.mxu0 0
    %4184 = vmatpush2.bf16.msra.mxu0 %v3997
    %4185 = vmatprep.subr.bf16.mxu0 0
    %4186 = vmatpush2.bf16.msra.mxu0 %v3996
    %4187 = vmatprep.subr.bf16.mxu0 0
    %4188 = vmatpush2.bf16.msra.mxu0 %v3995
    %4189 = vmatprep.subr.bf16.mxu0 0
    %4190 = vmatpush2.bf16.msra.mxu0 %v3994
    %4191 = vmatprep.subr.bf16.mxu0 0
    %4192 = vmatpush2.bf16.msra.mxu0 %v3993
    %4193 = vmatprep.mubr.bf16.mxu0 %v3559
    %4194 = vmatmul.mubr.bf16.gmra.mxu0 %v3558
    %v4195 = vpop.f32.mrf.mxu0
    %v4196 = vadd.f32 %v4156, %v4195
    %v4197 = vpop.f32.mrf.mxu0
    %v4198 = vpop.f32.mrf.mxu0
    %v4199 = vpop.f32.mrf.mxu0
    %4200 = vdwg.mxu0
    %4201 = vmatprep.subr.bf16.mxu0 0
    %4202 = vmatpush1.bf16.msra.mxu0 %v4008
    %4203 = vmatprep.subr.bf16.mxu0 0
    %4204 = vmatpush1.bf16.msra.mxu0 %v4007
    %4205 = vmatprep.subr.bf16.mxu0 0
    %4206 = vmatpush1.bf16.msra.mxu0 %v4006
    %4207 = vmatprep.subr.bf16.mxu0 0
    %4208 = vmatpush1.bf16.msra.mxu0 %v4005
    %4209 = vmatprep.subr.bf16.mxu0 0
    %4210 = vmatpush1.bf16.msra.mxu0 %v4004
    %4211 = vmatprep.subr.bf16.mxu0 0
    %4212 = vmatpush1.bf16.msra.mxu0 %v4003
    %4213 = vmatprep.subr.bf16.mxu0 0
    %4214 = vmatpush1.bf16.msra.mxu0 %v4002
    %4215 = vmatprep.subr.bf16.mxu0 0
    %4216 = vmatpush1.bf16.msra.mxu0 %v4001
    %4217 = vmatprep.subr.bf16.mxu0 0
    %4218 = vmatpush2.bf16.msra.mxu0 %v4016
    %4219 = vmatprep.subr.bf16.mxu0 0
    %4220 = vmatpush2.bf16.msra.mxu0 %v4015
    %4221 = vmatprep.subr.bf16.mxu0 0
    %4222 = vmatpush2.bf16.msra.mxu0 %v4014
    %4223 = vmatprep.subr.bf16.mxu0 0
    %4224 = vmatpush2.bf16.msra.mxu0 %v4013
    %4225 = vmatprep.subr.bf16.mxu0 0
    %4226 = vmatpush2.bf16.msra.mxu0 %v4012
    %4227 = vmatprep.subr.bf16.mxu0 0
    %4228 = vmatpush2.bf16.msra.mxu0 %v4011
    %4229 = vmatprep.subr.bf16.mxu0 0
    %4230 = vmatpush2.bf16.msra.mxu0 %v4010
    %4231 = vmatprep.subr.bf16.mxu0 0
    %4232 = vmatpush2.bf16.msra.mxu0 %v4009
    %4233 = vmatprep.mubr.bf16.mxu0 %v3561
    %4234 = vmatmul.mubr.bf16.gmra.mxu0 %v3560
    %v4235 = vpop.f32.mrf.mxu0
    %v4236 = vadd.f32 %v4196, %v4235
    %v4237 = vpop.f32.mrf.mxu0
    %v4238 = vpop.f32.mrf.mxu0
    %v4239 = vpop.f32.mrf.mxu0
    %4240 = vdwg.mxu0
    %v4241 = vmax.f32 %v4236, 0.0
    %v4242 = vpack.c.bf16 %v4241, %v4241
    %v4243 = vld [vmem:[#allocation11] sm:$0xf]
    %v4244 = vld [vmem:[#allocation11 + $0x4] sm:$0xf]
    %v4245 = vld [vmem:[#allocation11 + $0x8] sm:$0xf]
    %v4246 = vld [vmem:[#allocation11 + $0xc] sm:$0xf]
    %v4247 = vld [vmem:[#allocation11 + $0x10] sm:$0xf]
    %v4248 = vld [vmem:[#allocation11 + $0x14] sm:$0xf]
    %v4249 = vld [vmem:[#allocation11 + $0x18] sm:$0xf]
    %v4250 = vld [vmem:[#allocation11 + $0x1c] sm:$0xf]
    %v4251 = vld [vmem:[#allocation11 + $0x20] sm:$0xf]
    %v4252 = vld [vmem:[#allocation11 + $0x24] sm:$0xf]
    %v4253 = vld [vmem:[#allocation11 + $0x28] sm:$0xf]
    %v4254 = vld [vmem:[#allocation11 + $0x2c] sm:$0xf]
    %v4255 = vld [vmem:[#allocation11 + $0x30] sm:$0xf]
    %v4256 = vld [vmem:[#allocation11 + $0x34] sm:$0xf]
    %v4257 = vld [vmem:[#allocation11 + $0x38] sm:$0xf]
    %v4258 = vld [vmem:[#allocation11 + $0x3c] sm:$0xf]
    %v4259 = vld [vmem:[#allocation13] sm:$0x1]
    %v4261 = vlaneseq
    %v4262 = vshrl.u32 %v4261, 7
    %v4263 = vsub.s32 0, %v4262
    %v4264 = vrot.slane %v4259, %v4263
    %v4282 = vunpack.c.l.b16 %v4243
    %v4283 = vunpack.c.l.b16 %v4244
    %v4284 = vunpack.c.l.b16 %v4245
    %v4285 = vunpack.c.l.b16 %v4246
    %v4286 = vunpack.c.l.b16 %v4247
    %v4287 = vunpack.c.l.b16 %v4248
    %v4288 = vunpack.c.l.b16 %v4249
    %v4289 = vunpack.c.l.b16 %v4250
    %v4290 = vunpack.c.l.b16 %v4251
    %v4291 = vunpack.c.l.b16 %v4252
    %v4292 = vunpack.c.l.b16 %v4253
    %v4293 = vunpack.c.l.b16 %v4254
    %v4294 = vunpack.c.l.b16 %v4255
    %v4295 = vunpack.c.l.b16 %v4256
    %v4296 = vunpack.c.l.b16 %v4257
    %v4297 = vunpack.c.l.b16 %v4258
    %v4298 = vpack.c.b16 %v4283, %v4282
    %v4299 = vpack.c.b16 %v4285, %v4284
    %v4300 = vpack.c.b16 %v4287, %v4286
    %v4301 = vpack.c.b16 %v4289, %v4288
    %v4302 = vpack.c.b16 %v4291, %v4290
    %v4303 = vpack.c.b16 %v4293, %v4292
    %v4304 = vpack.c.b16 %v4295, %v4294
    %v4305 = vpack.c.b16 %v4297, %v4296
    %4314 = vmatprep.subr.bf16.mxu0 0
    %4315 = vmatpush1.bf16.msra.mxu0 %v4305
    %4316 = vmatprep.subr.bf16.mxu0 0
    %4317 = vmatpush1.bf16.msra.mxu0 %v4304
    %4318 = vmatprep.subr.bf16.mxu0 0
    %4319 = vmatpush1.bf16.msra.mxu0 %v4303
    %4320 = vmatprep.subr.bf16.mxu0 0
    %4321 = vmatpush1.bf16.msra.mxu0 %v4302
    %4322 = vmatprep.subr.bf16.mxu0 0
    %4323 = vmatpush1.bf16.msra.mxu0 %v4301
    %4324 = vmatprep.subr.bf16.mxu0 0
    %4325 = vmatpush1.bf16.msra.mxu0 %v4300
    %4326 = vmatprep.subr.bf16.mxu0 0
    %4327 = vmatpush1.bf16.msra.mxu0 %v4299
    %4328 = vmatprep.subr.bf16.mxu0 0
    %4329 = vmatpush1.bf16.msra.mxu0 %v4298
    %4330 = vmatprep.subr.bf16.mxu0 0
    %4331 = vmatpush2.bf16.msra.mxu0 0
    %4332 = vmatprep.subr.bf16.mxu0 0
    %4333 = vmatpush2.bf16.msra.mxu0 0
    %4334 = vmatprep.subr.bf16.mxu0 0
    %4335 = vmatpush2.bf16.msra.mxu0 0
    %4336 = vmatprep.subr.bf16.mxu0 0
    %4337 = vmatpush2.bf16.msra.mxu0 0
    %4338 = vmatprep.subr.bf16.mxu0 0
    %4339 = vmatpush2.bf16.msra.mxu0 0
    %4340 = vmatprep.subr.bf16.mxu0 0
    %4341 = vmatpush2.bf16.msra.mxu0 0
    %4342 = vmatprep.subr.bf16.mxu0 0
    %4343 = vmatpush2.bf16.msra.mxu0 0
    %4344 = vmatprep.subr.bf16.mxu0 0
    %4345 = vmatpush2.bf16.msra.mxu0 0
    %4346 = vmatprep.mubr.bf16.mxu0 0
    %4347 = vmatmul.mubr.bf16.gmra.mxu0 %v4242
    %v4348 = vpop.f32.mrf.mxu0
    %v4349 = vadd.f32 %v4264, %v4348
    %v4350 = vpop.f32.mrf.mxu0
    %v4351 = vpop.f32.mrf.mxu0
    %v4352 = vpop.f32.mrf.mxu0
    %4353 = vdwg.mxu0
    %v4354 = vmax.f32 %v4349, 0.0
    %v4355 = vpack.c.bf16 %v4354, %v4354
    %v4356 = vld [vmem:[#allocation14] sm:$0xf]
    %v4357 = vld [vmem:[#allocation14 + $0x4] sm:$0xf]
    %v4358 = vld [vmem:[#allocation14 + $0x8] sm:$0xf]
    %v4359 = vld [vmem:[#allocation14 + $0xc] sm:$0xf]
    %v4360 = vld [vmem:[#allocation14 + $0x10] sm:$0xf]
    %v4361 = vld [vmem:[#allocation14 + $0x14] sm:$0xf]
    %v4362 = vld [vmem:[#allocation14 + $0x18] sm:$0xf]
    %v4363 = vld [vmem:[#allocation14 + $0x1c] sm:$0xf]
    %v4364 = vld [vmem:[#allocation14 + $0x20] sm:$0xf]
    %v4365 = vld [vmem:[#allocation14 + $0x24] sm:$0xf]
    %v4366 = vld [vmem:[#allocation14 + $0x28] sm:$0xf]
    %v4367 = vld [vmem:[#allocation14 + $0x2c] sm:$0xf]
    %v4368 = vld [vmem:[#allocation14 + $0x30] sm:$0xf]
    %v4369 = vld [vmem:[#allocation14 + $0x34] sm:$0xf]
    %v4370 = vld [vmem:[#allocation14 + $0x38] sm:$0xf]
    %v4371 = vld [vmem:[#allocation14 + $0x3c] sm:$0xf]
    %v4372 = vld [vmem:[#allocation16] sm:$0x1]
    %v4374 = vlaneseq
    %v4375 = vshrl.u32 %v4374, 7
    %v4376 = vsub.s32 0, %v4375
    %v4377 = vrot.slane %v4372, %v4376
    %v4395 = vunpack.c.l.b16 %v4356
    %v4396 = vunpack.c.l.b16 %v4357
    %v4397 = vunpack.c.l.b16 %v4358
    %v4398 = vunpack.c.l.b16 %v4359
    %v4399 = vunpack.c.l.b16 %v4360
    %v4400 = vunpack.c.l.b16 %v4361
    %v4401 = vunpack.c.l.b16 %v4362
    %v4402 = vunpack.c.l.b16 %v4363
    %v4403 = vunpack.c.l.b16 %v4364
    %v4404 = vunpack.c.l.b16 %v4365
    %v4405 = vunpack.c.l.b16 %v4366
    %v4406 = vunpack.c.l.b16 %v4367
    %v4407 = vunpack.c.l.b16 %v4368
    %v4408 = vunpack.c.l.b16 %v4369
    %v4409 = vunpack.c.l.b16 %v4370
    %v4410 = vunpack.c.l.b16 %v4371
    %v4411 = vpack.c.b16 %v4396, %v4395
    %v4412 = vpack.c.b16 %v4398, %v4397
    %v4413 = vpack.c.b16 %v4400, %v4399
    %v4414 = vpack.c.b16 %v4402, %v4401
    %v4415 = vpack.c.b16 %v4404, %v4403
    %v4416 = vpack.c.b16 %v4406, %v4405
    %v4417 = vpack.c.b16 %v4408, %v4407
    %v4418 = vpack.c.b16 %v4410, %v4409
    %4427 = vmatprep.subr.bf16.mxu0 0
    %4428 = vmatpush1.bf16.msra.mxu0 %v4418
    %4429 = vmatprep.subr.bf16.mxu0 0
    %4430 = vmatpush1.bf16.msra.mxu0 %v4417
    %4431 = vmatprep.subr.bf16.mxu0 0
    %4432 = vmatpush1.bf16.msra.mxu0 %v4416
    %4433 = vmatprep.subr.bf16.mxu0 0
    %4434 = vmatpush1.bf16.msra.mxu0 %v4415
    %4435 = vmatprep.subr.bf16.mxu0 0
    %4436 = vmatpush1.bf16.msra.mxu0 %v4414
    %4437 = vmatprep.subr.bf16.mxu0 0
    %4438 = vmatpush1.bf16.msra.mxu0 %v4413
    %4439 = vmatprep.subr.bf16.mxu0 0
    %4440 = vmatpush1.bf16.msra.mxu0 %v4412
    %4441 = vmatprep.subr.bf16.mxu0 0
    %4442 = vmatpush1.bf16.msra.mxu0 %v4411
    %4443 = vmatprep.subr.bf16.mxu0 0
    %4444 = vmatpush2.bf16.msra.mxu0 0
    %4445 = vmatprep.subr.bf16.mxu0 0
    %4446 = vmatpush2.bf16.msra.mxu0 0
    %4447 = vmatprep.subr.bf16.mxu0 0
    %4448 = vmatpush2.bf16.msra.mxu0 0
    %4449 = vmatprep.subr.bf16.mxu0 0
    %4450 = vmatpush2.bf16.msra.mxu0 0
    %4451 = vmatprep.subr.bf16.mxu0 0
    %4452 = vmatpush2.bf16.msra.mxu0 0
    %4453 = vmatprep.subr.bf16.mxu0 0
    %4454 = vmatpush2.bf16.msra.mxu0 0
    %4455 = vmatprep.subr.bf16.mxu0 0
    %4456 = vmatpush2.bf16.msra.mxu0 0
    %4457 = vmatprep.subr.bf16.mxu0 0
    %4458 = vmatpush2.bf16.msra.mxu0 0
    %4459 = vmatprep.mubr.bf16.mxu0 0
    %4460 = vmatmul.mubr.bf16.gmra.mxu0 %v4355
    %v4461 = vpop.f32.mrf.mxu0
    %v4462 = vadd.f32 %v4377, %v4461
    %v4463 = vpop.f32.mrf.mxu0
    %v4464 = vpop.f32.mrf.mxu0
    %v4465 = vpop.f32.mrf.mxu0
    %4466 = vdwg.mxu0
    %4467 = vst [vmem:[#allocation17] sm:$0xff] %v4462
    // Predicated region
    $region74: #{tpu_custom_call.1} parent=1 // pred_check
      _
    $region75: #{tpu_custom_call.1} parent=1 // pred_check_branch
      %4469 = sbr.rel (0) target = $region77
    $region76: #{tpu_custom_call.1} parent=1 // pred_region
      %s4471 = ssub.s32 128, 128
      %4472 = vsyncadd [#allocation4], %s4471
      %s4474 = sshll.u32 [#allocation17], 4
      %s4475 = int_to_ptr.vmem [resolvable:$true] %s4474
      %4477 = dma.vmem_to_hbm [thread:$0]  %s4475, 128, %s9, [#allocation4]
    $region77: #{tpu_custom_call.1} parent=1 // pred_fallthru
      _
    // Predicated region
    $region78: #{tpu_custom_call.1} parent=1 // pred_check
      _
    $region79: #{tpu_custom_call.1} parent=1 // pred_check_branch
      %4479 = sbr.rel (0) target = $region81
    $region80: #{tpu_custom_call.1} parent=1 // pred_region
      %4480 = dma.done [#allocation4], 128
    $region81: #{tpu_custom_call.1} parent=1 // pred_fallthru
      _
    %4481 = vsyncpa [#allocation3], 1
    %4482 = vsyncpa [#allocation6], 1
    %4483 = vsyncpa [#allocation9], 1
    %4484 = vsyncpa [#allocation12], 1
    %4485 = vsyncpa [#allocation15], 1
    %4486 = vsyncpa [#allocation4], 1

</llo_original>
